<compile_context>
chip_gen: v6e
topology: v6e:2x2x1
jax: 0.10.0
libtpu: 0.0.40
codegen_flags: <defaults>
</compile_context>

<pallas_src>
import jax
import jax.numpy as jnp
from jax.experimental import pallas as pl
from jax.experimental.pallas import tpu as pltpu

# ----------------------------- sizes (small, '4x' mode) ----------------------
B = 2                       # batch
IN_DIM = 512                # voxel input dim (15724 in the full model)
HID = 128                   # hidden width h (4096 in the full model) -- one lane tile
N_BLOCKS = 4                # residual MLP blocks
C = 64                      # '4x' mode latent channels
SIDE = 16                   # '4x' mode spatial side
LIN1_OUT = C * SIDE * SIDE  # 16384
TN = 2048                   # streamed w1 / output column tile (multiple of 256)
N_TILES = LIN1_OUT // TN    # 8 grid steps
EPS = 1e-5                  # LayerNorm / GroupNorm eps (PyTorch default)


# ----------------------------- shared math ----------------------------------
def _layernorm(x, gamma, beta):
    mean = jnp.mean(x, axis=-1, keepdims=True)
    var = jnp.mean(jnp.square(x - mean), axis=-1, keepdims=True)
    return (x - mean) * jax.lax.rsqrt(var + EPS) * gamma + beta


def _silu_kernel(x):
    # x * sigmoid(x); reciprocal routed to the EUP slot.
    return x * pl.reciprocal(1.0 + jnp.exp(-x), approx=True)


def _silu_ref(x):
    return x / (1.0 + jnp.exp(-x))


# ----------------------------- kernel ----------------------------------------
def voxel2sd_kernel(x_ref, w0_ref, ln_ref, wm_ref, w1_ref, gn_ref,
                    out_ref, h_scr, sum_scr, sq_scr):
    """Fused lin0 + residual MLP stack + streamed lin1 + GroupNorm(1, C).

    Grid: (N_TILES,) over w1 column tiles.  Everything except w1 is VMEM-resident
    (constant block index -> DMA'd once); w1 streams in (HID, TN) bf16 tiles that
    the runtime double-buffers under the matmul of the previous tile.
    """
    j = pl.program_id(0)

    # ---- step 0: lin0 + residual MLP stack once; persist in VMEM scratch ----
    @pl.when(j == 0)
    def _():
        x = x_ref[...]                                                  # (B, IN_DIM) f32
        h = jnp.dot(x, w0_ref[...].astype(jnp.float32),
                    preferred_element_type=jnp.float32)                 # (B, HID)
        h = _silu_kernel(_layernorm(h, ln_ref[0:1, :], ln_ref[1:2, :]))  # Dropout(0.5)=id
        residual = h
        for i in range(N_BLOCKS):                                       # statically unrolled
            t = jnp.dot(h, wm_ref[i].astype(jnp.float32),
                        preferred_element_type=jnp.float32)
            t = _silu_kernel(_layernorm(t, ln_ref[2 * i + 2:2 * i + 3, :],
                                        ln_ref[2 * i + 3:2 * i + 4, :]))  # Dropout(0.25)=id
            h = t + residual
            residual = h
        h_scr[...] = h
        sum_scr[...] = jnp.zeros_like(sum_scr)
        sq_scr[...] = jnp.zeros_like(sq_scr)

    # ---- every step: one (B, TN) lin1 tile; stash + accumulate GN stats ----
    y = jnp.dot(h_scr[...], w1_ref[...].astype(jnp.float32),
                preferred_element_type=jnp.float32)                     # (B, TN)
    col = pl.multiple_of(j * TN, TN)
    out_ref[:, pl.ds(col, TN)] = y                                      # unnormalized stash
    sum_scr[...] += jnp.sum(y, axis=-1, keepdims=True)                  # (B, 1)
    sq_scr[...] += jnp.sum(y * y, axis=-1, keepdims=True)               # (B, 1)

    # ---- last step: finalize GroupNorm(1, C) and normalize tiles in place ----
    @pl.when(j == N_TILES - 1)
    def _():
        inv_n = 1.0 / LIN1_OUT
        mean = sum_scr[...] * inv_n                                     # (B, 1)
        var = sq_scr[...] * inv_n - mean * mean
        rstd = jax.lax.rsqrt(var + EPS)
        for t in range(N_TILES):                                        # static unroll, no spills
            lo, hi = t * TN, (t + 1) * TN
            yt = out_ref[:, lo:hi]
            out_ref[:, lo:hi] = ((yt - mean) * rstd
                                 * gn_ref[0:1, lo:hi] + gn_ref[1:2, lo:hi])


# ----------------------------- wrapper ----------------------------------------
def voxel2sd_forward(x, params):
    """x: [B, IN_DIM] f32 -> normalized latent feature map [B, C, SIDE, SIDE]."""
    (w0, ln_pack, wm, w1, gn_pack) = params

    grid_spec = pltpu.PrefetchScalarGridSpec(
        num_scalar_prefetch=0,
        grid=(N_TILES,),
        in_specs=[
            pl.BlockSpec((B, IN_DIM), lambda j: (0, 0)),                 # x        (resident)
            pl.BlockSpec((IN_DIM, HID), lambda j: (0, 0)),               # w0  bf16 (resident)
            pl.BlockSpec((2 * (N_BLOCKS + 1), HID), lambda j: (0, 0)),   # LN pack  (resident)
            pl.BlockSpec((N_BLOCKS, HID, HID), lambda j: (0, 0, 0)),     # wm  bf16 (resident)
            pl.BlockSpec((HID, TN), lambda j: (0, j)),                   # w1  bf16 (streamed)
            pl.BlockSpec((2, LIN1_OUT), lambda j: (0, 0)),               # GN pack  (resident)
        ],
        out_specs=pl.BlockSpec((B, LIN1_OUT), lambda j: (0, 0)),         # lane-dense output
        scratch_shapes=[
            pltpu.VMEM((B, HID), jnp.float32),   # MLP result (persists across tiles)
            pltpu.VMEM((B, 1), jnp.float32),     # GroupNorm running sum
            pltpu.VMEM((B, 1), jnp.float32),     # GroupNorm running sum of squares
        ],
    )

    y = pl.pallas_call(
        voxel2sd_kernel,
        out_shape=jax.ShapeDtypeStruct((B, LIN1_OUT), jnp.float32),
        grid_spec=grid_spec,
        compiler_params=pltpu.CompilerParams(
            dimension_semantics=("arbitrary",),
            vmem_limit_bytes=32 * 1024 * 1024,
        ),
    )(x, w0, ln_pack, wm, w1, gn_pack)

    # (B, C*SIDE*SIDE) -> (B, C, SIDE, SIDE): free reshape (channel-major layout).
    # TODO(synk): diffusers Decoder upsampler would consume this feature map.
    return y.reshape(B, C, SIDE, SIDE)


# ----------------------------- pure-JAX reference -----------------------------
def voxel2sd_reference(x, params):
    (w0, ln, wm, w1, gn) = params
    hp = jax.lax.Precision.HIGHEST
    h = jnp.dot(x, w0.astype(jnp.float32), precision=hp)
    h = _silu_ref(_layernorm(h, ln[0:1, :], ln[1:2, :]))
    residual = h
    for i in range(N_BLOCKS):
        t = jnp.dot(h, wm[i].astype(jnp.float32), precision=hp)
        t = _silu_ref(_layernorm(t, ln[2 * i + 2:2 * i + 3, :],
                                 ln[2 * i + 3:2 * i + 4, :]))
        h = t + residual
        residual = h
    y = jnp.dot(h, w1.astype(jnp.float32), precision=hp)
    mean = jnp.mean(y, axis=-1, keepdims=True)
    var = jnp.mean(jnp.square(y - mean), axis=-1, keepdims=True)
    yhat = (y - mean) * jax.lax.rsqrt(var + EPS)
    y = yhat * gn[0:1, :] + gn[1:2, :]
    return y.reshape(B, C, SIDE, SIDE)


# ----------------------------- params -----------------------------------------
def init_params():
    key = jax.random.PRNGKey(0)
    ks = jax.random.split(key, 7)
    scale = 0.02
    # Matmul weights stored in bf16 (halves HBM->VMEM bytes; kernel is DMA-bound).
    w0 = (scale * jax.random.normal(ks[0], (IN_DIM, HID), jnp.float32)).astype(jnp.bfloat16)
    wm = (scale * jax.random.normal(ks[1], (N_BLOCKS, HID, HID), jnp.float32)).astype(jnp.bfloat16)
    w1 = (scale * jax.random.normal(ks[2], (HID, LIN1_OUT), jnp.float32)).astype(jnp.bfloat16)
    # LayerNorm affines packed into one (10, 128) f32 array: [g0, b0, g_blk0, b_blk0, ...].
    gammas = 1.0 + 0.05 * jax.random.normal(ks[3], (N_BLOCKS + 1, HID), jnp.float32)
    betas = 0.05 * jax.random.normal(ks[4], (N_BLOCKS + 1, HID), jnp.float32)
    ln_pack = jnp.stack([gammas, betas], axis=1).reshape(2 * (N_BLOCKS + 1), HID)
    # GroupNorm(1, C) per-channel affine, pre-expanded to per-element vectors and
    # packed as (2, C*SIDE*SIDE): row 0 = gamma, row 1 = beta (zero runtime cost).
    gn_gamma = 1.0 + 0.05 * jax.random.normal(ks[5], (C,), jnp.float32)
    gn_beta = 0.05 * jax.random.normal(ks[6], (C,), jnp.float32)
    gn_pack = jnp.stack([jnp.repeat(gn_gamma, SIDE * SIDE),
                         jnp.repeat(gn_beta, SIDE * SIDE)], axis=0)
    return (w0, ln_pack, wm, w1, gn_pack)


# ----------------------------- main --------------------------------------------
if __name__ == "__main__":
    key = jax.random.PRNGKey(0)
    x = jax.random.normal(jax.random.fold_in(key, 1), (B, IN_DIM), jnp.float32)

    params = init_params()
    out = jax.block_until_ready(voxel2sd_forward(x, params))

    assert out.shape == (B, C, SIDE, SIDE), out.shape
    assert out.dtype == jnp.float32

    ref = voxel2sd_reference(x, params)
    max_err = float(jnp.max(jnp.abs(out - ref)))
    assert max_err < 2e-2, f"max abs error {max_err}"

    print("KERNEL_OK")
</pallas_src>

<mosaic_0001>
module attributes {stable_mosaic.version = 11 : i64} {
  func.func @voxel2sd_kernel(%arg0: i32, %arg1: memref<2x512xf32, #tpu.memory_space<vmem>>, %arg2: memref<512x128xbf16, #tpu.memory_space<vmem>>, %arg3: memref<10x128xf32, #tpu.memory_space<vmem>>, %arg4: memref<4x128x128xbf16, #tpu.memory_space<vmem>>, %arg5: memref<128x2048xbf16, #tpu.memory_space<vmem>>, %arg6: memref<2x16384xf32, #tpu.memory_space<vmem>>, %arg7: memref<2x16384xf32, #tpu.memory_space<vmem>>, %arg8: memref<2x128xf32, #tpu.memory_space<vmem>>, %arg9: memref<2x1xf32, #tpu.memory_space<vmem>>, %arg10: memref<2x1xf32, #tpu.memory_space<vmem>>) attributes {dimension_semantics = [#tpu.dimension_semantics<arbitrary>], iteration_bounds = array<i64: 8>, scalar_prefetch = 0 : i64, scratch_operands = 3 : i64, tpu.core_type = #tpu.core_type<tc>, window_params = [{pipeline_mode = #tpu.pipeline_mode<synchronous>, transform_indices = @transform_0, window_bounds = array<i64: 2, 512>}, {pipeline_mode = #tpu.pipeline_mode<synchronous>, transform_indices = @transform_1, window_bounds = array<i64: 512, 128>}, {pipeline_mode = #tpu.pipeline_mode<synchronous>, transform_indices = @transform_2, window_bounds = array<i64: 10, 128>}, {pipeline_mode = #tpu.pipeline_mode<synchronous>, transform_indices = @transform_3, window_bounds = array<i64: 4, 128, 128>}, {transform_indices = @transform_4, window_bounds = array<i64: 128, 2048>}, {pipeline_mode = #tpu.pipeline_mode<synchronous>, transform_indices = @transform_5, window_bounds = array<i64: 2, 16384>}, {pipeline_mode = #tpu.pipeline_mode<synchronous>, transform_indices = @transform_6, window_bounds = array<i64: 2, 16384>}]} {
    %c0_i32 = arith.constant 0 : i32
    %0 = arith.cmpi eq, %arg0, %c0_i32 : i32
    %1 = arith.extui %0 : i1 to i32
    %c0_i32_0 = arith.constant 0 : i32
    %2 = arith.cmpi ne, %1, %c0_i32_0 : i32
    scf.if %2 {
      %c0_16 = arith.constant 0 : index
      %c0_17 = arith.constant 0 : index
      %25 = vector.load %arg1[%c0_16, %c0_17] : memref<2x512xf32, #tpu.memory_space<vmem>>, vector<2x512xf32>
      %c0_18 = arith.constant 0 : index
      %c0_19 = arith.constant 0 : index
      %26 = vector.load %arg2[%c0_18, %c0_19] : memref<512x128xbf16, #tpu.memory_space<vmem>>, vector<512x128xbf16>
      %27 = arith.extf %26 : vector<512x128xbf16> to vector<512x128xf32>
      %cst_20 = arith.constant dense<0.000000e+00> : vector<2x128xf32>
      %28 = tpu.matmul %25, %27, %cst_20 {dimension_numbers = #tpu.dot_dimension_numbers<[1], [0], [0], [1], [0, 0, 1, 1], [], []>} : vector<2x512xf32>, vector<512x128xf32>, vector<2x128xf32> -> vector<2x128xf32>
      %c0_21 = arith.constant 0 : index
      %c0_22 = arith.constant 0 : index
      %29 = vector.load %arg3[%c0_21, %c0_22] : memref<10x128xf32, #tpu.memory_space<vmem>>, vector<1x128xf32>
      %c1 = arith.constant 1 : index
      %c0_23 = arith.constant 0 : index
      %30 = vector.load %arg3[%c1, %c0_23] : memref<10x128xf32, #tpu.memory_space<vmem>>, vector<1x128xf32>
      %cst_24 = arith.constant dense<0.000000e+00> : vector<2xf32>
      %31 = vector.multi_reduction <add>, %28, %cst_24 [1] : vector<2x128xf32> to vector<2xf32>
      %32 = vector.shape_cast %31 : vector<2xf32> to vector<2x1xf32>
      %cst_25 = arith.constant 1.280000e+02 : f32
      %33 = vector.broadcast %cst_25 : f32 to vector<2x1xf32>
      %34 = arith.divf %32, %33 : vector<2x1xf32>
      %35 = vector.broadcast %34 : vector<2x1xf32> to vector<2x128xf32>
      %36 = arith.subf %28, %35 : vector<2x128xf32>
      %37 = arith.mulf %36, %36 : vector<2x128xf32>
      %cst_26 = arith.constant dense<0.000000e+00> : vector<2xf32>
      %38 = vector.multi_reduction <add>, %37, %cst_26 [1] : vector<2x128xf32> to vector<2xf32>
      %39 = vector.shape_cast %38 : vector<2xf32> to vector<2x1xf32>
      %cst_27 = arith.constant 1.280000e+02 : f32
      %40 = vector.broadcast %cst_27 : f32 to vector<2x1xf32>
      %41 = arith.divf %39, %40 : vector<2x1xf32>
      %42 = vector.broadcast %34 : vector<2x1xf32> to vector<2x128xf32>
      %43 = arith.subf %28, %42 : vector<2x128xf32>
      %cst_28 = arith.constant 9.99999974E-6 : f32
      %44 = vector.broadcast %cst_28 : f32 to vector<2x1xf32>
      %45 = arith.addf %41, %44 : vector<2x1xf32>
      %46 = math.rsqrt %45 : vector<2x1xf32>
      %47 = vector.broadcast %46 : vector<2x1xf32> to vector<2x128xf32>
      %48 = arith.mulf %43, %47 : vector<2x128xf32>
      %49 = vector.broadcast %29 : vector<1x128xf32> to vector<2x128xf32>
      %50 = arith.mulf %48, %49 : vector<2x128xf32>
      %51 = vector.broadcast %30 : vector<1x128xf32> to vector<2x128xf32>
      %52 = arith.addf %50, %51 : vector<2x128xf32>
      %cst_29 = arith.constant 0.000000e+00 : f32
      %53 = vector.broadcast %cst_29 : f32 to vector<2x128xf32>
      %54 = arith.subf %53, %52 : vector<2x128xf32>
      %55 = math.exp %54 : vector<2x128xf32>
      %cst_30 = arith.constant 1.000000e+00 : f32
      %56 = vector.broadcast %cst_30 : f32 to vector<2x128xf32>
      %57 = arith.addf %56, %55 : vector<2x128xf32>
      %58 = tpu.reciprocal %57 {approx = true} : vector<2x128xf32> -> vector<2x128xf32>
      %59 = arith.mulf %52, %58 : vector<2x128xf32>
      %c0_31 = arith.constant 0 : index
      %c0_32 = arith.constant 0 : index
      %c0_33 = arith.constant 0 : index
      %60 = vector.load %arg4[%c0_31, %c0_32, %c0_33] : memref<4x128x128xbf16, #tpu.memory_space<vmem>>, vector<1x128x128xbf16>
      %61 = vector.shape_cast %60 : vector<1x128x128xbf16> to vector<128x128xbf16>
      %62 = arith.extf %61 : vector<128x128xbf16> to vector<128x128xf32>
      %cst_34 = arith.constant dense<0.000000e+00> : vector<2x128xf32>
      %63 = tpu.matmul %59, %62, %cst_34 {dimension_numbers = #tpu.dot_dimension_numbers<[1], [0], [0], [1], [0, 0, 1, 1], [], []>} : vector<2x128xf32>, vector<128x128xf32>, vector<2x128xf32> -> vector<2x128xf32>
      %c2 = arith.constant 2 : index
      %c0_35 = arith.constant 0 : index
      %64 = vector.load %arg3[%c2, %c0_35] : memref<10x128xf32, #tpu.memory_space<vmem>>, vector<1x128xf32>
      %c3 = arith.constant 3 : index
      %c0_36 = arith.constant 0 : index
      %65 = vector.load %arg3[%c3, %c0_36] : memref<10x128xf32, #tpu.memory_space<vmem>>, vector<1x128xf32>
      %cst_37 = arith.constant dense<0.000000e+00> : vector<2xf32>
      %66 = vector.multi_reduction <add>, %63, %cst_37 [1] : vector<2x128xf32> to vector<2xf32>
      %67 = vector.shape_cast %66 : vector<2xf32> to vector<2x1xf32>
      %cst_38 = arith.constant 1.280000e+02 : f32
      %68 = vector.broadcast %cst_38 : f32 to vector<2x1xf32>
      %69 = arith.divf %67, %68 : vector<2x1xf32>
      %70 = vector.broadcast %69 : vector<2x1xf32> to vector<2x128xf32>
      %71 = arith.subf %63, %70 : vector<2x128xf32>
      %72 = arith.mulf %71, %71 : vector<2x128xf32>
      %cst_39 = arith.constant dense<0.000000e+00> : vector<2xf32>
      %73 = vector.multi_reduction <add>, %72, %cst_39 [1] : vector<2x128xf32> to vector<2xf32>
      %74 = vector.shape_cast %73 : vector<2xf32> to vector<2x1xf32>
      %cst_40 = arith.constant 1.280000e+02 : f32
      %75 = vector.broadcast %cst_40 : f32 to vector<2x1xf32>
      %76 = arith.divf %74, %75 : vector<2x1xf32>
      %77 = vector.broadcast %69 : vector<2x1xf32> to vector<2x128xf32>
      %78 = arith.subf %63, %77 : vector<2x128xf32>
      %cst_41 = arith.constant 9.99999974E-6 : f32
      %79 = vector.broadcast %cst_41 : f32 to vector<2x1xf32>
      %80 = arith.addf %76, %79 : vector<2x1xf32>
      %81 = math.rsqrt %80 : vector<2x1xf32>
      %82 = vector.broadcast %81 : vector<2x1xf32> to vector<2x128xf32>
      %83 = arith.mulf %78, %82 : vector<2x128xf32>
      %84 = vector.broadcast %64 : vector<1x128xf32> to vector<2x128xf32>
      %85 = arith.mulf %83, %84 : vector<2x128xf32>
      %86 = vector.broadcast %65 : vector<1x128xf32> to vector<2x128xf32>
      %87 = arith.addf %85, %86 : vector<2x128xf32>
      %cst_42 = arith.constant 0.000000e+00 : f32
      %88 = vector.broadcast %cst_42 : f32 to vector<2x128xf32>
      %89 = arith.subf %88, %87 : vector<2x128xf32>
      %90 = math.exp %89 : vector<2x128xf32>
      %cst_43 = arith.constant 1.000000e+00 : f32
      %91 = vector.broadcast %cst_43 : f32 to vector<2x128xf32>
      %92 = arith.addf %91, %90 : vector<2x128xf32>
      %93 = tpu.reciprocal %92 {approx = true} : vector<2x128xf32> -> vector<2x128xf32>
      %94 = arith.mulf %87, %93 : vector<2x128xf32>
      %95 = arith.addf %94, %59 : vector<2x128xf32>
      %c1_44 = arith.constant 1 : index
      %c0_45 = arith.constant 0 : index
      %c0_46 = arith.constant 0 : index
      %96 = vector.load %arg4[%c1_44, %c0_45, %c0_46] : memref<4x128x128xbf16, #tpu.memory_space<vmem>>, vector<1x128x128xbf16>
      %97 = vector.shape_cast %96 : vector<1x128x128xbf16> to vector<128x128xbf16>
      %98 = arith.extf %97 : vector<128x128xbf16> to vector<128x128xf32>
      %cst_47 = arith.constant dense<0.000000e+00> : vector<2x128xf32>
      %99 = tpu.matmul %95, %98, %cst_47 {dimension_numbers = #tpu.dot_dimension_numbers<[1], [0], [0], [1], [0, 0, 1, 1], [], []>} : vector<2x128xf32>, vector<128x128xf32>, vector<2x128xf32> -> vector<2x128xf32>
      %c4 = arith.constant 4 : index
      %c0_48 = arith.constant 0 : index
      %100 = vector.load %arg3[%c4, %c0_48] : memref<10x128xf32, #tpu.memory_space<vmem>>, vector<1x128xf32>
      %c5 = arith.constant 5 : index
      %c0_49 = arith.constant 0 : index
      %101 = vector.load %arg3[%c5, %c0_49] : memref<10x128xf32, #tpu.memory_space<vmem>>, vector<1x128xf32>
      %cst_50 = arith.constant dense<0.000000e+00> : vector<2xf32>
      %102 = vector.multi_reduction <add>, %99, %cst_50 [1] : vector<2x128xf32> to vector<2xf32>
      %103 = vector.shape_cast %102 : vector<2xf32> to vector<2x1xf32>
      %cst_51 = arith.constant 1.280000e+02 : f32
      %104 = vector.broadcast %cst_51 : f32 to vector<2x1xf32>
      %105 = arith.divf %103, %104 : vector<2x1xf32>
      %106 = vector.broadcast %105 : vector<2x1xf32> to vector<2x128xf32>
      %107 = arith.subf %99, %106 : vector<2x128xf32>
      %108 = arith.mulf %107, %107 : vector<2x128xf32>
      %cst_52 = arith.constant dense<0.000000e+00> : vector<2xf32>
      %109 = vector.multi_reduction <add>, %108, %cst_52 [1] : vector<2x128xf32> to vector<2xf32>
      %110 = vector.shape_cast %109 : vector<2xf32> to vector<2x1xf32>
      %cst_53 = arith.constant 1.280000e+02 : f32
      %111 = vector.broadcast %cst_53 : f32 to vector<2x1xf32>
      %112 = arith.divf %110, %111 : vector<2x1xf32>
      %113 = vector.broadcast %105 : vector<2x1xf32> to vector<2x128xf32>
      %114 = arith.subf %99, %113 : vector<2x128xf32>
      %cst_54 = arith.constant 9.99999974E-6 : f32
      %115 = vector.broadcast %cst_54 : f32 to vector<2x1xf32>
      %116 = arith.addf %112, %115 : vector<2x1xf32>
      %117 = math.rsqrt %116 : vector<2x1xf32>
      %118 = vector.broadcast %117 : vector<2x1xf32> to vector<2x128xf32>
      %119 = arith.mulf %114, %118 : vector<2x128xf32>
      %120 = vector.broadcast %100 : vector<1x128xf32> to vector<2x128xf32>
      %121 = arith.mulf %119, %120 : vector<2x128xf32>
      %122 = vector.broadcast %101 : vector<1x128xf32> to vector<2x128xf32>
      %123 = arith.addf %121, %122 : vector<2x128xf32>
      %cst_55 = arith.constant 0.000000e+00 : f32
      %124 = vector.broadcast %cst_55 : f32 to vector<2x128xf32>
      %125 = arith.subf %124, %123 : vector<2x128xf32>
      %126 = math.exp %125 : vector<2x128xf32>
      %cst_56 = arith.constant 1.000000e+00 : f32
      %127 = vector.broadcast %cst_56 : f32 to vector<2x128xf32>
      %128 = arith.addf %127, %126 : vector<2x128xf32>
      %129 = tpu.reciprocal %128 {approx = true} : vector<2x128xf32> -> vector<2x128xf32>
      %130 = arith.mulf %123, %129 : vector<2x128xf32>
      %131 = arith.addf %130, %95 : vector<2x128xf32>
      %c2_57 = arith.constant 2 : index
      %c0_58 = arith.constant 0 : index
      %c0_59 = arith.constant 0 : index
      %132 = vector.load %arg4[%c2_57, %c0_58, %c0_59] : memref<4x128x128xbf16, #tpu.memory_space<vmem>>, vector<1x128x128xbf16>
      %133 = vector.shape_cast %132 : vector<1x128x128xbf16> to vector<128x128xbf16>
      %134 = arith.extf %133 : vector<128x128xbf16> to vector<128x128xf32>
      %cst_60 = arith.constant dense<0.000000e+00> : vector<2x128xf32>
      %135 = tpu.matmul %131, %134, %cst_60 {dimension_numbers = #tpu.dot_dimension_numbers<[1], [0], [0], [1], [0, 0, 1, 1], [], []>} : vector<2x128xf32>, vector<128x128xf32>, vector<2x128xf32> -> vector<2x128xf32>
      %c6 = arith.constant 6 : index
      %c0_61 = arith.constant 0 : index
      %136 = vector.load %arg3[%c6, %c0_61] : memref<10x128xf32, #tpu.memory_space<vmem>>, vector<1x128xf32>
      %c7 = arith.constant 7 : index
      %c0_62 = arith.constant 0 : index
      %137 = vector.load %arg3[%c7, %c0_62] : memref<10x128xf32, #tpu.memory_space<vmem>>, vector<1x128xf32>
      %cst_63 = arith.constant dense<0.000000e+00> : vector<2xf32>
      %138 = vector.multi_reduction <add>, %135, %cst_63 [1] : vector<2x128xf32> to vector<2xf32>
      %139 = vector.shape_cast %138 : vector<2xf32> to vector<2x1xf32>
      %cst_64 = arith.constant 1.280000e+02 : f32
      %140 = vector.broadcast %cst_64 : f32 to vector<2x1xf32>
      %141 = arith.divf %139, %140 : vector<2x1xf32>
      %142 = vector.broadcast %141 : vector<2x1xf32> to vector<2x128xf32>
      %143 = arith.subf %135, %142 : vector<2x128xf32>
      %144 = arith.mulf %143, %143 : vector<2x128xf32>
      %cst_65 = arith.constant dense<0.000000e+00> : vector<2xf32>
      %145 = vector.multi_reduction <add>, %144, %cst_65 [1] : vector<2x128xf32> to vector<2xf32>
      %146 = vector.shape_cast %145 : vector<2xf32> to vector<2x1xf32>
      %cst_66 = arith.constant 1.280000e+02 : f32
      %147 = vector.broadcast %cst_66 : f32 to vector<2x1xf32>
      %148 = arith.divf %146, %147 : vector<2x1xf32>
      %149 = vector.broadcast %141 : vector<2x1xf32> to vector<2x128xf32>
      %150 = arith.subf %135, %149 : vector<2x128xf32>
      %cst_67 = arith.constant 9.99999974E-6 : f32
      %151 = vector.broadcast %cst_67 : f32 to vector<2x1xf32>
      %152 = arith.addf %148, %151 : vector<2x1xf32>
      %153 = math.rsqrt %152 : vector<2x1xf32>
      %154 = vector.broadcast %153 : vector<2x1xf32> to vector<2x128xf32>
      %155 = arith.mulf %150, %154 : vector<2x128xf32>
      %156 = vector.broadcast %136 : vector<1x128xf32> to vector<2x128xf32>
      %157 = arith.mulf %155, %156 : vector<2x128xf32>
      %158 = vector.broadcast %137 : vector<1x128xf32> to vector<2x128xf32>
      %159 = arith.addf %157, %158 : vector<2x128xf32>
      %cst_68 = arith.constant 0.000000e+00 : f32
      %160 = vector.broadcast %cst_68 : f32 to vector<2x128xf32>
      %161 = arith.subf %160, %159 : vector<2x128xf32>
      %162 = math.exp %161 : vector<2x128xf32>
      %cst_69 = arith.constant 1.000000e+00 : f32
      %163 = vector.broadcast %cst_69 : f32 to vector<2x128xf32>
      %164 = arith.addf %163, %162 : vector<2x128xf32>
      %165 = tpu.reciprocal %164 {approx = true} : vector<2x128xf32> -> vector<2x128xf32>
      %166 = arith.mulf %159, %165 : vector<2x128xf32>
      %167 = arith.addf %166, %131 : vector<2x128xf32>
      %c3_70 = arith.constant 3 : index
      %c0_71 = arith.constant 0 : index
      %c0_72 = arith.constant 0 : index
      %168 = vector.load %arg4[%c3_70, %c0_71, %c0_72] : memref<4x128x128xbf16, #tpu.memory_space<vmem>>, vector<1x128x128xbf16>
      %169 = vector.shape_cast %168 : vector<1x128x128xbf16> to vector<128x128xbf16>
      %170 = arith.extf %169 : vector<128x128xbf16> to vector<128x128xf32>
      %cst_73 = arith.constant dense<0.000000e+00> : vector<2x128xf32>
      %171 = tpu.matmul %167, %170, %cst_73 {dimension_numbers = #tpu.dot_dimension_numbers<[1], [0], [0], [1], [0, 0, 1, 1], [], []>} : vector<2x128xf32>, vector<128x128xf32>, vector<2x128xf32> -> vector<2x128xf32>
      %c8 = arith.constant 8 : index
      %c0_74 = arith.constant 0 : index
      %172 = vector.load %arg3[%c8, %c0_74] : memref<10x128xf32, #tpu.memory_space<vmem>>, vector<1x128xf32>
      %c9 = arith.constant 9 : index
      %c0_75 = arith.constant 0 : index
      %173 = vector.load %arg3[%c9, %c0_75] : memref<10x128xf32, #tpu.memory_space<vmem>>, vector<1x128xf32>
      %cst_76 = arith.constant dense<0.000000e+00> : vector<2xf32>
      %174 = vector.multi_reduction <add>, %171, %cst_76 [1] : vector<2x128xf32> to vector<2xf32>
      %175 = vector.shape_cast %174 : vector<2xf32> to vector<2x1xf32>
      %cst_77 = arith.constant 1.280000e+02 : f32
      %176 = vector.broadcast %cst_77 : f32 to vector<2x1xf32>
      %177 = arith.divf %175, %176 : vector<2x1xf32>
      %178 = vector.broadcast %177 : vector<2x1xf32> to vector<2x128xf32>
      %179 = arith.subf %171, %178 : vector<2x128xf32>
      %180 = arith.mulf %179, %179 : vector<2x128xf32>
      %cst_78 = arith.constant dense<0.000000e+00> : vector<2xf32>
      %181 = vector.multi_reduction <add>, %180, %cst_78 [1] : vector<2x128xf32> to vector<2xf32>
      %182 = vector.shape_cast %181 : vector<2xf32> to vector<2x1xf32>
      %cst_79 = arith.constant 1.280000e+02 : f32
      %183 = vector.broadcast %cst_79 : f32 to vector<2x1xf32>
      %184 = arith.divf %182, %183 : vector<2x1xf32>
      %185 = vector.broadcast %177 : vector<2x1xf32> to vector<2x128xf32>
      %186 = arith.subf %171, %185 : vector<2x128xf32>
      %cst_80 = arith.constant 9.99999974E-6 : f32
      %187 = vector.broadcast %cst_80 : f32 to vector<2x1xf32>
      %188 = arith.addf %184, %187 : vector<2x1xf32>
      %189 = math.rsqrt %188 : vector<2x1xf32>
      %190 = vector.broadcast %189 : vector<2x1xf32> to vector<2x128xf32>
      %191 = arith.mulf %186, %190 : vector<2x128xf32>
      %192 = vector.broadcast %172 : vector<1x128xf32> to vector<2x128xf32>
      %193 = arith.mulf %191, %192 : vector<2x128xf32>
      %194 = vector.broadcast %173 : vector<1x128xf32> to vector<2x128xf32>
      %195 = arith.addf %193, %194 : vector<2x128xf32>
      %cst_81 = arith.constant 0.000000e+00 : f32
      %196 = vector.broadcast %cst_81 : f32 to vector<2x128xf32>
      %197 = arith.subf %196, %195 : vector<2x128xf32>
      %198 = math.exp %197 : vector<2x128xf32>
      %cst_82 = arith.constant 1.000000e+00 : f32
      %199 = vector.broadcast %cst_82 : f32 to vector<2x128xf32>
      %200 = arith.addf %199, %198 : vector<2x128xf32>
      %201 = tpu.reciprocal %200 {approx = true} : vector<2x128xf32> -> vector<2x128xf32>
      %202 = arith.mulf %195, %201 : vector<2x128xf32>
      %203 = arith.addf %202, %167 : vector<2x128xf32>
      %c0_83 = arith.constant 0 : index
      %c0_84 = arith.constant 0 : index
      %204 = vector.load %arg8[%c0_83, %c0_84] : memref<2x128xf32, #tpu.memory_space<vmem>>, vector<2x128xf32>
      tpu.vector_store %arg8[%c0_83, %c0_84], %203 {strides = array<i32>} : memref<2x128xf32, #tpu.memory_space<vmem>>, vector<2x128xf32>,
      %cst_85 = arith.constant 0.000000e+00 : f32
      %205 = vector.broadcast %cst_85 : f32 to vector<2x1xf32>
      %c0_86 = arith.constant 0 : index
      %c0_87 = arith.constant 0 : index
      %206 = vector.load %arg9[%c0_86, %c0_87] : memref<2x1xf32, #tpu.memory_space<vmem>>, vector<2x1xf32>
      tpu.vector_store %arg9[%c0_86, %c0_87], %205 {strides = array<i32>} : memref<2x1xf32, #tpu.memory_space<vmem>>, vector<2x1xf32>,
      %cst_88 = arith.constant 0.000000e+00 : f32
      %207 = vector.broadcast %cst_88 : f32 to vector<2x1xf32>
      %c0_89 = arith.constant 0 : index
      %c0_90 = arith.constant 0 : index
      %208 = vector.load %arg10[%c0_89, %c0_90] : memref<2x1xf32, #tpu.memory_space<vmem>>, vector<2x1xf32>
      tpu.vector_store %arg10[%c0_89, %c0_90], %207 {strides = array<i32>} : memref<2x1xf32, #tpu.memory_space<vmem>>, vector<2x1xf32>,
    } else {
    }
    %c0 = arith.constant 0 : index
    %c0_1 = arith.constant 0 : index
    %3 = vector.load %arg8[%c0, %c0_1] : memref<2x128xf32, #tpu.memory_space<vmem>>, vector<2x128xf32>
    %c0_2 = arith.constant 0 : index
    %c0_3 = arith.constant 0 : index
    %4 = vector.load %arg5[%c0_2, %c0_3] : memref<128x2048xbf16, #tpu.memory_space<vmem>>, vector<128x2048xbf16>
    %5 = arith.extf %4 : vector<128x2048xbf16> to vector<128x2048xf32>
    %cst = arith.constant dense<0.000000e+00> : vector<2x2048xf32>
    %6 = tpu.matmul %3, %5, %cst {dimension_numbers = #tpu.dot_dimension_numbers<[1], [0], [0], [1], [0, 0, 1, 1], [], []>} : vector<2x128xf32>, vector<128x2048xf32>, vector<2x2048xf32> -> vector<2x2048xf32>
    %c2048_i32 = arith.constant 2048 : i32
    %7 = arith.muli %arg0, %c2048_i32 : i32
    %8 = tpu.assume_multiple %7, 2048 : i32
    %c0_4 = arith.constant 0 : index
    %9 = arith.index_cast %8 : i32 to index
    %10 = vector.load %arg7[%c0_4, %9] : memref<2x16384xf32, #tpu.memory_space<vmem>>, vector<2x2048xf32>
    tpu.vector_store %arg7[%c0_4, %9], %6 {strides = array<i32>} : memref<2x16384xf32, #tpu.memory_space<vmem>>, vector<2x2048xf32>,
    %c0_5 = arith.constant 0 : index
    %c0_6 = arith.constant 0 : index
    %11 = vector.load %arg9[%c0_5, %c0_6] : memref<2x1xf32, #tpu.memory_space<vmem>>, vector<2x1xf32>
    %cst_7 = arith.constant dense<0.000000e+00> : vector<2xf32>
    %12 = vector.multi_reduction <add>, %6, %cst_7 [1] : vector<2x2048xf32> to vector<2xf32>
    %13 = vector.shape_cast %12 : vector<2xf32> to vector<2x1xf32>
    %14 = arith.addf %11, %13 : vector<2x1xf32>
    %c0_8 = arith.constant 0 : index
    %c0_9 = arith.constant 0 : index
    %15 = vector.load %arg9[%c0_8, %c0_9] : memref<2x1xf32, #tpu.memory_space<vmem>>, vector<2x1xf32>
    tpu.vector_store %arg9[%c0_8, %c0_9], %14 {strides = array<i32>} : memref<2x1xf32, #tpu.memory_space<vmem>>, vector<2x1xf32>,
    %c0_10 = arith.constant 0 : index
    %c0_11 = arith.constant 0 : index
    %16 = vector.load %arg10[%c0_10, %c0_11] : memref<2x1xf32, #tpu.memory_space<vmem>>, vector<2x1xf32>
    %17 = arith.mulf %6, %6 : vector<2x2048xf32>
    %cst_12 = arith.constant dense<0.000000e+00> : vector<2xf32>
    %18 = vector.multi_reduction <add>, %17, %cst_12 [1] : vector<2x2048xf32> to vector<2xf32>
    %19 = vector.shape_cast %18 : vector<2xf32> to vector<2x1xf32>
    %20 = arith.addf %16, %19 : vector<2x1xf32>
    %c0_13 = arith.constant 0 : index
    %c0_14 = arith.constant 0 : index
    %21 = vector.load %arg10[%c0_13, %c0_14] : memref<2x1xf32, #tpu.memory_space<vmem>>, vector<2x1xf32>
    tpu.vector_store %arg10[%c0_13, %c0_14], %20 {strides = array<i32>} : memref<2x1xf32, #tpu.memory_space<vmem>>, vector<2x1xf32>,
    %c7_i32 = arith.constant 7 : i32
    %22 = arith.cmpi eq, %arg0, %c7_i32 : i32
    %23 = arith.extui %22 : i1 to i32
    %c0_i32_15 = arith.constant 0 : i32
    %24 = arith.cmpi ne, %23, %c0_i32_15 : i32
    scf.if %24 {
      %c0_16 = arith.constant 0 : index
      %c0_17 = arith.constant 0 : index
      %25 = vector.load %arg9[%c0_16, %c0_17] : memref<2x1xf32, #tpu.memory_space<vmem>>, vector<2x1xf32>
      %cst_18 = arith.constant 6.10351563E-5 : f32
      %26 = vector.broadcast %cst_18 : f32 to vector<2x1xf32>
      %27 = arith.mulf %25, %26 : vector<2x1xf32>
      %c0_19 = arith.constant 0 : index
      %c0_20 = arith.constant 0 : index
      %28 = vector.load %arg10[%c0_19, %c0_20] : memref<2x1xf32, #tpu.memory_space<vmem>>, vector<2x1xf32>
      %cst_21 = arith.constant 6.10351563E-5 : f32
      %29 = vector.broadcast %cst_21 : f32 to vector<2x1xf32>
      %30 = arith.mulf %28, %29 : vector<2x1xf32>
      %31 = arith.mulf %27, %27 : vector<2x1xf32>
      %32 = arith.subf %30, %31 : vector<2x1xf32>
      %cst_22 = arith.constant 9.99999974E-6 : f32
      %33 = vector.broadcast %cst_22 : f32 to vector<2x1xf32>
      %34 = arith.addf %32, %33 : vector<2x1xf32>
      %35 = math.rsqrt %34 : vector<2x1xf32>
      %c0_23 = arith.constant 0 : index
      %c0_24 = arith.constant 0 : index
      %36 = vector.load %arg7[%c0_23, %c0_24] : memref<2x16384xf32, #tpu.memory_space<vmem>>, vector<2x2048xf32>
      %37 = vector.broadcast %27 : vector<2x1xf32> to vector<2x2048xf32>
      %38 = arith.subf %36, %37 : vector<2x2048xf32>
      %39 = vector.broadcast %35 : vector<2x1xf32> to vector<2x2048xf32>
      %40 = arith.mulf %38, %39 : vector<2x2048xf32>
      %c0_25 = arith.constant 0 : index
      %c0_26 = arith.constant 0 : index
      %41 = vector.load %arg6[%c0_25, %c0_26] : memref<2x16384xf32, #tpu.memory_space<vmem>>, vector<1x2048xf32>
      %42 = vector.broadcast %41 : vector<1x2048xf32> to vector<2x2048xf32>
      %43 = arith.mulf %40, %42 : vector<2x2048xf32>
      %c1 = arith.constant 1 : index
      %c0_27 = arith.constant 0 : index
      %44 = vector.load %arg6[%c1, %c0_27] : memref<2x16384xf32, #tpu.memory_space<vmem>>, vector<1x2048xf32>
      %45 = vector.broadcast %44 : vector<1x2048xf32> to vector<2x2048xf32>
      %46 = arith.addf %43, %45 : vector<2x2048xf32>
      %c0_28 = arith.constant 0 : index
      %c0_29 = arith.constant 0 : index
      %47 = vector.load %arg7[%c0_28, %c0_29] : memref<2x16384xf32, #tpu.memory_space<vmem>>, vector<2x2048xf32>
      tpu.vector_store %arg7[%c0_28, %c0_29], %46 {strides = array<i32>} : memref<2x16384xf32, #tpu.memory_space<vmem>>, vector<2x2048xf32>,
      %c0_30 = arith.constant 0 : index
      %c2048 = arith.constant 2048 : index
      %48 = vector.load %arg7[%c0_30, %c2048] : memref<2x16384xf32, #tpu.memory_space<vmem>>, vector<2x2048xf32>
      %49 = vector.broadcast %27 : vector<2x1xf32> to vector<2x2048xf32>
      %50 = arith.subf %48, %49 : vector<2x2048xf32>
      %51 = vector.broadcast %35 : vector<2x1xf32> to vector<2x2048xf32>
      %52 = arith.mulf %50, %51 : vector<2x2048xf32>
      %c0_31 = arith.constant 0 : index
      %c2048_32 = arith.constant 2048 : index
      %53 = vector.load %arg6[%c0_31, %c2048_32] : memref<2x16384xf32, #tpu.memory_space<vmem>>, vector<1x2048xf32>
      %54 = vector.broadcast %53 : vector<1x2048xf32> to vector<2x2048xf32>
      %55 = arith.mulf %52, %54 : vector<2x2048xf32>
      %c1_33 = arith.constant 1 : index
      %c2048_34 = arith.constant 2048 : index
      %56 = vector.load %arg6[%c1_33, %c2048_34] : memref<2x16384xf32, #tpu.memory_space<vmem>>, vector<1x2048xf32>
      %57 = vector.broadcast %56 : vector<1x2048xf32> to vector<2x2048xf32>
      %58 = arith.addf %55, %57 : vector<2x2048xf32>
      %c0_35 = arith.constant 0 : index
      %c2048_36 = arith.constant 2048 : index
      %59 = vector.load %arg7[%c0_35, %c2048_36] : memref<2x16384xf32, #tpu.memory_space<vmem>>, vector<2x2048xf32>
      tpu.vector_store %arg7[%c0_35, %c2048_36], %58 {strides = array<i32>} : memref<2x16384xf32, #tpu.memory_space<vmem>>, vector<2x2048xf32>,
      %c0_37 = arith.constant 0 : index
      %c4096 = arith.constant 4096 : index
      %60 = vector.load %arg7[%c0_37, %c4096] : memref<2x16384xf32, #tpu.memory_space<vmem>>, vector<2x2048xf32>
      %61 = vector.broadcast %27 : vector<2x1xf32> to vector<2x2048xf32>
      %62 = arith.subf %60, %61 : vector<2x2048xf32>
      %63 = vector.broadcast %35 : vector<2x1xf32> to vector<2x2048xf32>
      %64 = arith.mulf %62, %63 : vector<2x2048xf32>
      %c0_38 = arith.constant 0 : index
      %c4096_39 = arith.constant 4096 : index
      %65 = vector.load %arg6[%c0_38, %c4096_39] : memref<2x16384xf32, #tpu.memory_space<vmem>>, vector<1x2048xf32>
      %66 = vector.broadcast %65 : vector<1x2048xf32> to vector<2x2048xf32>
      %67 = arith.mulf %64, %66 : vector<2x2048xf32>
      %c1_40 = arith.constant 1 : index
      %c4096_41 = arith.constant 4096 : index
      %68 = vector.load %arg6[%c1_40, %c4096_41] : memref<2x16384xf32, #tpu.memory_space<vmem>>, vector<1x2048xf32>
      %69 = vector.broadcast %68 : vector<1x2048xf32> to vector<2x2048xf32>
      %70 = arith.addf %67, %69 : vector<2x2048xf32>
      %c0_42 = arith.constant 0 : index
      %c4096_43 = arith.constant 4096 : index
      %71 = vector.load %arg7[%c0_42, %c4096_43] : memref<2x16384xf32, #tpu.memory_space<vmem>>, vector<2x2048xf32>
      tpu.vector_store %arg7[%c0_42, %c4096_43], %70 {strides = array<i32>} : memref<2x16384xf32, #tpu.memory_space<vmem>>, vector<2x2048xf32>,
      %c0_44 = arith.constant 0 : index
      %c6144 = arith.constant 6144 : index
      %72 = vector.load %arg7[%c0_44, %c6144] : memref<2x16384xf32, #tpu.memory_space<vmem>>, vector<2x2048xf32>
      %73 = vector.broadcast %27 : vector<2x1xf32> to vector<2x2048xf32>
      %74 = arith.subf %72, %73 : vector<2x2048xf32>
      %75 = vector.broadcast %35 : vector<2x1xf32> to vector<2x2048xf32>
      %76 = arith.mulf %74, %75 : vector<2x2048xf32>
      %c0_45 = arith.constant 0 : index
      %c6144_46 = arith.constant 6144 : index
      %77 = vector.load %arg6[%c0_45, %c6144_46] : memref<2x16384xf32, #tpu.memory_space<vmem>>, vector<1x2048xf32>
      %78 = vector.broadcast %77 : vector<1x2048xf32> to vector<2x2048xf32>
      %79 = arith.mulf %76, %78 : vector<2x2048xf32>
      %c1_47 = arith.constant 1 : index
      %c6144_48 = arith.constant 6144 : index
      %80 = vector.load %arg6[%c1_47, %c6144_48] : memref<2x16384xf32, #tpu.memory_space<vmem>>, vector<1x2048xf32>
      %81 = vector.broadcast %80 : vector<1x2048xf32> to vector<2x2048xf32>
      %82 = arith.addf %79, %81 : vector<2x2048xf32>
      %c0_49 = arith.constant 0 : index
      %c6144_50 = arith.constant 6144 : index
      %83 = vector.load %arg7[%c0_49, %c6144_50] : memref<2x16384xf32, #tpu.memory_space<vmem>>, vector<2x2048xf32>
      tpu.vector_store %arg7[%c0_49, %c6144_50], %82 {strides = array<i32>} : memref<2x16384xf32, #tpu.memory_space<vmem>>, vector<2x2048xf32>,
      %c0_51 = arith.constant 0 : index
      %c8192 = arith.constant 8192 : index
      %84 = vector.load %arg7[%c0_51, %c8192] : memref<2x16384xf32, #tpu.memory_space<vmem>>, vector<2x2048xf32>
      %85 = vector.broadcast %27 : vector<2x1xf32> to vector<2x2048xf32>
      %86 = arith.subf %84, %85 : vector<2x2048xf32>
      %87 = vector.broadcast %35 : vector<2x1xf32> to vector<2x2048xf32>
      %88 = arith.mulf %86, %87 : vector<2x2048xf32>
      %c0_52 = arith.constant 0 : index
      %c8192_53 = arith.constant 8192 : index
      %89 = vector.load %arg6[%c0_52, %c8192_53] : memref<2x16384xf32, #tpu.memory_space<vmem>>, vector<1x2048xf32>
      %90 = vector.broadcast %89 : vector<1x2048xf32> to vector<2x2048xf32>
      %91 = arith.mulf %88, %90 : vector<2x2048xf32>
      %c1_54 = arith.constant 1 : index
      %c8192_55 = arith.constant 8192 : index
      %92 = vector.load %arg6[%c1_54, %c8192_55] : memref<2x16384xf32, #tpu.memory_space<vmem>>, vector<1x2048xf32>
      %93 = vector.broadcast %92 : vector<1x2048xf32> to vector<2x2048xf32>
      %94 = arith.addf %91, %93 : vector<2x2048xf32>
      %c0_56 = arith.constant 0 : index
      %c8192_57 = arith.constant 8192 : index
      %95 = vector.load %arg7[%c0_56, %c8192_57] : memref<2x16384xf32, #tpu.memory_space<vmem>>, vector<2x2048xf32>
      tpu.vector_store %arg7[%c0_56, %c8192_57], %94 {strides = array<i32>} : memref<2x16384xf32, #tpu.memory_space<vmem>>, vector<2x2048xf32>,
      %c0_58 = arith.constant 0 : index
      %c10240 = arith.constant 10240 : index
      %96 = vector.load %arg7[%c0_58, %c10240] : memref<2x16384xf32, #tpu.memory_space<vmem>>, vector<2x2048xf32>
      %97 = vector.broadcast %27 : vector<2x1xf32> to vector<2x2048xf32>
      %98 = arith.subf %96, %97 : vector<2x2048xf32>
      %99 = vector.broadcast %35 : vector<2x1xf32> to vector<2x2048xf32>
      %100 = arith.mulf %98, %99 : vector<2x2048xf32>
      %c0_59 = arith.constant 0 : index
      %c10240_60 = arith.constant 10240 : index
      %101 = vector.load %arg6[%c0_59, %c10240_60] : memref<2x16384xf32, #tpu.memory_space<vmem>>, vector<1x2048xf32>
      %102 = vector.broadcast %101 : vector<1x2048xf32> to vector<2x2048xf32>
      %103 = arith.mulf %100, %102 : vector<2x2048xf32>
      %c1_61 = arith.constant 1 : index
      %c10240_62 = arith.constant 10240 : index
      %104 = vector.load %arg6[%c1_61, %c10240_62] : memref<2x16384xf32, #tpu.memory_space<vmem>>, vector<1x2048xf32>
      %105 = vector.broadcast %104 : vector<1x2048xf32> to vector<2x2048xf32>
      %106 = arith.addf %103, %105 : vector<2x2048xf32>
      %c0_63 = arith.constant 0 : index
      %c10240_64 = arith.constant 10240 : index
      %107 = vector.load %arg7[%c0_63, %c10240_64] : memref<2x16384xf32, #tpu.memory_space<vmem>>, vector<2x2048xf32>
      tpu.vector_store %arg7[%c0_63, %c10240_64], %106 {strides = array<i32>} : memref<2x16384xf32, #tpu.memory_space<vmem>>, vector<2x2048xf32>,
      %c0_65 = arith.constant 0 : index
      %c12288 = arith.constant 12288 : index
      %108 = vector.load %arg7[%c0_65, %c12288] : memref<2x16384xf32, #tpu.memory_space<vmem>>, vector<2x2048xf32>
      %109 = vector.broadcast %27 : vector<2x1xf32> to vector<2x2048xf32>
      %110 = arith.subf %108, %109 : vector<2x2048xf32>
      %111 = vector.broadcast %35 : vector<2x1xf32> to vector<2x2048xf32>
      %112 = arith.mulf %110, %111 : vector<2x2048xf32>
      %c0_66 = arith.constant 0 : index
      %c12288_67 = arith.constant 12288 : index
      %113 = vector.load %arg6[%c0_66, %c12288_67] : memref<2x16384xf32, #tpu.memory_space<vmem>>, vector<1x2048xf32>
      %114 = vector.broadcast %113 : vector<1x2048xf32> to vector<2x2048xf32>
      %115 = arith.mulf %112, %114 : vector<2x2048xf32>
      %c1_68 = arith.constant 1 : index
      %c12288_69 = arith.constant 12288 : index
      %116 = vector.load %arg6[%c1_68, %c12288_69] : memref<2x16384xf32, #tpu.memory_space<vmem>>, vector<1x2048xf32>
      %117 = vector.broadcast %116 : vector<1x2048xf32> to vector<2x2048xf32>
      %118 = arith.addf %115, %117 : vector<2x2048xf32>
      %c0_70 = arith.constant 0 : index
      %c12288_71 = arith.constant 12288 : index
      %119 = vector.load %arg7[%c0_70, %c12288_71] : memref<2x16384xf32, #tpu.memory_space<vmem>>, vector<2x2048xf32>
      tpu.vector_store %arg7[%c0_70, %c12288_71], %118 {strides = array<i32>} : memref<2x16384xf32, #tpu.memory_space<vmem>>, vector<2x2048xf32>,
      %c0_72 = arith.constant 0 : index
      %c14336 = arith.constant 14336 : index
      %120 = vector.load %arg7[%c0_72, %c14336] : memref<2x16384xf32, #tpu.memory_space<vmem>>, vector<2x2048xf32>
      %121 = vector.broadcast %27 : vector<2x1xf32> to vector<2x2048xf32>
      %122 = arith.subf %120, %121 : vector<2x2048xf32>
      %123 = vector.broadcast %35 : vector<2x1xf32> to vector<2x2048xf32>
      %124 = arith.mulf %122, %123 : vector<2x2048xf32>
      %c0_73 = arith.constant 0 : index
      %c14336_74 = arith.constant 14336 : index
      %125 = vector.load %arg6[%c0_73, %c14336_74] : memref<2x16384xf32, #tpu.memory_space<vmem>>, vector<1x2048xf32>
      %126 = vector.broadcast %125 : vector<1x2048xf32> to vector<2x2048xf32>
      %127 = arith.mulf %124, %126 : vector<2x2048xf32>
      %c1_75 = arith.constant 1 : index
      %c14336_76 = arith.constant 14336 : index
      %128 = vector.load %arg6[%c1_75, %c14336_76] : memref<2x16384xf32, #tpu.memory_space<vmem>>, vector<1x2048xf32>
      %129 = vector.broadcast %128 : vector<1x2048xf32> to vector<2x2048xf32>
      %130 = arith.addf %127, %129 : vector<2x2048xf32>
      %c0_77 = arith.constant 0 : index
      %c14336_78 = arith.constant 14336 : index
      %131 = vector.load %arg7[%c0_77, %c14336_78] : memref<2x16384xf32, #tpu.memory_space<vmem>>, vector<2x2048xf32>
      tpu.vector_store %arg7[%c0_77, %c14336_78], %130 {strides = array<i32>} : memref<2x16384xf32, #tpu.memory_space<vmem>>, vector<2x2048xf32>,
    } else {
    }
    return
  }
  func.func @transform_0(%arg0: i32) -> (i32, i32) {
    %c0_i32 = arith.constant 0 : i32
    %c0_i32_0 = arith.constant 0 : i32
    %c0_i32_1 = arith.constant 0 : i32
    return %c0_i32, %c0_i32_0 : i32, i32
  }
  func.func @transform_1(%arg0: i32) -> (i32, i32) {
    %c0_i32 = arith.constant 0 : i32
    %c0_i32_0 = arith.constant 0 : i32
    %c0_i32_1 = arith.constant 0 : i32
    return %c0_i32, %c0_i32_0 : i32, i32
  }
  func.func @transform_2(%arg0: i32) -> (i32, i32) {
    %c0_i32 = arith.constant 0 : i32
    %c0_i32_0 = arith.constant 0 : i32
    %c0_i32_1 = arith.constant 0 : i32
    return %c0_i32, %c0_i32_0 : i32, i32
  }
  func.func @transform_3(%arg0: i32) -> (i32, i32, i32) {
    %c0_i32 = arith.constant 0 : i32
    %c0_i32_0 = arith.constant 0 : i32
    %c0_i32_1 = arith.constant 0 : i32
    %c0_i32_2 = arith.constant 0 : i32
    return %c0_i32, %c0_i32_0, %c0_i32_1 : i32, i32, i32
  }
  func.func @transform_4(%arg0: i32) -> (i32, i32) {
    %c0_i32 = arith.constant 0 : i32
    %c0_i32_0 = arith.constant 0 : i32
    return %c0_i32, %arg0 : i32, i32
  }
  func.func @transform_5(%arg0: i32) -> (i32, i32) {
    %c0_i32 = arith.constant 0 : i32
    %c0_i32_0 = arith.constant 0 : i32
    %c0_i32_1 = arith.constant 0 : i32
    return %c0_i32, %c0_i32_0 : i32, i32
  }
  func.func @transform_6(%arg0: i32) -> (i32, i32) {
    %c0_i32 = arith.constant 0 : i32
    %c0_i32_0 = arith.constant 0 : i32
    %c0_i32_1 = arith.constant 0 : i32
    return %c0_i32, %c0_i32_0 : i32, i32
  }
}

</mosaic_0001>

<llo_original>
// kernel: tpu_custom_call.1
$region0: #{tpu_custom_call.1}
  #allocation0 [shape = 'u32[]', space=smem, size = 0x4, offset = 0x4, fixed_abs, tag = 'smem constant byte address 0x4 - core index']
  #allocation1 [shape = 'u32[144,128]{1,0:T(1,128)}', space=vmem, size = 0x12000, scoped, tag = 'internal scratch']
  #allocation2 [shape = 'f32[2,128]{1,0:T(2,128)}', space=vmem, size = 0x400, scoped, tag = 'scratch operand']
  #allocation3 [shape = 'f32[2,1]{1,0:T(2,128)}', space=vmem, size = 0x400, scoped, tag = 'scratch operand']
  #allocation4 [shape = 'f32[2,1]{1,0:T(2,128)}', space=vmem, size = 0x400, scoped, tag = 'scratch operand']
  %s0 = inlined_call_operand.hbm [shape: f32[2,512], index: 0, kind: input, shape index: {}]
  %s1 = inlined_call_operand.hbm [shape: bf16[512,128], index: 1, kind: input, shape index: {}]
  %s2 = inlined_call_operand.hbm [shape: f32[10,128], index: 2, kind: input, shape index: {}]
  %s3 = inlined_call_operand.hbm [shape: bf16[4,128,128], index: 3, kind: input, shape index: {}]
  %s4 = inlined_call_operand.hbm [shape: bf16[128,16384], index: 4, kind: input, shape index: {}]
  %s5 = inlined_call_operand.hbm [shape: f32[2,16384], index: 5, kind: input, shape index: {}]
  %s6 = inlined_call_operand.hbm [shape: f32[2,16384], index: 6, kind: output, shape index: {}]
  %s7 = sld [smem:[#allocation0]]
  $region89: #{tpu_custom_call.1} parent=0
    _
  %s9 = ssub.s32 1, %s7
  %s10 = scalar_select 0, %s9, %s7
  $region1: #{tpu_custom_call.1} parent=0
    #allocation5 [shape = 'u8[4096]{0}', space=vmem, size = 0x1000, scoped, tag = 'input window, operand 0, single buffered']
    #allocation6 [shape = 's32[2]{0}', space=sflag, size = 0x8, scoped, tag = 'scoped memory for tpu_custom_call.1']
    #allocation7 [shape = 's32[2]{0}', space=sflag, size = 0x8, scoped, tag = 'scoped memory for tpu_custom_call.1']
    #allocation8 [shape = 'u8[131072]{0}', space=vmem, size = 0x20000, scoped, tag = 'input window, operand 1, single buffered']
    #allocation9 [shape = 's32[1]{0}', space=sflag, size = 0x4, scoped, tag = 'scoped memory for tpu_custom_call.1']
    #allocation10 [shape = 'u8[8192]{0}', space=vmem, size = 0x2000, scoped, tag = 'input window, operand 2, single buffered']
    #allocation11 [shape = 'u8[131072]{0}', space=vmem, size = 0x20000, scoped, tag = 'input window, operand 3, single buffered']
    #allocation12 [shape = 's32[1]{0}', space=sflag, size = 0x4, scoped, tag = 'scoped memory for tpu_custom_call.1']
    #allocation13 [shape = 'u8[1048576]{0}', space=vmem, size = 0x100000, scoped, tag = 'input window, operand 4']
    #allocation14 [shape = 'u8[131072]{0}', space=vmem, size = 0x20000, scoped, tag = 'input window, operand 5, single buffered']
    #allocation15 [shape = 'u8[131072]{0}', space=vmem, size = 0x20000, scoped, tag = 'output window, operand 0, single buffered']
    %11 = vsyncpa [#allocation6], 0
    %12 = vsyncpa [#allocation9], 0
    %13 = vsyncpa [#allocation12], 0
    %14 = vsyncpa [#allocation7], 0
    loop: start=0, step=1, limit=10
    $region2: #{tpu_custom_call.1} parent=1 // loop_pre_header
      _
    $region3: #{tpu_custom_call.1} parent=1 // loop_header
      %s16 = sphi 0, %s20
      %p17 = scmp.ge.s32.totalorder %s16, 10
      %s24 = sphi 0, %s24
      %s26 = sphi 0, %s24
      %s27 = sphi 0, %s26
      %s41 = sphi 0, %s27
      %s45 = sphi 0, %s45
      %s47 = sphi 0, %s45
      %s48 = sphi 0, %s47
      %s62 = sphi 0, %s48
      %s66 = sphi 0, %s66
      %s68 = sphi 0, %s66
      %s69 = sphi 0, %s68
      %s83 = sphi 0, %s69
      %s87 = sphi 0, %s87
      %s89 = sphi 0, %s87
      %s90 = sphi 0, %s89
      %s104 = sphi 0, %s90
      %s110 = sphi 0, %s112
      %s113 = sphi 0, %s110
      %s114 = sphi 0, %s113
      %s130 = sphi 0, %s114
      %s134 = sphi 0, %s134
      %s136 = sphi 0, %s134
      %s137 = sphi 0, %s136
      %s151 = sphi 0, %s137
      %s155 = sphi 0, %s155
      %s157 = sphi 0, %s155
      %s158 = sphi 0, %s157
      %s172 = sphi 0, %s158
    $region4: #{tpu_custom_call.1} parent=1 // loop_header_branch
      %19 = sbr.rel (%p17) target = $region8
    $region5: #{tpu_custom_call.1} parent=1 // loop_body
      %s21 = ssub.s32 %s16, 1
      %s22 = ssub.s32 %s16, 2
      %s23 = sadd.s32 %s16, 1
      %s25 = sadd.s32 %s24, 1
      %p28 = scmp.eq.s32.totalorder %s16, 7
      %p29 = scmp.ne.s32.totalorder %s24, %s26
      %p30 = scmp.eq.s32.totalorder %s16, 0
      %p31 = por %p29, %p30
      %p32 = scmp.ne.s32.totalorder %s24, %s26
      %p33 = scmp.eq.s32.totalorder %s21, 7
      %p34 = por %p32, %p33
      %p35 = scmp.ne.s32.totalorder %s26, %s27
      %p36 = scmp.eq.s32.totalorder %s21, 0
      %p37 = por %p35, %p36
      %p38 = scmp.ne.s32.totalorder %s26, %s27
      %p39 = scmp.eq.s32.totalorder %s22, 7
      %p40 = por %p38, %p39
      %p42 = scmp.ne.s32.totalorder %s27, %s41
      %p43 = scmp.eq.s32.totalorder %s22, 0
      %p44 = por %p42, %p43
      %s46 = sadd.s32 %s45, 1
      %p49 = scmp.eq.s32.totalorder %s16, 7
      %p50 = scmp.ne.s32.totalorder %s45, %s47
      %p51 = scmp.eq.s32.totalorder %s16, 0
      %p52 = por %p50, %p51
      %p53 = scmp.ne.s32.totalorder %s45, %s47
      %p54 = scmp.eq.s32.totalorder %s21, 7
      %p55 = por %p53, %p54
      %p56 = scmp.ne.s32.totalorder %s47, %s48
      %p57 = scmp.eq.s32.totalorder %s21, 0
      %p58 = por %p56, %p57
      %p59 = scmp.ne.s32.totalorder %s47, %s48
      %p60 = scmp.eq.s32.totalorder %s22, 7
      %p61 = por %p59, %p60
      %p63 = scmp.ne.s32.totalorder %s48, %s62
      %p64 = scmp.eq.s32.totalorder %s22, 0
      %p65 = por %p63, %p64
      %s67 = sadd.s32 %s66, 1
      %p70 = scmp.eq.s32.totalorder %s16, 7
      %p71 = scmp.ne.s32.totalorder %s66, %s68
      %p72 = scmp.eq.s32.totalorder %s16, 0
      %p73 = por %p71, %p72
      %p74 = scmp.ne.s32.totalorder %s66, %s68
      %p75 = scmp.eq.s32.totalorder %s21, 7
      %p76 = por %p74, %p75
      %p77 = scmp.ne.s32.totalorder %s68, %s69
      %p78 = scmp.eq.s32.totalorder %s21, 0
      %p79 = por %p77, %p78
      %p80 = scmp.ne.s32.totalorder %s68, %s69
      %p81 = scmp.eq.s32.totalorder %s22, 7
      %p82 = por %p80, %p81
      %p84 = scmp.ne.s32.totalorder %s69, %s83
      %p85 = scmp.eq.s32.totalorder %s22, 0
      %p86 = por %p84, %p85
      %s88 = sadd.s32 %s87, 1
      %p91 = scmp.eq.s32.totalorder %s16, 7
      %p92 = scmp.ne.s32.totalorder %s87, %s89
      %p93 = scmp.eq.s32.totalorder %s16, 0
      %p94 = por %p92, %p93
      %p95 = scmp.ne.s32.totalorder %s87, %s89
      %p96 = scmp.eq.s32.totalorder %s21, 7
      %p97 = por %p95, %p96
      %p98 = scmp.ne.s32.totalorder %s89, %s90
      %p99 = scmp.eq.s32.totalorder %s21, 0
      %p100 = por %p98, %p99
      %p101 = scmp.ne.s32.totalorder %s89, %s90
      %p102 = scmp.eq.s32.totalorder %s22, 7
      %p103 = por %p101, %p102
      %p105 = scmp.ne.s32.totalorder %s90, %s104
      %p106 = scmp.eq.s32.totalorder %s22, 0
      %p107 = por %p105, %p106
      %s108 = ssub.s32 %s16, %s23
      %p109 = scmp.eq.s32.totalorder %s108, 0
      %s111 = sadd.s32 %s110, 1
      %s112 = scalar_select %p109, %s110, %s111
      %p115 = pneg %p109
      %p116 = scmp.eq.s32.totalorder %s16, 7
      %p117 = por %p115, %p116
      %p118 = scmp.ne.s32.totalorder %s110, %s113
      %p119 = scmp.eq.s32.totalorder %s16, 0
      %p120 = por %p118, %p119
      %p121 = scmp.ne.s32.totalorder %s110, %s113
      %p122 = scmp.eq.s32.totalorder %s21, 7
      %p123 = por %p121, %p122
      %p124 = scmp.ne.s32.totalorder %s113, %s114
      %p125 = scmp.eq.s32.totalorder %s21, 0
      %p126 = por %p124, %p125
      %p127 = scmp.ne.s32.totalorder %s113, %s114
      %p128 = scmp.eq.s32.totalorder %s22, 7
      %p129 = por %p127, %p128
      %p131 = scmp.ne.s32.totalorder %s114, %s130
      %p132 = scmp.eq.s32.totalorder %s22, 0
      %p133 = por %p131, %p132
      %s135 = sadd.s32 %s134, 1
      %p138 = scmp.eq.s32.totalorder %s16, 7
      %p139 = scmp.ne.s32.totalorder %s134, %s136
      %p140 = scmp.eq.s32.totalorder %s16, 0
      %p141 = por %p139, %p140
      %p142 = scmp.ne.s32.totalorder %s134, %s136
      %p143 = scmp.eq.s32.totalorder %s21, 7
      %p144 = por %p142, %p143
      %p145 = scmp.ne.s32.totalorder %s136, %s137
      %p146 = scmp.eq.s32.totalorder %s21, 0
      %p147 = por %p145, %p146
      %p148 = scmp.ne.s32.totalorder %s136, %s137
      %p149 = scmp.eq.s32.totalorder %s22, 7
      %p150 = por %p148, %p149
      %p152 = scmp.ne.s32.totalorder %s137, %s151
      %p153 = scmp.eq.s32.totalorder %s22, 0
      %p154 = por %p152, %p153
      %s156 = sadd.s32 %s155, 1
      %p159 = scmp.eq.s32.totalorder %s16, 7
      %p160 = scmp.ne.s32.totalorder %s155, %s157
      %p161 = scmp.eq.s32.totalorder %s16, 0
      %p162 = por %p160, %p161
      %p163 = scmp.ne.s32.totalorder %s155, %s157
      %p164 = scmp.eq.s32.totalorder %s21, 7
      %p165 = por %p163, %p164
      %p166 = scmp.ne.s32.totalorder %s157, %s158
      %p167 = scmp.eq.s32.totalorder %s21, 0
      %p168 = por %p166, %p167
      %p169 = scmp.ne.s32.totalorder %s157, %s158
      %p170 = scmp.eq.s32.totalorder %s22, 7
      %p171 = por %p169, %p170
      %p173 = scmp.ne.s32.totalorder %s158, %s172
      %p174 = scmp.eq.s32.totalorder %s22, 0
      %p175 = por %p173, %p174
      %p176 = scmp.le.s32.totalorder 1, %s16
      %p177 = scmp.lt.s32.totalorder %s16, 9
      %p178 = pnand %p176, %p177
      %p179 = pneg %p178
      // Predicated region
      $region9: #{tpu_custom_call.1} parent=5 // pred_check
        _
      $region10: #{tpu_custom_call.1} parent=5 // pred_check_branch
        %181 = sbr.rel (%p178) target = $region12
      $region11: #{tpu_custom_call.1} parent=5 // pred_region
        %s182 = ssub.s32 %s16, 1
        // Predicated region
        $region13: #{tpu_custom_call.1} parent=11 // pred_check
          %p183 = pneg %p37
        $region14: #{tpu_custom_call.1} parent=11 // pred_check_branch
          %185 = sbr.rel (%p183) target = $region16
        $region15: #{tpu_custom_call.1} parent=11 // pred_region
          %s187 = ssub.s32 128, 128
          %188 = vsyncadd [#allocation6], %s187
          %s190 = sshll.u32 [#allocation5], 4
          %s191 = int_to_ptr.vmem [resolvable:$true] %s190
          %193 = dma.hbm_to_vmem [thread:$0]  %s0, 128, %s191, [#allocation6]
        $region16: #{tpu_custom_call.1} parent=11 // pred_fallthru
          _
        // Predicated region
        $region17: #{tpu_custom_call.1} parent=11 // pred_check
          %p194 = pneg %p58
        $region18: #{tpu_custom_call.1} parent=11 // pred_check_branch
          %196 = sbr.rel (%p194) target = $region20
        $region19: #{tpu_custom_call.1} parent=11 // pred_region
          %s198 = ssub.s32 4096, 4096
          %199 = vsyncadd [#allocation9], %s198
          %s200 = sshll.u32 [#allocation8], 4
          %s201 = int_to_ptr.vmem [resolvable:$true] %s200
          %206 = dma.hbm_to_vmem [thread:$0]  %s1, 4096, %s201, [#allocation9], 64, 64, 4
        $region20: #{tpu_custom_call.1} parent=11 // pred_fallthru
          _
        // Predicated region
        $region21: #{tpu_custom_call.1} parent=11 // pred_check
          %p207 = pneg %p79
        $region22: #{tpu_custom_call.1} parent=11 // pred_check_branch
          %209 = sbr.rel (%p207) target = $region24
        $region23: #{tpu_custom_call.1} parent=11 // pred_region
          %s211 = ssub.s32 256, 256
          %212 = vsyncadd [#allocation9], %s211
          %s213 = sshll.u32 [#allocation10], 4
          %s214 = int_to_ptr.vmem [resolvable:$true] %s213
          %219 = dma.hbm_to_vmem [thread:$0]  %s2, 256, %s214, [#allocation9], 128, 128, 8
        $region24: #{tpu_custom_call.1} parent=11 // pred_fallthru
          _
        // Predicated region
        $region25: #{tpu_custom_call.1} parent=11 // pred_check
          %p220 = pneg %p100
        $region26: #{tpu_custom_call.1} parent=11 // pred_check_branch
          %222 = sbr.rel (%p220) target = $region28
        $region27: #{tpu_custom_call.1} parent=11 // pred_region
          %s224 = ssub.s32 4096, 4096
          %225 = vsyncadd [#allocation12], %s224
          %s226 = sshll.u32 [#allocation11], 4
          %s227 = int_to_ptr.vmem [resolvable:$true] %s226
          %232 = dma.hbm_to_vmem [thread:$0]  %s3, 4096, %s227, [#allocation12], 64, 64, 4
        $region28: #{tpu_custom_call.1} parent=11 // pred_fallthru
          _
        // Predicated region
        $region29: #{tpu_custom_call.1} parent=11 // pred_check
          %p233 = pneg %p147
        $region30: #{tpu_custom_call.1} parent=11 // pred_check_branch
          %235 = sbr.rel (%p233) target = $region32
        $region31: #{tpu_custom_call.1} parent=11 // pred_region
          %s237 = ssub.s32 4096, 4096
          %238 = vsyncadd [#allocation9], %s237
          %s240 = sshll.u32 [#allocation14], 4
          %s241 = int_to_ptr.vmem [resolvable:$true] %s240
          %243 = dma.hbm_to_vmem [thread:$0]  %s5, 4096, %s241, [#allocation9]
        $region32: #{tpu_custom_call.1} parent=11 // pred_fallthru
          _
      $region12: #{tpu_custom_call.1} parent=5 // pred_fallthru
        _
      %p244 = scmp.lt.s32.totalorder %s16, 8
      // Predicated region
      $region33: #{tpu_custom_call.1} parent=5 // pred_check
        %p245 = pneg %p244
      $region34: #{tpu_custom_call.1} parent=5 // pred_check_branch
        %247 = sbr.rel (%p245) target = $region36
      $region35: #{tpu_custom_call.1} parent=5 // pred_region
        // Predicated region
        $region37: #{tpu_custom_call.1} parent=35 // pred_check
          %p248 = pneg %p120
        $region38: #{tpu_custom_call.1} parent=35 // pred_check_branch
          %250 = sbr.rel (%p248) target = $region40
        $region39: #{tpu_custom_call.1} parent=35 // pred_region
          %s251 = sand.u32 %s16, 1
          %s252 = scalar_lea.sflag [#allocation6], %s251
          %s253 = sand.u32 %s110, 1
          %s254 = smul.addr %s253, 1024
          %s255 = scalar_lea.vmem [#allocation13], %s254
          %s256 = smul.u32 16, %s16
          %s258 = ssub.s32 16384, 16384
          %259 = vsyncadd %s252, %s258
          %s260 = smul.addr %s256, 64
          %s261 = scalar_lea.hbm %s4, %s260
          %s262 = sshll.u32 %s255, 4
          %s263 = int_to_ptr.vmem [resolvable:$true] %s262
          %268 = dma.hbm_to_vmem [thread:$0]  %s261, 16384, %s263, %s252, 8192, 1024, 64
        $region40: #{tpu_custom_call.1} parent=35 // pred_fallthru
          _
      $region36: #{tpu_custom_call.1} parent=5 // pred_fallthru
        _
      %p269 = scmp.le.s32.totalorder 1, %s16
      %p270 = scmp.lt.s32.totalorder %s16, 9
      %p271 = pnand %p269, %p270
      %p272 = pneg %p271
      // Predicated region
      $region41: #{tpu_custom_call.1} parent=5 // pred_check
        _
      $region42: #{tpu_custom_call.1} parent=5 // pred_check_branch
        %274 = sbr.rel (%p271) target = $region44
      $region43: #{tpu_custom_call.1} parent=5 // pred_region
        %s275 = ssub.s32 %s16, 1
        // Predicated region
        $region45: #{tpu_custom_call.1} parent=43 // pred_check
          %p276 = pneg %p37
        $region46: #{tpu_custom_call.1} parent=43 // pred_check_branch
          %278 = sbr.rel (%p276) target = $region48
        $region47: #{tpu_custom_call.1} parent=43 // pred_region
          %279 = dma.done [#allocation6], 128
        $region48: #{tpu_custom_call.1} parent=43 // pred_fallthru
          _
        // Predicated region
        $region49: #{tpu_custom_call.1} parent=43 // pred_check
          %p280 = pneg %p58
        $region50: #{tpu_custom_call.1} parent=43 // pred_check_branch
          %282 = sbr.rel (%p280) target = $region52
        $region51: #{tpu_custom_call.1} parent=43 // pred_region
          %283 = dma.done [#allocation9], 4096
        $region52: #{tpu_custom_call.1} parent=43 // pred_fallthru
          _
        // Predicated region
        $region53: #{tpu_custom_call.1} parent=43 // pred_check
          %p284 = pneg %p79
        $region54: #{tpu_custom_call.1} parent=43 // pred_check_branch
          %286 = sbr.rel (%p284) target = $region56
        $region55: #{tpu_custom_call.1} parent=43 // pred_region
          %287 = dma.done [#allocation9], 256
        $region56: #{tpu_custom_call.1} parent=43 // pred_fallthru
          _
        // Predicated region
        $region57: #{tpu_custom_call.1} parent=43 // pred_check
          %p288 = pneg %p100
        $region58: #{tpu_custom_call.1} parent=43 // pred_check_branch
          %290 = sbr.rel (%p288) target = $region60
        $region59: #{tpu_custom_call.1} parent=43 // pred_region
          %291 = dma.done [#allocation12], 4096
        $region60: #{tpu_custom_call.1} parent=43 // pred_fallthru
          _
        %s292 = sand.u32 %s21, 1
        %s293 = scalar_lea.sflag [#allocation6], %s292
        %s294 = sand.u32 %s113, 1
        %s295 = smul.addr %s294, 1024
        %s296 = scalar_lea.vmem [#allocation13], %s295
        // Predicated region
        $region61: #{tpu_custom_call.1} parent=43 // pred_check
          %p297 = pneg %p126
        $region62: #{tpu_custom_call.1} parent=43 // pred_check_branch
          %299 = sbr.rel (%p297) target = $region64
        $region63: #{tpu_custom_call.1} parent=43 // pred_region
          %300 = dma.done %s293, 16384
        $region64: #{tpu_custom_call.1} parent=43 // pred_fallthru
          _
        // Predicated region
        $region65: #{tpu_custom_call.1} parent=43 // pred_check
          %p301 = pneg %p147
        $region66: #{tpu_custom_call.1} parent=43 // pred_check_branch
          %303 = sbr.rel (%p301) target = $region68
        $region67: #{tpu_custom_call.1} parent=43 // pred_region
          %304 = dma.done [#allocation9], 4096
        $region68: #{tpu_custom_call.1} parent=43 // pred_fallthru
          _
        %p305 = pneg %p37
        %p306 = pneg %p34
        %p307 = pneg %p58
        %p308 = pneg %p55
        %p309 = pneg %p79
        %p310 = pneg %p76
        %p311 = pneg %p100
        %p312 = pneg %p97
        %s313 = sand.u32 %s21, 1
        %s314 = scalar_lea.sflag [#allocation6], %s313
        %s315 = sand.u32 %s113, 1
        %s316 = smul.addr %s315, 1024
        %s317 = scalar_lea.vmem [#allocation13], %s316
        %p318 = pneg %p126
        %p319 = pneg %p123
        %p320 = pneg %p147
        %p321 = pneg %p144
        %p322 = pneg %p168
        %p323 = pneg %p165
        %s324 = smul.u32 16, %s21
        %p325 = scmp.eq.s32.totalorder %s21, 0
        // Predicated region
        $region69: #{tpu_custom_call.1} parent=43 // pred_check
          %p326 = pneg %p325
        $region70: #{tpu_custom_call.1} parent=43 // pred_check_branch
          %328 = sbr.rel (%p326) target = $region72
        $region71: #{tpu_custom_call.1} parent=43 // pred_region
          %v329 = vld [vmem:[#allocation5] sm:$0xff]
          %v330 = vld [vmem:[#allocation8] sm:$0xf]
          %v331 = vld [vmem:[#allocation8 + $0x4] sm:$0xf]
          %v332 = vld [vmem:[#allocation8 + $0x8] sm:$0xf]
          %v333 = vld [vmem:[#allocation8 + $0xc] sm:$0xf]
          %v334 = vld [vmem:[#allocation8 + $0x10] sm:$0xf]
          %v335 = vld [vmem:[#allocation8 + $0x14] sm:$0xf]
          %v336 = vld [vmem:[#allocation8 + $0x18] sm:$0xf]
          %v337 = vld [vmem:[#allocation8 + $0x1c] sm:$0xf]
          %v338 = vld [vmem:[#allocation8 + $0x20] sm:$0xf]
          %v339 = vld [vmem:[#allocation8 + $0x24] sm:$0xf]
          %v340 = vld [vmem:[#allocation8 + $0x28] sm:$0xf]
          %v341 = vld [vmem:[#allocation8 + $0x2c] sm:$0xf]
          %v342 = vld [vmem:[#allocation8 + $0x30] sm:$0xf]
          %v343 = vld [vmem:[#allocation8 + $0x34] sm:$0xf]
          %v344 = vld [vmem:[#allocation8 + $0x38] sm:$0xf]
          %v345 = vld [vmem:[#allocation8 + $0x3c] sm:$0xf]
          %v346 = vld [vmem:[#allocation8 + $0x40] sm:$0xf]
          %v347 = vld [vmem:[#allocation8 + $0x44] sm:$0xf]
          %v348 = vld [vmem:[#allocation8 + $0x48] sm:$0xf]
          %v349 = vld [vmem:[#allocation8 + $0x4c] sm:$0xf]
          %v350 = vld [vmem:[#allocation8 + $0x50] sm:$0xf]
          %v351 = vld [vmem:[#allocation8 + $0x54] sm:$0xf]
          %v352 = vld [vmem:[#allocation8 + $0x58] sm:$0xf]
          %v353 = vld [vmem:[#allocation8 + $0x5c] sm:$0xf]
          %v354 = vld [vmem:[#allocation8 + $0x60] sm:$0xf]
          %v355 = vld [vmem:[#allocation8 + $0x64] sm:$0xf]
          %v356 = vld [vmem:[#allocation8 + $0x68] sm:$0xf]
          %v357 = vld [vmem:[#allocation8 + $0x6c] sm:$0xf]
          %v358 = vld [vmem:[#allocation8 + $0x70] sm:$0xf]
          %v359 = vld [vmem:[#allocation8 + $0x74] sm:$0xf]
          %v360 = vld [vmem:[#allocation8 + $0x78] sm:$0xf]
          %v361 = vld [vmem:[#allocation8 + $0x7c] sm:$0xf]
          %v362 = vld [vmem:[#allocation8 + $0x80] sm:$0xf]
          %v363 = vld [vmem:[#allocation8 + $0x84] sm:$0xf]
          %v364 = vld [vmem:[#allocation8 + $0x88] sm:$0xf]
          %v365 = vld [vmem:[#allocation8 + $0x8c] sm:$0xf]
          %v366 = vld [vmem:[#allocation8 + $0x90] sm:$0xf]
          %v367 = vld [vmem:[#allocation8 + $0x94] sm:$0xf]
          %v368 = vld [vmem:[#allocation8 + $0x98] sm:$0xf]
          %v369 = vld [vmem:[#allocation8 + $0x9c] sm:$0xf]
          %v370 = vld [vmem:[#allocation8 + $0xa0] sm:$0xf]
          %v371 = vld [vmem:[#allocation8 + $0xa4] sm:$0xf]
          %v372 = vld [vmem:[#allocation8 + $0xa8] sm:$0xf]
          %v373 = vld [vmem:[#allocation8 + $0xac] sm:$0xf]
          %v374 = vld [vmem:[#allocation8 + $0xb0] sm:$0xf]
          %v375 = vld [vmem:[#allocation8 + $0xb4] sm:$0xf]
          %v376 = vld [vmem:[#allocation8 + $0xb8] sm:$0xf]
          %v377 = vld [vmem:[#allocation8 + $0xbc] sm:$0xf]
          %v378 = vld [vmem:[#allocation8 + $0xc0] sm:$0xf]
          %v379 = vld [vmem:[#allocation8 + $0xc4] sm:$0xf]
          %v380 = vld [vmem:[#allocation8 + $0xc8] sm:$0xf]
          %v381 = vld [vmem:[#allocation8 + $0xcc] sm:$0xf]
          %v382 = vld [vmem:[#allocation8 + $0xd0] sm:$0xf]
          %v383 = vld [vmem:[#allocation8 + $0xd4] sm:$0xf]
          %v384 = vld [vmem:[#allocation8 + $0xd8] sm:$0xf]
          %v385 = vld [vmem:[#allocation8 + $0xdc] sm:$0xf]
          %v386 = vld [vmem:[#allocation8 + $0xe0] sm:$0xf]
          %v387 = vld [vmem:[#allocation8 + $0xe4] sm:$0xf]
          %v388 = vld [vmem:[#allocation8 + $0xe8] sm:$0xf]
          %v389 = vld [vmem:[#allocation8 + $0xec] sm:$0xf]
          %v390 = vld [vmem:[#allocation8 + $0xf0] sm:$0xf]
          %v391 = vld [vmem:[#allocation8 + $0xf4] sm:$0xf]
          %v392 = vld [vmem:[#allocation8 + $0xf8] sm:$0xf]
          %v393 = vld [vmem:[#allocation8 + $0xfc] sm:$0xf]
          %v394 = vunpack.c.l.bf16 %v330
          %v395 = vunpack.c.l.bf16 %v331
          %v396 = vunpack.c.l.bf16 %v332
          %v397 = vunpack.c.l.bf16 %v333
          %v398 = vunpack.c.l.bf16 %v334
          %v399 = vunpack.c.l.bf16 %v335
          %v400 = vunpack.c.l.bf16 %v336
          %v401 = vunpack.c.l.bf16 %v337
          %v402 = vunpack.c.l.bf16 %v338
          %v403 = vunpack.c.l.bf16 %v339
          %v404 = vunpack.c.l.bf16 %v340
          %v405 = vunpack.c.l.bf16 %v341
          %v406 = vunpack.c.l.bf16 %v342
          %v407 = vunpack.c.l.bf16 %v343
          %v408 = vunpack.c.l.bf16 %v344
          %v409 = vunpack.c.l.bf16 %v345
          %v410 = vunpack.c.l.bf16 %v346
          %v411 = vunpack.c.l.bf16 %v347
          %v412 = vunpack.c.l.bf16 %v348
          %v413 = vunpack.c.l.bf16 %v349
          %v414 = vunpack.c.l.bf16 %v350
          %v415 = vunpack.c.l.bf16 %v351
          %v416 = vunpack.c.l.bf16 %v352
          %v417 = vunpack.c.l.bf16 %v353
          %v418 = vunpack.c.l.bf16 %v354
          %v419 = vunpack.c.l.bf16 %v355
          %v420 = vunpack.c.l.bf16 %v356
          %v421 = vunpack.c.l.bf16 %v357
          %v422 = vunpack.c.l.bf16 %v358
          %v423 = vunpack.c.l.bf16 %v359
          %v424 = vunpack.c.l.bf16 %v360
          %v425 = vunpack.c.l.bf16 %v361
          %v426 = vunpack.c.l.bf16 %v362
          %v427 = vunpack.c.l.bf16 %v363
          %v428 = vunpack.c.l.bf16 %v364
          %v429 = vunpack.c.l.bf16 %v365
          %v430 = vunpack.c.l.bf16 %v366
          %v431 = vunpack.c.l.bf16 %v367
          %v432 = vunpack.c.l.bf16 %v368
          %v433 = vunpack.c.l.bf16 %v369
          %v434 = vunpack.c.l.bf16 %v370
          %v435 = vunpack.c.l.bf16 %v371
          %v436 = vunpack.c.l.bf16 %v372
          %v437 = vunpack.c.l.bf16 %v373
          %v438 = vunpack.c.l.bf16 %v374
          %v439 = vunpack.c.l.bf16 %v375
          %v440 = vunpack.c.l.bf16 %v376
          %v441 = vunpack.c.l.bf16 %v377
          %v442 = vunpack.c.l.bf16 %v378
          %v443 = vunpack.c.l.bf16 %v379
          %v444 = vunpack.c.l.bf16 %v380
          %v445 = vunpack.c.l.bf16 %v381
          %v446 = vunpack.c.l.bf16 %v382
          %v447 = vunpack.c.l.bf16 %v383
          %v448 = vunpack.c.l.bf16 %v384
          %v449 = vunpack.c.l.bf16 %v385
          %v450 = vunpack.c.l.bf16 %v386
          %v451 = vunpack.c.l.bf16 %v387
          %v452 = vunpack.c.l.bf16 %v388
          %v453 = vunpack.c.l.bf16 %v389
          %v454 = vunpack.c.l.bf16 %v390
          %v455 = vunpack.c.l.bf16 %v391
          %v456 = vunpack.c.l.bf16 %v392
          %v457 = vunpack.c.l.bf16 %v393
          %v459 = vcombine.high %v329, %v329
          %v461 = vunpack.c.l.s4 1983009808
          %v462 = vunpack.c.0.s8 %v461
          %v463 = vlaneseq
          %v464 = vshrl.u32 %v463, 7
          %v465 = vsub.s32 %v462, %v464
          %v466 = vrot.slane %v329, %v465
          %v468 = vunpack.c.l.s4 1983009808
          %v469 = vunpack.c.0.s8 %v468
          %v470 = vlaneseq
          %v471 = vshrl.u32 %v470, 7
          %v472 = vsub.s32 %v469, %v471
          %v473 = vrot.slane %v459, %v472
          %v474 = vcombine.high %v466, %v466
          %v475 = vcombine.high %v473, %v473
          %480 = vmatprep.subr.mxu0 0.0
          %481 = vmatpush1.msra.mxu0 %v409
          %482 = vmatprep.subr.mxu0 0.0
          %483 = vmatpush1.msra.mxu0 %v408
          %484 = vmatprep.subr.mxu0 0.0
          %485 = vmatpush1.msra.mxu0 %v407
          %486 = vmatprep.subr.mxu0 0.0
          %487 = vmatpush1.msra.mxu0 %v406
          %488 = vmatprep.subr.mxu0 0.0
          %489 = vmatpush1.msra.mxu0 %v405
          %490 = vmatprep.subr.mxu0 0.0
          %491 = vmatpush1.msra.mxu0 %v404
          %492 = vmatprep.subr.mxu0 0.0
          %493 = vmatpush1.msra.mxu0 %v403
          %494 = vmatprep.subr.mxu0 0.0
          %495 = vmatpush1.msra.mxu0 %v402
          %496 = vmatprep.subr.mxu0 0.0
          %497 = vmatpush1.msra.mxu0 %v401
          %498 = vmatprep.subr.mxu0 0.0
          %499 = vmatpush1.msra.mxu0 %v400
          %500 = vmatprep.subr.mxu0 0.0
          %501 = vmatpush1.msra.mxu0 %v399
          %502 = vmatprep.subr.mxu0 0.0
          %503 = vmatpush1.msra.mxu0 %v398
          %504 = vmatprep.subr.mxu0 0.0
          %505 = vmatpush1.msra.mxu0 %v397
          %506 = vmatprep.subr.mxu0 0.0
          %507 = vmatpush1.msra.mxu0 %v396
          %508 = vmatprep.subr.mxu0 0.0
          %509 = vmatpush1.msra.mxu0 %v395
          %510 = vmatprep.subr.mxu0 0.0
          %511 = vmatpush1.msra.mxu0 %v394
          %512 = vmatprep.subr.mxu0 0.0
          %513 = vmatpush2.msra.mxu0 %v425
          %514 = vmatprep.subr.mxu0 0.0
          %515 = vmatpush2.msra.mxu0 %v424
          %516 = vmatprep.subr.mxu0 0.0
          %517 = vmatpush2.msra.mxu0 %v423
          %518 = vmatprep.subr.mxu0 0.0
          %519 = vmatpush2.msra.mxu0 %v422
          %520 = vmatprep.subr.mxu0 0.0
          %521 = vmatpush2.msra.mxu0 %v421
          %522 = vmatprep.subr.mxu0 0.0
          %523 = vmatpush2.msra.mxu0 %v420
          %524 = vmatprep.subr.mxu0 0.0
          %525 = vmatpush2.msra.mxu0 %v419
          %526 = vmatprep.subr.mxu0 0.0
          %527 = vmatpush2.msra.mxu0 %v418
          %528 = vmatprep.subr.mxu0 0.0
          %529 = vmatpush2.msra.mxu0 %v417
          %530 = vmatprep.subr.mxu0 0.0
          %531 = vmatpush2.msra.mxu0 %v416
          %532 = vmatprep.subr.mxu0 0.0
          %533 = vmatpush2.msra.mxu0 %v415
          %534 = vmatprep.subr.mxu0 0.0
          %535 = vmatpush2.msra.mxu0 %v414
          %536 = vmatprep.subr.mxu0 0.0
          %537 = vmatpush2.msra.mxu0 %v413
          %538 = vmatprep.subr.mxu0 0.0
          %539 = vmatpush2.msra.mxu0 %v412
          %540 = vmatprep.subr.mxu0 0.0
          %541 = vmatpush2.msra.mxu0 %v411
          %542 = vmatprep.subr.mxu0 0.0
          %543 = vmatpush2.msra.mxu0 %v410
          %544 = vmatprep.mubr.f32.mxu0 %v474
          %545 = vmatmul.mubr.f32.gmra.mxu0 %v466
          %v546 = vpop.f32.mrf.mxu0
          %v547 = vadd.f32 0.0, %v546
          %v548 = vpop.f32.mrf.mxu0
          %549 = vdwg.mxu0
          %550 = vmatprep.subr.mxu0 0.0
          %551 = vmatpush1.msra.mxu0 %v441
          %552 = vmatprep.subr.mxu0 0.0
          %553 = vmatpush1.msra.mxu0 %v440
          %554 = vmatprep.subr.mxu0 0.0
          %555 = vmatpush1.msra.mxu0 %v439
          %556 = vmatprep.subr.mxu0 0.0
          %557 = vmatpush1.msra.mxu0 %v438
          %558 = vmatprep.subr.mxu0 0.0
          %559 = vmatpush1.msra.mxu0 %v437
          %560 = vmatprep.subr.mxu0 0.0
          %561 = vmatpush1.msra.mxu0 %v436
          %562 = vmatprep.subr.mxu0 0.0
          %563 = vmatpush1.msra.mxu0 %v435
          %564 = vmatprep.subr.mxu0 0.0
          %565 = vmatpush1.msra.mxu0 %v434
          %566 = vmatprep.subr.mxu0 0.0
          %567 = vmatpush1.msra.mxu0 %v433
          %568 = vmatprep.subr.mxu0 0.0
          %569 = vmatpush1.msra.mxu0 %v432
          %570 = vmatprep.subr.mxu0 0.0
          %571 = vmatpush1.msra.mxu0 %v431
          %572 = vmatprep.subr.mxu0 0.0
          %573 = vmatpush1.msra.mxu0 %v430
          %574 = vmatprep.subr.mxu0 0.0
          %575 = vmatpush1.msra.mxu0 %v429
          %576 = vmatprep.subr.mxu0 0.0
          %577 = vmatpush1.msra.mxu0 %v428
          %578 = vmatprep.subr.mxu0 0.0
          %579 = vmatpush1.msra.mxu0 %v427
          %580 = vmatprep.subr.mxu0 0.0
          %581 = vmatpush1.msra.mxu0 %v426
          %582 = vmatprep.subr.mxu0 0.0
          %583 = vmatpush2.msra.mxu0 %v457
          %584 = vmatprep.subr.mxu0 0.0
          %585 = vmatpush2.msra.mxu0 %v456
          %586 = vmatprep.subr.mxu0 0.0
          %587 = vmatpush2.msra.mxu0 %v455
          %588 = vmatprep.subr.mxu0 0.0
          %589 = vmatpush2.msra.mxu0 %v454
          %590 = vmatprep.subr.mxu0 0.0
          %591 = vmatpush2.msra.mxu0 %v453
          %592 = vmatprep.subr.mxu0 0.0
          %593 = vmatpush2.msra.mxu0 %v452
          %594 = vmatprep.subr.mxu0 0.0
          %595 = vmatpush2.msra.mxu0 %v451
          %596 = vmatprep.subr.mxu0 0.0
          %597 = vmatpush2.msra.mxu0 %v450
          %598 = vmatprep.subr.mxu0 0.0
          %599 = vmatpush2.msra.mxu0 %v449
          %600 = vmatprep.subr.mxu0 0.0
          %601 = vmatpush2.msra.mxu0 %v448
          %602 = vmatprep.subr.mxu0 0.0
          %603 = vmatpush2.msra.mxu0 %v447
          %604 = vmatprep.subr.mxu0 0.0
          %605 = vmatpush2.msra.mxu0 %v446
          %606 = vmatprep.subr.mxu0 0.0
          %607 = vmatpush2.msra.mxu0 %v445
          %608 = vmatprep.subr.mxu0 0.0
          %609 = vmatpush2.msra.mxu0 %v444
          %610 = vmatprep.subr.mxu0 0.0
          %611 = vmatpush2.msra.mxu0 %v443
          %612 = vmatprep.subr.mxu0 0.0
          %613 = vmatpush2.msra.mxu0 %v442
          %614 = vmatprep.mubr.f32.mxu0 %v475
          %615 = vmatmul.mubr.f32.gmra.mxu0 %v473
          %v616 = vpop.f32.mrf.mxu0
          %v617 = vadd.f32 %v547, %v616
          %v618 = vpop.f32.mrf.mxu0
          %619 = vdwg.mxu0
          %v620 = vld [vmem:[#allocation10] sm:$0x1]
          %v621 = vld [vmem:[#allocation10 + $0x1] sm:$0x1]
          %vm622 = vcmask 1041408
          %v623 = vsel %vm622, %v617, 0.0
          %624 = vadd.xlane.f32.xlu0 %v623
          %v625 = vpop.xlane.xlu0 %624
          %v626 = vrcp.pop 128.0
          %v627 = vmul.f32 %v625, %v626
          %v628 = vsub.f32 %v617, %v627
          %v629 = vmul.f32 %v628, %v628
          %v630 = vsel %vm622, %v629, 0.0
          %631 = vadd.xlane.f32.xlu0 %v630
          %v632 = vpop.xlane.xlu0 %631
          %v633 = vmul.f32 %v632, %v626
          %v634 = vadd.f32 %v633, 1e-05
          %v635 = vrsqrt.pop %v634
          %v636 = vmul.f32 %v628, %v635
          %v637 = vlaneseq
          %v638 = vshrl.u32 %v637, 7
          %v639 = vsub.s32 0, %v638
          %v640 = vrot.slane %v620, %v639
          %v641 = vmul.f32 %v636, %v640
          %v642 = vlaneseq
          %v643 = vshrl.u32 %v642, 7
          %v644 = vsub.s32 0, %v643
          %v645 = vrot.slane %v621, %v644
          %v646 = vadd.f32 %v641, %v645
          %v647 = vsub.f32 0.0, %v646
          %v648 = vmul.f32 %v647, 1.442695
          %v649 = vpow.pop %v648
          %v650 = vadd.f32 %v649, 1.0
          %v651 = vrcp.pop %v650
          %v652 = vmul.f32 %v646, %v651
          %v653 = vld [vmem:[#allocation11] sm:$0xf]
          %v654 = vld [vmem:[#allocation11 + $0x4] sm:$0xf]
          %v655 = vld [vmem:[#allocation11 + $0x8] sm:$0xf]
          %v656 = vld [vmem:[#allocation11 + $0xc] sm:$0xf]
          %v657 = vld [vmem:[#allocation11 + $0x10] sm:$0xf]
          %v658 = vld [vmem:[#allocation11 + $0x14] sm:$0xf]
          %v659 = vld [vmem:[#allocation11 + $0x18] sm:$0xf]
          %v660 = vld [vmem:[#allocation11 + $0x1c] sm:$0xf]
          %v661 = vld [vmem:[#allocation11 + $0x20] sm:$0xf]
          %v662 = vld [vmem:[#allocation11 + $0x24] sm:$0xf]
          %v663 = vld [vmem:[#allocation11 + $0x28] sm:$0xf]
          %v664 = vld [vmem:[#allocation11 + $0x2c] sm:$0xf]
          %v665 = vld [vmem:[#allocation11 + $0x30] sm:$0xf]
          %v666 = vld [vmem:[#allocation11 + $0x34] sm:$0xf]
          %v667 = vld [vmem:[#allocation11 + $0x38] sm:$0xf]
          %v668 = vld [vmem:[#allocation11 + $0x3c] sm:$0xf]
          %v669 = vunpack.c.l.bf16 %v653
          %v670 = vunpack.c.l.bf16 %v654
          %v671 = vunpack.c.l.bf16 %v655
          %v672 = vunpack.c.l.bf16 %v656
          %v673 = vunpack.c.l.bf16 %v657
          %v674 = vunpack.c.l.bf16 %v658
          %v675 = vunpack.c.l.bf16 %v659
          %v676 = vunpack.c.l.bf16 %v660
          %v677 = vunpack.c.l.bf16 %v661
          %v678 = vunpack.c.l.bf16 %v662
          %v679 = vunpack.c.l.bf16 %v663
          %v680 = vunpack.c.l.bf16 %v664
          %v681 = vunpack.c.l.bf16 %v665
          %v682 = vunpack.c.l.bf16 %v666
          %v683 = vunpack.c.l.bf16 %v667
          %v684 = vunpack.c.l.bf16 %v668
          %685 = vmatprep.subr.mxu0 0.0
          %686 = vmatpush1.msra.mxu0 %v684
          %687 = vmatprep.subr.mxu0 0.0
          %688 = vmatpush1.msra.mxu0 %v683
          %689 = vmatprep.subr.mxu0 0.0
          %690 = vmatpush1.msra.mxu0 %v682
          %691 = vmatprep.subr.mxu0 0.0
          %692 = vmatpush1.msra.mxu0 %v681
          %693 = vmatprep.subr.mxu0 0.0
          %694 = vmatpush1.msra.mxu0 %v680
          %695 = vmatprep.subr.mxu0 0.0
          %696 = vmatpush1.msra.mxu0 %v679
          %697 = vmatprep.subr.mxu0 0.0
          %698 = vmatpush1.msra.mxu0 %v678
          %699 = vmatprep.subr.mxu0 0.0
          %700 = vmatpush1.msra.mxu0 %v677
          %701 = vmatprep.subr.mxu0 0.0
          %702 = vmatpush1.msra.mxu0 %v676
          %703 = vmatprep.subr.mxu0 0.0
          %704 = vmatpush1.msra.mxu0 %v675
          %705 = vmatprep.subr.mxu0 0.0
          %706 = vmatpush1.msra.mxu0 %v674
          %707 = vmatprep.subr.mxu0 0.0
          %708 = vmatpush1.msra.mxu0 %v673
          %709 = vmatprep.subr.mxu0 0.0
          %710 = vmatpush1.msra.mxu0 %v672
          %711 = vmatprep.subr.mxu0 0.0
          %712 = vmatpush1.msra.mxu0 %v671
          %713 = vmatprep.subr.mxu0 0.0
          %714 = vmatpush1.msra.mxu0 %v670
          %715 = vmatprep.subr.mxu0 0.0
          %716 = vmatpush1.msra.mxu0 %v669
          %717 = vmatprep.subr.mxu0 0.0
          %718 = vmatpush2.msra.mxu0 0.0
          %719 = vmatprep.subr.mxu0 0.0
          %720 = vmatpush2.msra.mxu0 0.0
          %721 = vmatprep.subr.mxu0 0.0
          %722 = vmatpush2.msra.mxu0 0.0
          %723 = vmatprep.subr.mxu0 0.0
          %724 = vmatpush2.msra.mxu0 0.0
          %725 = vmatprep.subr.mxu0 0.0
          %726 = vmatpush2.msra.mxu0 0.0
          %727 = vmatprep.subr.mxu0 0.0
          %728 = vmatpush2.msra.mxu0 0.0
          %729 = vmatprep.subr.mxu0 0.0
          %730 = vmatpush2.msra.mxu0 0.0
          %731 = vmatprep.subr.mxu0 0.0
          %732 = vmatpush2.msra.mxu0 0.0
          %733 = vmatprep.subr.mxu0 0.0
          %734 = vmatpush2.msra.mxu0 0.0
          %735 = vmatprep.subr.mxu0 0.0
          %736 = vmatpush2.msra.mxu0 0.0
          %737 = vmatprep.subr.mxu0 0.0
          %738 = vmatpush2.msra.mxu0 0.0
          %739 = vmatprep.subr.mxu0 0.0
          %740 = vmatpush2.msra.mxu0 0.0
          %741 = vmatprep.subr.mxu0 0.0
          %742 = vmatpush2.msra.mxu0 0.0
          %743 = vmatprep.subr.mxu0 0.0
          %744 = vmatpush2.msra.mxu0 0.0
          %745 = vmatprep.subr.mxu0 0.0
          %746 = vmatpush2.msra.mxu0 0.0
          %747 = vmatprep.subr.mxu0 0.0
          %748 = vmatpush2.msra.mxu0 0.0
          %749 = vmatprep.mubr.f32.mxu0 0.0
          %750 = vmatmul.mubr.f32.gmra.mxu0 %v652
          %v751 = vpop.f32.mrf.mxu0
          %v752 = vadd.f32 0.0, %v751
          %v753 = vpop.f32.mrf.mxu0
          %754 = vdwg.mxu0
          %v755 = vld [vmem:[#allocation10 + $0x2] sm:$0x1]
          %v756 = vld [vmem:[#allocation10 + $0x3] sm:$0x1]
          %v757 = vsel %vm622, %v752, 0.0
          %758 = vadd.xlane.f32.xlu0 %v757
          %v759 = vpop.xlane.xlu0 %758
          %v760 = vmul.f32 %v759, %v626
          %v761 = vsub.f32 %v752, %v760
          %v762 = vmul.f32 %v761, %v761
          %v763 = vsel %vm622, %v762, 0.0
          %764 = vadd.xlane.f32.xlu0 %v763
          %v765 = vpop.xlane.xlu0 %764
          %v766 = vmul.f32 %v765, %v626
          %v767 = vadd.f32 %v766, 1e-05
          %v768 = vrsqrt.pop %v767
          %v769 = vmul.f32 %v761, %v768
          %v770 = vlaneseq
          %v771 = vshrl.u32 %v770, 7
          %v772 = vsub.s32 0, %v771
          %v773 = vrot.slane %v755, %v772
          %v774 = vmul.f32 %v769, %v773
          %v775 = vlaneseq
          %v776 = vshrl.u32 %v775, 7
          %v777 = vsub.s32 0, %v776
          %v778 = vrot.slane %v756, %v777
          %v779 = vadd.f32 %v774, %v778
          %v780 = vsub.f32 0.0, %v779
          %v781 = vmul.f32 %v780, 1.442695
          %v782 = vpow.pop %v781
          %v783 = vadd.f32 %v782, 1.0
          %v784 = vrcp.pop %v783
          %v785 = vmul.f32 %v779, %v784
          %v786 = vadd.f32 %v785, %v652
          %s787 = scalar_lea.vmem [#allocation11], 64
          %v788 = vld [vmem:[%s787] sm:$0xf]
          %v789 = vld [vmem:[%s787 + $0x4] sm:$0xf]
          %v790 = vld [vmem:[%s787 + $0x8] sm:$0xf]
          %v791 = vld [vmem:[%s787 + $0xc] sm:$0xf]
          %v792 = vld [vmem:[%s787 + $0x10] sm:$0xf]
          %v793 = vld [vmem:[%s787 + $0x14] sm:$0xf]
          %v794 = vld [vmem:[%s787 + $0x18] sm:$0xf]
          %v795 = vld [vmem:[%s787 + $0x1c] sm:$0xf]
          %v796 = vld [vmem:[%s787 + $0x20] sm:$0xf]
          %v797 = vld [vmem:[%s787 + $0x24] sm:$0xf]
          %v798 = vld [vmem:[%s787 + $0x28] sm:$0xf]
          %v799 = vld [vmem:[%s787 + $0x2c] sm:$0xf]
          %v800 = vld [vmem:[%s787 + $0x30] sm:$0xf]
          %v801 = vld [vmem:[%s787 + $0x34] sm:$0xf]
          %v802 = vld [vmem:[%s787 + $0x38] sm:$0xf]
          %v803 = vld [vmem:[%s787 + $0x3c] sm:$0xf]
          %v804 = vunpack.c.l.bf16 %v788
          %v805 = vunpack.c.l.bf16 %v789
          %v806 = vunpack.c.l.bf16 %v790
          %v807 = vunpack.c.l.bf16 %v791
          %v808 = vunpack.c.l.bf16 %v792
          %v809 = vunpack.c.l.bf16 %v793
          %v810 = vunpack.c.l.bf16 %v794
          %v811 = vunpack.c.l.bf16 %v795
          %v812 = vunpack.c.l.bf16 %v796
          %v813 = vunpack.c.l.bf16 %v797
          %v814 = vunpack.c.l.bf16 %v798
          %v815 = vunpack.c.l.bf16 %v799
          %v816 = vunpack.c.l.bf16 %v800
          %v817 = vunpack.c.l.bf16 %v801
          %v818 = vunpack.c.l.bf16 %v802
          %v819 = vunpack.c.l.bf16 %v803
          %820 = vmatprep.subr.mxu0 0.0
          %821 = vmatpush1.msra.mxu0 %v819
          %822 = vmatprep.subr.mxu0 0.0
          %823 = vmatpush1.msra.mxu0 %v818
          %824 = vmatprep.subr.mxu0 0.0
          %825 = vmatpush1.msra.mxu0 %v817
          %826 = vmatprep.subr.mxu0 0.0
          %827 = vmatpush1.msra.mxu0 %v816
          %828 = vmatprep.subr.mxu0 0.0
          %829 = vmatpush1.msra.mxu0 %v815
          %830 = vmatprep.subr.mxu0 0.0
          %831 = vmatpush1.msra.mxu0 %v814
          %832 = vmatprep.subr.mxu0 0.0
          %833 = vmatpush1.msra.mxu0 %v813
          %834 = vmatprep.subr.mxu0 0.0
          %835 = vmatpush1.msra.mxu0 %v812
          %836 = vmatprep.subr.mxu0 0.0
          %837 = vmatpush1.msra.mxu0 %v811
          %838 = vmatprep.subr.mxu0 0.0
          %839 = vmatpush1.msra.mxu0 %v810
          %840 = vmatprep.subr.mxu0 0.0
          %841 = vmatpush1.msra.mxu0 %v809
          %842 = vmatprep.subr.mxu0 0.0
          %843 = vmatpush1.msra.mxu0 %v808
          %844 = vmatprep.subr.mxu0 0.0
          %845 = vmatpush1.msra.mxu0 %v807
          %846 = vmatprep.subr.mxu0 0.0
          %847 = vmatpush1.msra.mxu0 %v806
          %848 = vmatprep.subr.mxu0 0.0
          %849 = vmatpush1.msra.mxu0 %v805
          %850 = vmatprep.subr.mxu0 0.0
          %851 = vmatpush1.msra.mxu0 %v804
          %852 = vmatprep.subr.mxu0 0.0
          %853 = vmatpush2.msra.mxu0 0.0
          %854 = vmatprep.subr.mxu0 0.0
          %855 = vmatpush2.msra.mxu0 0.0
          %856 = vmatprep.subr.mxu0 0.0
          %857 = vmatpush2.msra.mxu0 0.0
          %858 = vmatprep.subr.mxu0 0.0
          %859 = vmatpush2.msra.mxu0 0.0
          %860 = vmatprep.subr.mxu0 0.0
          %861 = vmatpush2.msra.mxu0 0.0
          %862 = vmatprep.subr.mxu0 0.0
          %863 = vmatpush2.msra.mxu0 0.0
          %864 = vmatprep.subr.mxu0 0.0
          %865 = vmatpush2.msra.mxu0 0.0
          %866 = vmatprep.subr.mxu0 0.0
          %867 = vmatpush2.msra.mxu0 0.0
          %868 = vmatprep.subr.mxu0 0.0
          %869 = vmatpush2.msra.mxu0 0.0
          %870 = vmatprep.subr.mxu0 0.0
          %871 = vmatpush2.msra.mxu0 0.0
          %872 = vmatprep.subr.mxu0 0.0
          %873 = vmatpush2.msra.mxu0 0.0
          %874 = vmatprep.subr.mxu0 0.0
          %875 = vmatpush2.msra.mxu0 0.0
          %876 = vmatprep.subr.mxu0 0.0
          %877 = vmatpush2.msra.mxu0 0.0
          %878 = vmatprep.subr.mxu0 0.0
          %879 = vmatpush2.msra.mxu0 0.0
          %880 = vmatprep.subr.mxu0 0.0
          %881 = vmatpush2.msra.mxu0 0.0
          %882 = vmatprep.subr.mxu0 0.0
          %883 = vmatpush2.msra.mxu0 0.0
          %884 = vmatprep.mubr.f32.mxu0 0.0
          %885 = vmatmul.mubr.f32.gmra.mxu0 %v786
          %v886 = vpop.f32.mrf.mxu0
          %v887 = vadd.f32 0.0, %v886
          %v888 = vpop.f32.mrf.mxu0
          %889 = vdwg.mxu0
          %v890 = vld [vmem:[#allocation10 + $0x4] sm:$0x1]
          %v891 = vld [vmem:[#allocation10 + $0x5] sm:$0x1]
          %v892 = vsel %vm622, %v887, 0.0
          %893 = vadd.xlane.f32.xlu0 %v892
          %v894 = vpop.xlane.xlu0 %893
          %v895 = vmul.f32 %v894, %v626
          %v896 = vsub.f32 %v887, %v895
          %v897 = vmul.f32 %v896, %v896
          %v898 = vsel %vm622, %v897, 0.0
          %899 = vadd.xlane.f32.xlu0 %v898
          %v900 = vpop.xlane.xlu0 %899
          %v901 = vmul.f32 %v900, %v626
          %v902 = vadd.f32 %v901, 1e-05
          %v903 = vrsqrt.pop %v902
          %v904 = vmul.f32 %v896, %v903
          %v905 = vlaneseq
          %v906 = vshrl.u32 %v905, 7
          %v907 = vsub.s32 0, %v906
          %v908 = vrot.slane %v890, %v907
          %v909 = vmul.f32 %v904, %v908
          %v910 = vlaneseq
          %v911 = vshrl.u32 %v910, 7
          %v912 = vsub.s32 0, %v911
          %v913 = vrot.slane %v891, %v912
          %v914 = vadd.f32 %v909, %v913
          %v915 = vsub.f32 0.0, %v914
          %v916 = vmul.f32 %v915, 1.442695
          %v917 = vpow.pop %v916
          %v918 = vadd.f32 %v917, 1.0
          %v919 = vrcp.pop %v918
          %v920 = vmul.f32 %v914, %v919
          %v921 = vadd.f32 %v920, %v786
          %s922 = scalar_lea.vmem [#allocation11], 128
          %v923 = vld [vmem:[%s922] sm:$0xf]
          %v924 = vld [vmem:[%s922 + $0x4] sm:$0xf]
          %v925 = vld [vmem:[%s922 + $0x8] sm:$0xf]
          %v926 = vld [vmem:[%s922 + $0xc] sm:$0xf]
          %v927 = vld [vmem:[%s922 + $0x10] sm:$0xf]
          %v928 = vld [vmem:[%s922 + $0x14] sm:$0xf]
          %v929 = vld [vmem:[%s922 + $0x18] sm:$0xf]
          %v930 = vld [vmem:[%s922 + $0x1c] sm:$0xf]
          %v931 = vld [vmem:[%s922 + $0x20] sm:$0xf]
          %v932 = vld [vmem:[%s922 + $0x24] sm:$0xf]
          %v933 = vld [vmem:[%s922 + $0x28] sm:$0xf]
          %v934 = vld [vmem:[%s922 + $0x2c] sm:$0xf]
          %v935 = vld [vmem:[%s922 + $0x30] sm:$0xf]
          %v936 = vld [vmem:[%s922 + $0x34] sm:$0xf]
          %v937 = vld [vmem:[%s922 + $0x38] sm:$0xf]
          %v938 = vld [vmem:[%s922 + $0x3c] sm:$0xf]
          %v939 = vunpack.c.l.bf16 %v923
          %v940 = vunpack.c.l.bf16 %v924
          %v941 = vunpack.c.l.bf16 %v925
          %v942 = vunpack.c.l.bf16 %v926
          %v943 = vunpack.c.l.bf16 %v927
          %v944 = vunpack.c.l.bf16 %v928
          %v945 = vunpack.c.l.bf16 %v929
          %v946 = vunpack.c.l.bf16 %v930
          %v947 = vunpack.c.l.bf16 %v931
          %v948 = vunpack.c.l.bf16 %v932
          %v949 = vunpack.c.l.bf16 %v933
          %v950 = vunpack.c.l.bf16 %v934
          %v951 = vunpack.c.l.bf16 %v935
          %v952 = vunpack.c.l.bf16 %v936
          %v953 = vunpack.c.l.bf16 %v937
          %v954 = vunpack.c.l.bf16 %v938
          %955 = vmatprep.subr.mxu0 0.0
          %956 = vmatpush1.msra.mxu0 %v954
          %957 = vmatprep.subr.mxu0 0.0
          %958 = vmatpush1.msra.mxu0 %v953
          %959 = vmatprep.subr.mxu0 0.0
          %960 = vmatpush1.msra.mxu0 %v952
          %961 = vmatprep.subr.mxu0 0.0
          %962 = vmatpush1.msra.mxu0 %v951
          %963 = vmatprep.subr.mxu0 0.0
          %964 = vmatpush1.msra.mxu0 %v950
          %965 = vmatprep.subr.mxu0 0.0
          %966 = vmatpush1.msra.mxu0 %v949
          %967 = vmatprep.subr.mxu0 0.0
          %968 = vmatpush1.msra.mxu0 %v948
          %969 = vmatprep.subr.mxu0 0.0
          %970 = vmatpush1.msra.mxu0 %v947
          %971 = vmatprep.subr.mxu0 0.0
          %972 = vmatpush1.msra.mxu0 %v946
          %973 = vmatprep.subr.mxu0 0.0
          %974 = vmatpush1.msra.mxu0 %v945
          %975 = vmatprep.subr.mxu0 0.0
          %976 = vmatpush1.msra.mxu0 %v944
          %977 = vmatprep.subr.mxu0 0.0
          %978 = vmatpush1.msra.mxu0 %v943
          %979 = vmatprep.subr.mxu0 0.0
          %980 = vmatpush1.msra.mxu0 %v942
          %981 = vmatprep.subr.mxu0 0.0
          %982 = vmatpush1.msra.mxu0 %v941
          %983 = vmatprep.subr.mxu0 0.0
          %984 = vmatpush1.msra.mxu0 %v940
          %985 = vmatprep.subr.mxu0 0.0
          %986 = vmatpush1.msra.mxu0 %v939
          %987 = vmatprep.subr.mxu0 0.0
          %988 = vmatpush2.msra.mxu0 0.0
          %989 = vmatprep.subr.mxu0 0.0
          %990 = vmatpush2.msra.mxu0 0.0
          %991 = vmatprep.subr.mxu0 0.0
          %992 = vmatpush2.msra.mxu0 0.0
          %993 = vmatprep.subr.mxu0 0.0
          %994 = vmatpush2.msra.mxu0 0.0
          %995 = vmatprep.subr.mxu0 0.0
          %996 = vmatpush2.msra.mxu0 0.0
          %997 = vmatprep.subr.mxu0 0.0
          %998 = vmatpush2.msra.mxu0 0.0
          %999 = vmatprep.subr.mxu0 0.0
          %1000 = vmatpush2.msra.mxu0 0.0
          %1001 = vmatprep.subr.mxu0 0.0
          %1002 = vmatpush2.msra.mxu0 0.0
          %1003 = vmatprep.subr.mxu0 0.0
          %1004 = vmatpush2.msra.mxu0 0.0
          %1005 = vmatprep.subr.mxu0 0.0
          %1006 = vmatpush2.msra.mxu0 0.0
          %1007 = vmatprep.subr.mxu0 0.0
          %1008 = vmatpush2.msra.mxu0 0.0
          %1009 = vmatprep.subr.mxu0 0.0
          %1010 = vmatpush2.msra.mxu0 0.0
          %1011 = vmatprep.subr.mxu0 0.0
          %1012 = vmatpush2.msra.mxu0 0.0
          %1013 = vmatprep.subr.mxu0 0.0
          %1014 = vmatpush2.msra.mxu0 0.0
          %1015 = vmatprep.subr.mxu0 0.0
          %1016 = vmatpush2.msra.mxu0 0.0
          %1017 = vmatprep.subr.mxu0 0.0
          %1018 = vmatpush2.msra.mxu0 0.0
          %1019 = vmatprep.mubr.f32.mxu0 0.0
          %1020 = vmatmul.mubr.f32.gmra.mxu0 %v921
          %v1021 = vpop.f32.mrf.mxu0
          %v1022 = vadd.f32 0.0, %v1021
          %v1023 = vpop.f32.mrf.mxu0
          %1024 = vdwg.mxu0
          %v1025 = vld [vmem:[#allocation10 + $0x6] sm:$0x1]
          %v1026 = vld [vmem:[#allocation10 + $0x7] sm:$0x1]
          %v1027 = vsel %vm622, %v1022, 0.0
          %1028 = vadd.xlane.f32.xlu0 %v1027
          %v1029 = vpop.xlane.xlu0 %1028
          %v1030 = vmul.f32 %v1029, %v626
          %v1031 = vsub.f32 %v1022, %v1030
          %v1032 = vmul.f32 %v1031, %v1031
          %v1033 = vsel %vm622, %v1032, 0.0
          %1034 = vadd.xlane.f32.xlu0 %v1033
          %v1035 = vpop.xlane.xlu0 %1034
          %v1036 = vmul.f32 %v1035, %v626
          %v1037 = vadd.f32 %v1036, 1e-05
          %v1038 = vrsqrt.pop %v1037
          %v1039 = vmul.f32 %v1031, %v1038
          %v1040 = vlaneseq
          %v1041 = vshrl.u32 %v1040, 7
          %v1042 = vsub.s32 0, %v1041
          %v1043 = vrot.slane %v1025, %v1042
          %v1044 = vmul.f32 %v1039, %v1043
          %v1045 = vlaneseq
          %v1046 = vshrl.u32 %v1045, 7
          %v1047 = vsub.s32 0, %v1046
          %v1048 = vrot.slane %v1026, %v1047
          %v1049 = vadd.f32 %v1044, %v1048
          %v1050 = vsub.f32 0.0, %v1049
          %v1051 = vmul.f32 %v1050, 1.442695
          %v1052 = vpow.pop %v1051
          %v1053 = vadd.f32 %v1052, 1.0
          %v1054 = vrcp.pop %v1053
          %v1055 = vmul.f32 %v1049, %v1054
          %v1056 = vadd.f32 %v1055, %v921
          %s1057 = scalar_lea.vmem [#allocation11], 192
          %v1058 = vld [vmem:[%s1057] sm:$0xf]
          %v1059 = vld [vmem:[%s1057 + $0x4] sm:$0xf]
          %v1060 = vld [vmem:[%s1057 + $0x8] sm:$0xf]
          %v1061 = vld [vmem:[%s1057 + $0xc] sm:$0xf]
          %v1062 = vld [vmem:[%s1057 + $0x10] sm:$0xf]
          %v1063 = vld [vmem:[%s1057 + $0x14] sm:$0xf]
          %v1064 = vld [vmem:[%s1057 + $0x18] sm:$0xf]
          %v1065 = vld [vmem:[%s1057 + $0x1c] sm:$0xf]
          %v1066 = vld [vmem:[%s1057 + $0x20] sm:$0xf]
          %v1067 = vld [vmem:[%s1057 + $0x24] sm:$0xf]
          %v1068 = vld [vmem:[%s1057 + $0x28] sm:$0xf]
          %v1069 = vld [vmem:[%s1057 + $0x2c] sm:$0xf]
          %v1070 = vld [vmem:[%s1057 + $0x30] sm:$0xf]
          %v1071 = vld [vmem:[%s1057 + $0x34] sm:$0xf]
          %v1072 = vld [vmem:[%s1057 + $0x38] sm:$0xf]
          %v1073 = vld [vmem:[%s1057 + $0x3c] sm:$0xf]
          %v1074 = vunpack.c.l.bf16 %v1058
          %v1075 = vunpack.c.l.bf16 %v1059
          %v1076 = vunpack.c.l.bf16 %v1060
          %v1077 = vunpack.c.l.bf16 %v1061
          %v1078 = vunpack.c.l.bf16 %v1062
          %v1079 = vunpack.c.l.bf16 %v1063
          %v1080 = vunpack.c.l.bf16 %v1064
          %v1081 = vunpack.c.l.bf16 %v1065
          %v1082 = vunpack.c.l.bf16 %v1066
          %v1083 = vunpack.c.l.bf16 %v1067
          %v1084 = vunpack.c.l.bf16 %v1068
          %v1085 = vunpack.c.l.bf16 %v1069
          %v1086 = vunpack.c.l.bf16 %v1070
          %v1087 = vunpack.c.l.bf16 %v1071
          %v1088 = vunpack.c.l.bf16 %v1072
          %v1089 = vunpack.c.l.bf16 %v1073
          %1090 = vmatprep.subr.mxu0 0.0
          %1091 = vmatpush1.msra.mxu0 %v1089
          %1092 = vmatprep.subr.mxu0 0.0
          %1093 = vmatpush1.msra.mxu0 %v1088
          %1094 = vmatprep.subr.mxu0 0.0
          %1095 = vmatpush1.msra.mxu0 %v1087
          %1096 = vmatprep.subr.mxu0 0.0
          %1097 = vmatpush1.msra.mxu0 %v1086
          %1098 = vmatprep.subr.mxu0 0.0
          %1099 = vmatpush1.msra.mxu0 %v1085
          %1100 = vmatprep.subr.mxu0 0.0
          %1101 = vmatpush1.msra.mxu0 %v1084
          %1102 = vmatprep.subr.mxu0 0.0
          %1103 = vmatpush1.msra.mxu0 %v1083
          %1104 = vmatprep.subr.mxu0 0.0
          %1105 = vmatpush1.msra.mxu0 %v1082
          %1106 = vmatprep.subr.mxu0 0.0
          %1107 = vmatpush1.msra.mxu0 %v1081
          %1108 = vmatprep.subr.mxu0 0.0
          %1109 = vmatpush1.msra.mxu0 %v1080
          %1110 = vmatprep.subr.mxu0 0.0
          %1111 = vmatpush1.msra.mxu0 %v1079
          %1112 = vmatprep.subr.mxu0 0.0
          %1113 = vmatpush1.msra.mxu0 %v1078
          %1114 = vmatprep.subr.mxu0 0.0
          %1115 = vmatpush1.msra.mxu0 %v1077
          %1116 = vmatprep.subr.mxu0 0.0
          %1117 = vmatpush1.msra.mxu0 %v1076
          %1118 = vmatprep.subr.mxu0 0.0
          %1119 = vmatpush1.msra.mxu0 %v1075
          %1120 = vmatprep.subr.mxu0 0.0
          %1121 = vmatpush1.msra.mxu0 %v1074
          %1122 = vmatprep.subr.mxu0 0.0
          %1123 = vmatpush2.msra.mxu0 0.0
          %1124 = vmatprep.subr.mxu0 0.0
          %1125 = vmatpush2.msra.mxu0 0.0
          %1126 = vmatprep.subr.mxu0 0.0
          %1127 = vmatpush2.msra.mxu0 0.0
          %1128 = vmatprep.subr.mxu0 0.0
          %1129 = vmatpush2.msra.mxu0 0.0
          %1130 = vmatprep.subr.mxu0 0.0
          %1131 = vmatpush2.msra.mxu0 0.0
          %1132 = vmatprep.subr.mxu0 0.0
          %1133 = vmatpush2.msra.mxu0 0.0
          %1134 = vmatprep.subr.mxu0 0.0
          %1135 = vmatpush2.msra.mxu0 0.0
          %1136 = vmatprep.subr.mxu0 0.0
          %1137 = vmatpush2.msra.mxu0 0.0
          %1138 = vmatprep.subr.mxu0 0.0
          %1139 = vmatpush2.msra.mxu0 0.0
          %1140 = vmatprep.subr.mxu0 0.0
          %1141 = vmatpush2.msra.mxu0 0.0
          %1142 = vmatprep.subr.mxu0 0.0
          %1143 = vmatpush2.msra.mxu0 0.0
          %1144 = vmatprep.subr.mxu0 0.0
          %1145 = vmatpush2.msra.mxu0 0.0
          %1146 = vmatprep.subr.mxu0 0.0
          %1147 = vmatpush2.msra.mxu0 0.0
          %1148 = vmatprep.subr.mxu0 0.0
          %1149 = vmatpush2.msra.mxu0 0.0
          %1150 = vmatprep.subr.mxu0 0.0
          %1151 = vmatpush2.msra.mxu0 0.0
          %1152 = vmatprep.subr.mxu0 0.0
          %1153 = vmatpush2.msra.mxu0 0.0
          %1154 = vmatprep.mubr.f32.mxu0 0.0
          %1155 = vmatmul.mubr.f32.gmra.mxu0 %v1056
          %v1156 = vpop.f32.mrf.mxu0
          %v1157 = vadd.f32 0.0, %v1156
          %v1158 = vpop.f32.mrf.mxu0
          %1159 = vdwg.mxu0
          %v1160 = vld [vmem:[#allocation10 + $0x8] sm:$0x1]
          %v1161 = vld [vmem:[#allocation10 + $0x9] sm:$0x1]
          %v1162 = vsel %vm622, %v1157, 0.0
          %1163 = vadd.xlane.f32.xlu0 %v1162
          %v1164 = vpop.xlane.xlu0 %1163
          %v1165 = vmul.f32 %v1164, %v626
          %v1166 = vsub.f32 %v1157, %v1165
          %v1167 = vmul.f32 %v1166, %v1166
          %v1168 = vsel %vm622, %v1167, 0.0
          %1169 = vadd.xlane.f32.xlu0 %v1168
          %v1170 = vpop.xlane.xlu0 %1169
          %v1171 = vmul.f32 %v1170, %v626
          %v1172 = vadd.f32 %v1171, 1e-05
          %v1173 = vrsqrt.pop %v1172
          %v1174 = vmul.f32 %v1166, %v1173
          %v1175 = vlaneseq
          %v1176 = vshrl.u32 %v1175, 7
          %v1177 = vsub.s32 0, %v1176
          %v1178 = vrot.slane %v1160, %v1177
          %v1179 = vmul.f32 %v1174, %v1178
          %v1180 = vlaneseq
          %v1181 = vshrl.u32 %v1180, 7
          %v1182 = vsub.s32 0, %v1181
          %v1183 = vrot.slane %v1161, %v1182
          %v1184 = vadd.f32 %v1179, %v1183
          %v1185 = vsub.f32 0.0, %v1184
          %v1186 = vmul.f32 %v1185, 1.442695
          %v1187 = vpow.pop %v1186
          %v1188 = vadd.f32 %v1187, 1.0
          %v1189 = vrcp.pop %v1188
          %v1190 = vmul.f32 %v1184, %v1189
          %v1191 = vadd.f32 %v1190, %v1056
          %1192 = vst [vmem:[#allocation2] sm:$0x3] %v1191
          %vm1193 = vcmask 1024
          %1194 = vst.msk [vmem:[#allocation3] sm:$0x3] %vm1193, 0.0
          %1195 = vst.msk [vmem:[#allocation4] sm:$0x3] %vm1193, 0.0
        $region72: #{tpu_custom_call.1} parent=43 // pred_fallthru
          _
        %v1196 = vld [vmem:[#allocation2] sm:$0x3]
        %v1197 = vld [vmem:[%s296] sm:$0xff]
        %v1198 = vld [vmem:[%s296 + $0x8] sm:$0xff]
        %v1199 = vld [vmem:[%s296 + $0x10] sm:$0xff]
        %v1200 = vld [vmem:[%s296 + $0x18] sm:$0xff]
        %v1201 = vld [vmem:[%s296 + $0x20] sm:$0xff]
        %v1202 = vld [vmem:[%s296 + $0x28] sm:$0xff]
        %v1203 = vld [vmem:[%s296 + $0x30] sm:$0xff]
        %v1204 = vld [vmem:[%s296 + $0x38] sm:$0xff]
        %v1205 = vld [vmem:[%s296 + $0x40] sm:$0xff]
        %v1206 = vld [vmem:[%s296 + $0x48] sm:$0xff]
        %v1207 = vld [vmem:[%s296 + $0x50] sm:$0xff]
        %v1208 = vld [vmem:[%s296 + $0x58] sm:$0xff]
        %v1209 = vld [vmem:[%s296 + $0x60] sm:$0xff]
        %v1210 = vld [vmem:[%s296 + $0x68] sm:$0xff]
        %v1211 = vld [vmem:[%s296 + $0x70] sm:$0xff]
        %v1212 = vld [vmem:[%s296 + $0x78] sm:$0xff]
        %v1213 = vld [vmem:[%s296 + $0x80] sm:$0xff]
        %v1214 = vld [vmem:[%s296 + $0x88] sm:$0xff]
        %v1215 = vld [vmem:[%s296 + $0x90] sm:$0xff]
        %v1216 = vld [vmem:[%s296 + $0x98] sm:$0xff]
        %v1217 = vld [vmem:[%s296 + $0xa0] sm:$0xff]
        %v1218 = vld [vmem:[%s296 + $0xa8] sm:$0xff]
        %v1219 = vld [vmem:[%s296 + $0xb0] sm:$0xff]
        %v1220 = vld [vmem:[%s296 + $0xb8] sm:$0xff]
        %v1221 = vld [vmem:[%s296 + $0xc0] sm:$0xff]
        %v1222 = vld [vmem:[%s296 + $0xc8] sm:$0xff]
        %v1223 = vld [vmem:[%s296 + $0xd0] sm:$0xff]
        %v1224 = vld [vmem:[%s296 + $0xd8] sm:$0xff]
        %v1225 = vld [vmem:[%s296 + $0xe0] sm:$0xff]
        %v1226 = vld [vmem:[%s296 + $0xe8] sm:$0xff]
        %v1227 = vld [vmem:[%s296 + $0xf0] sm:$0xff]
        %v1228 = vld [vmem:[%s296 + $0xf8] sm:$0xff]
        %v1229 = vld [vmem:[%s296 + $0x100] sm:$0xff]
        %v1230 = vld [vmem:[%s296 + $0x108] sm:$0xff]
        %v1231 = vld [vmem:[%s296 + $0x110] sm:$0xff]
        %v1232 = vld [vmem:[%s296 + $0x118] sm:$0xff]
        %v1233 = vld [vmem:[%s296 + $0x120] sm:$0xff]
        %v1234 = vld [vmem:[%s296 + $0x128] sm:$0xff]
        %v1235 = vld [vmem:[%s296 + $0x130] sm:$0xff]
        %v1236 = vld [vmem:[%s296 + $0x138] sm:$0xff]
        %v1237 = vld [vmem:[%s296 + $0x140] sm:$0xff]
        %v1238 = vld [vmem:[%s296 + $0x148] sm:$0xff]
        %v1239 = vld [vmem:[%s296 + $0x150] sm:$0xff]
        %v1240 = vld [vmem:[%s296 + $0x158] sm:$0xff]
        %v1241 = vld [vmem:[%s296 + $0x160] sm:$0xff]
        %v1242 = vld [vmem:[%s296 + $0x168] sm:$0xff]
        %v1243 = vld [vmem:[%s296 + $0x170] sm:$0xff]
        %v1244 = vld [vmem:[%s296 + $0x178] sm:$0xff]
        %v1245 = vld [vmem:[%s296 + $0x180] sm:$0xff]
        %v1246 = vld [vmem:[%s296 + $0x188] sm:$0xff]
        %v1247 = vld [vmem:[%s296 + $0x190] sm:$0xff]
        %v1248 = vld [vmem:[%s296 + $0x198] sm:$0xff]
        %v1249 = vld [vmem:[%s296 + $0x1a0] sm:$0xff]
        %v1250 = vld [vmem:[%s296 + $0x1a8] sm:$0xff]
        %v1251 = vld [vmem:[%s296 + $0x1b0] sm:$0xff]
        %v1252 = vld [vmem:[%s296 + $0x1b8] sm:$0xff]
        %v1253 = vld [vmem:[%s296 + $0x1c0] sm:$0xff]
        %v1254 = vld [vmem:[%s296 + $0x1c8] sm:$0xff]
        %v1255 = vld [vmem:[%s296 + $0x1d0] sm:$0xff]
        %v1256 = vld [vmem:[%s296 + $0x1d8] sm:$0xff]
        %v1257 = vld [vmem:[%s296 + $0x1e0] sm:$0xff]
        %v1258 = vld [vmem:[%s296 + $0x1e8] sm:$0xff]
        %v1259 = vld [vmem:[%s296 + $0x1f0] sm:$0xff]
        %v1260 = vld [vmem:[%s296 + $0x1f8] sm:$0xff]
        %v1261 = vld [vmem:[%s296 + $0x200] sm:$0xff]
        %v1262 = vld [vmem:[%s296 + $0x208] sm:$0xff]
        %v1263 = vld [vmem:[%s296 + $0x210] sm:$0xff]
        %v1264 = vld [vmem:[%s296 + $0x218] sm:$0xff]
        %v1265 = vld [vmem:[%s296 + $0x220] sm:$0xff]
        %v1266 = vld [vmem:[%s296 + $0x228] sm:$0xff]
        %v1267 = vld [vmem:[%s296 + $0x230] sm:$0xff]
        %v1268 = vld [vmem:[%s296 + $0x238] sm:$0xff]
        %v1269 = vld [vmem:[%s296 + $0x240] sm:$0xff]
        %v1270 = vld [vmem:[%s296 + $0x248] sm:$0xff]
        %v1271 = vld [vmem:[%s296 + $0x250] sm:$0xff]
        %v1272 = vld [vmem:[%s296 + $0x258] sm:$0xff]
        %v1273 = vld [vmem:[%s296 + $0x260] sm:$0xff]
        %v1274 = vld [vmem:[%s296 + $0x268] sm:$0xff]
        %v1275 = vld [vmem:[%s296 + $0x270] sm:$0xff]
        %v1276 = vld [vmem:[%s296 + $0x278] sm:$0xff]
        %v1277 = vld [vmem:[%s296 + $0x280] sm:$0xff]
        %v1278 = vld [vmem:[%s296 + $0x288] sm:$0xff]
        %v1279 = vld [vmem:[%s296 + $0x290] sm:$0xff]
        %v1280 = vld [vmem:[%s296 + $0x298] sm:$0xff]
        %v1281 = vld [vmem:[%s296 + $0x2a0] sm:$0xff]
        %v1282 = vld [vmem:[%s296 + $0x2a8] sm:$0xff]
        %v1283 = vld [vmem:[%s296 + $0x2b0] sm:$0xff]
        %v1284 = vld [vmem:[%s296 + $0x2b8] sm:$0xff]
        %v1285 = vld [vmem:[%s296 + $0x2c0] sm:$0xff]
        %v1286 = vld [vmem:[%s296 + $0x2c8] sm:$0xff]
        %v1287 = vld [vmem:[%s296 + $0x2d0] sm:$0xff]
        %v1288 = vld [vmem:[%s296 + $0x2d8] sm:$0xff]
        %v1289 = vld [vmem:[%s296 + $0x2e0] sm:$0xff]
        %v1290 = vld [vmem:[%s296 + $0x2e8] sm:$0xff]
        %v1291 = vld [vmem:[%s296 + $0x2f0] sm:$0xff]
        %v1292 = vld [vmem:[%s296 + $0x2f8] sm:$0xff]
        %v1293 = vld [vmem:[%s296 + $0x300] sm:$0xff]
        %v1294 = vld [vmem:[%s296 + $0x308] sm:$0xff]
        %v1295 = vld [vmem:[%s296 + $0x310] sm:$0xff]
        %v1296 = vld [vmem:[%s296 + $0x318] sm:$0xff]
        %v1297 = vld [vmem:[%s296 + $0x320] sm:$0xff]
        %v1298 = vld [vmem:[%s296 + $0x328] sm:$0xff]
        %v1299 = vld [vmem:[%s296 + $0x330] sm:$0xff]
        %v1300 = vld [vmem:[%s296 + $0x338] sm:$0xff]
        %v1301 = vld [vmem:[%s296 + $0x340] sm:$0xff]
        %v1302 = vld [vmem:[%s296 + $0x348] sm:$0xff]
        %v1303 = vld [vmem:[%s296 + $0x350] sm:$0xff]
        %v1304 = vld [vmem:[%s296 + $0x358] sm:$0xff]
        %v1305 = vld [vmem:[%s296 + $0x360] sm:$0xff]
        %v1306 = vld [vmem:[%s296 + $0x368] sm:$0xff]
        %v1307 = vld [vmem:[%s296 + $0x370] sm:$0xff]
        %v1308 = vld [vmem:[%s296 + $0x378] sm:$0xff]
        %v1309 = vld [vmem:[%s296 + $0x380] sm:$0xff]
        %v1310 = vld [vmem:[%s296 + $0x388] sm:$0xff]
        %v1311 = vld [vmem:[%s296 + $0x390] sm:$0xff]
        %v1312 = vld [vmem:[%s296 + $0x398] sm:$0xff]
        %v1313 = vld [vmem:[%s296 + $0x3a0] sm:$0xff]
        %v1314 = vld [vmem:[%s296 + $0x3a8] sm:$0xff]
        %v1315 = vld [vmem:[%s296 + $0x3b0] sm:$0xff]
        %v1316 = vld [vmem:[%s296 + $0x3b8] sm:$0xff]
        %v1317 = vld [vmem:[%s296 + $0x3c0] sm:$0xff]
        %v1318 = vld [vmem:[%s296 + $0x3c8] sm:$0xff]
        %v1319 = vld [vmem:[%s296 + $0x3d0] sm:$0xff]
        %v1320 = vld [vmem:[%s296 + $0x3d8] sm:$0xff]
        %v1321 = vld [vmem:[%s296 + $0x3e0] sm:$0xff]
        %v1322 = vld [vmem:[%s296 + $0x3e8] sm:$0xff]
        %v1323 = vld [vmem:[%s296 + $0x3f0] sm:$0xff]
        %v1324 = vld [vmem:[%s296 + $0x3f8] sm:$0xff]
        %v1325 = vunpack.c.l.bf16 %v1197
        %v1326 = vunpack.c.h.bf16 %v1197
        %v1327 = vunpack.c.l.bf16 %v1198
        %v1328 = vunpack.c.h.bf16 %v1198
        %v1329 = vunpack.c.l.bf16 %v1199
        %v1330 = vunpack.c.h.bf16 %v1199
        %v1331 = vunpack.c.l.bf16 %v1200
        %v1332 = vunpack.c.h.bf16 %v1200
        %v1333 = vunpack.c.l.bf16 %v1201
        %v1334 = vunpack.c.h.bf16 %v1201
        %v1335 = vunpack.c.l.bf16 %v1202
        %v1336 = vunpack.c.h.bf16 %v1202
        %v1337 = vunpack.c.l.bf16 %v1203
        %v1338 = vunpack.c.h.bf16 %v1203
        %v1339 = vunpack.c.l.bf16 %v1204
        %v1340 = vunpack.c.h.bf16 %v1204
        %v1341 = vunpack.c.l.bf16 %v1205
        %v1342 = vunpack.c.h.bf16 %v1205
        %v1343 = vunpack.c.l.bf16 %v1206
        %v1344 = vunpack.c.h.bf16 %v1206
        %v1345 = vunpack.c.l.bf16 %v1207
        %v1346 = vunpack.c.h.bf16 %v1207
        %v1347 = vunpack.c.l.bf16 %v1208
        %v1348 = vunpack.c.h.bf16 %v1208
        %v1349 = vunpack.c.l.bf16 %v1209
        %v1350 = vunpack.c.h.bf16 %v1209
        %v1351 = vunpack.c.l.bf16 %v1210
        %v1352 = vunpack.c.h.bf16 %v1210
        %v1353 = vunpack.c.l.bf16 %v1211
        %v1354 = vunpack.c.h.bf16 %v1211
        %v1355 = vunpack.c.l.bf16 %v1212
        %v1356 = vunpack.c.h.bf16 %v1212
        %v1357 = vunpack.c.l.bf16 %v1213
        %v1358 = vunpack.c.h.bf16 %v1213
        %v1359 = vunpack.c.l.bf16 %v1214
        %v1360 = vunpack.c.h.bf16 %v1214
        %v1361 = vunpack.c.l.bf16 %v1215
        %v1362 = vunpack.c.h.bf16 %v1215
        %v1363 = vunpack.c.l.bf16 %v1216
        %v1364 = vunpack.c.h.bf16 %v1216
        %v1365 = vunpack.c.l.bf16 %v1217
        %v1366 = vunpack.c.h.bf16 %v1217
        %v1367 = vunpack.c.l.bf16 %v1218
        %v1368 = vunpack.c.h.bf16 %v1218
        %v1369 = vunpack.c.l.bf16 %v1219
        %v1370 = vunpack.c.h.bf16 %v1219
        %v1371 = vunpack.c.l.bf16 %v1220
        %v1372 = vunpack.c.h.bf16 %v1220
        %v1373 = vunpack.c.l.bf16 %v1221
        %v1374 = vunpack.c.h.bf16 %v1221
        %v1375 = vunpack.c.l.bf16 %v1222
        %v1376 = vunpack.c.h.bf16 %v1222
        %v1377 = vunpack.c.l.bf16 %v1223
        %v1378 = vunpack.c.h.bf16 %v1223
        %v1379 = vunpack.c.l.bf16 %v1224
        %v1380 = vunpack.c.h.bf16 %v1224
        %v1381 = vunpack.c.l.bf16 %v1225
        %v1382 = vunpack.c.h.bf16 %v1225
        %v1383 = vunpack.c.l.bf16 %v1226
        %v1384 = vunpack.c.h.bf16 %v1226
        %v1385 = vunpack.c.l.bf16 %v1227
        %v1386 = vunpack.c.h.bf16 %v1227
        %v1387 = vunpack.c.l.bf16 %v1228
        %v1388 = vunpack.c.h.bf16 %v1228
        %v1389 = vunpack.c.l.bf16 %v1229
        %v1390 = vunpack.c.h.bf16 %v1229
        %v1391 = vunpack.c.l.bf16 %v1230
        %v1392 = vunpack.c.h.bf16 %v1230
        %v1393 = vunpack.c.l.bf16 %v1231
        %v1394 = vunpack.c.h.bf16 %v1231
        %v1395 = vunpack.c.l.bf16 %v1232
        %v1396 = vunpack.c.h.bf16 %v1232
        %v1397 = vunpack.c.l.bf16 %v1233
        %v1398 = vunpack.c.h.bf16 %v1233
        %v1399 = vunpack.c.l.bf16 %v1234
        %v1400 = vunpack.c.h.bf16 %v1234
        %v1401 = vunpack.c.l.bf16 %v1235
        %v1402 = vunpack.c.h.bf16 %v1235
        %v1403 = vunpack.c.l.bf16 %v1236
        %v1404 = vunpack.c.h.bf16 %v1236
        %v1405 = vunpack.c.l.bf16 %v1237
        %v1406 = vunpack.c.h.bf16 %v1237
        %v1407 = vunpack.c.l.bf16 %v1238
        %v1408 = vunpack.c.h.bf16 %v1238
        %v1409 = vunpack.c.l.bf16 %v1239
        %v1410 = vunpack.c.h.bf16 %v1239
        %v1411 = vunpack.c.l.bf16 %v1240
        %v1412 = vunpack.c.h.bf16 %v1240
        %v1413 = vunpack.c.l.bf16 %v1241
        %v1414 = vunpack.c.h.bf16 %v1241
        %v1415 = vunpack.c.l.bf16 %v1242
        %v1416 = vunpack.c.h.bf16 %v1242
        %v1417 = vunpack.c.l.bf16 %v1243
        %v1418 = vunpack.c.h.bf16 %v1243
        %v1419 = vunpack.c.l.bf16 %v1244
        %v1420 = vunpack.c.h.bf16 %v1244
        %v1421 = vunpack.c.l.bf16 %v1245
        %v1422 = vunpack.c.h.bf16 %v1245
        %v1423 = vunpack.c.l.bf16 %v1246
        %v1424 = vunpack.c.h.bf16 %v1246
        %v1425 = vunpack.c.l.bf16 %v1247
        %v1426 = vunpack.c.h.bf16 %v1247
        %v1427 = vunpack.c.l.bf16 %v1248
        %v1428 = vunpack.c.h.bf16 %v1248
        %v1429 = vunpack.c.l.bf16 %v1249
        %v1430 = vunpack.c.h.bf16 %v1249
        %v1431 = vunpack.c.l.bf16 %v1250
        %v1432 = vunpack.c.h.bf16 %v1250
        %v1433 = vunpack.c.l.bf16 %v1251
        %v1434 = vunpack.c.h.bf16 %v1251
        %v1435 = vunpack.c.l.bf16 %v1252
        %v1436 = vunpack.c.h.bf16 %v1252
        %v1437 = vunpack.c.l.bf16 %v1253
        %v1438 = vunpack.c.h.bf16 %v1253
        %v1439 = vunpack.c.l.bf16 %v1254
        %v1440 = vunpack.c.h.bf16 %v1254
        %v1441 = vunpack.c.l.bf16 %v1255
        %v1442 = vunpack.c.h.bf16 %v1255
        %v1443 = vunpack.c.l.bf16 %v1256
        %v1444 = vunpack.c.h.bf16 %v1256
        %v1445 = vunpack.c.l.bf16 %v1257
        %v1446 = vunpack.c.h.bf16 %v1257
        %v1447 = vunpack.c.l.bf16 %v1258
        %v1448 = vunpack.c.h.bf16 %v1258
        %v1449 = vunpack.c.l.bf16 %v1259
        %v1450 = vunpack.c.h.bf16 %v1259
        %v1451 = vunpack.c.l.bf16 %v1260
        %v1452 = vunpack.c.h.bf16 %v1260
        %v1453 = vunpack.c.l.bf16 %v1261
        %v1454 = vunpack.c.h.bf16 %v1261
        %v1455 = vunpack.c.l.bf16 %v1262
        %v1456 = vunpack.c.h.bf16 %v1262
        %v1457 = vunpack.c.l.bf16 %v1263
        %v1458 = vunpack.c.h.bf16 %v1263
        %v1459 = vunpack.c.l.bf16 %v1264
        %v1460 = vunpack.c.h.bf16 %v1264
        %v1461 = vunpack.c.l.bf16 %v1265
        %v1462 = vunpack.c.h.bf16 %v1265
        %v1463 = vunpack.c.l.bf16 %v1266
        %v1464 = vunpack.c.h.bf16 %v1266
        %v1465 = vunpack.c.l.bf16 %v1267
        %v1466 = vunpack.c.h.bf16 %v1267
        %v1467 = vunpack.c.l.bf16 %v1268
        %v1468 = vunpack.c.h.bf16 %v1268
        %v1469 = vunpack.c.l.bf16 %v1269
        %v1470 = vunpack.c.h.bf16 %v1269
        %v1471 = vunpack.c.l.bf16 %v1270
        %v1472 = vunpack.c.h.bf16 %v1270
        %v1473 = vunpack.c.l.bf16 %v1271
        %v1474 = vunpack.c.h.bf16 %v1271
        %v1475 = vunpack.c.l.bf16 %v1272
        %v1476 = vunpack.c.h.bf16 %v1272
        %v1477 = vunpack.c.l.bf16 %v1273
        %v1478 = vunpack.c.h.bf16 %v1273
        %v1479 = vunpack.c.l.bf16 %v1274
        %v1480 = vunpack.c.h.bf16 %v1274
        %v1481 = vunpack.c.l.bf16 %v1275
        %v1482 = vunpack.c.h.bf16 %v1275
        %v1483 = vunpack.c.l.bf16 %v1276
        %v1484 = vunpack.c.h.bf16 %v1276
        %v1485 = vunpack.c.l.bf16 %v1277
        %v1486 = vunpack.c.h.bf16 %v1277
        %v1487 = vunpack.c.l.bf16 %v1278
        %v1488 = vunpack.c.h.bf16 %v1278
        %v1489 = vunpack.c.l.bf16 %v1279
        %v1490 = vunpack.c.h.bf16 %v1279
        %v1491 = vunpack.c.l.bf16 %v1280
        %v1492 = vunpack.c.h.bf16 %v1280
        %v1493 = vunpack.c.l.bf16 %v1281
        %v1494 = vunpack.c.h.bf16 %v1281
        %v1495 = vunpack.c.l.bf16 %v1282
        %v1496 = vunpack.c.h.bf16 %v1282
        %v1497 = vunpack.c.l.bf16 %v1283
        %v1498 = vunpack.c.h.bf16 %v1283
        %v1499 = vunpack.c.l.bf16 %v1284
        %v1500 = vunpack.c.h.bf16 %v1284
        %v1501 = vunpack.c.l.bf16 %v1285
        %v1502 = vunpack.c.h.bf16 %v1285
        %v1503 = vunpack.c.l.bf16 %v1286
        %v1504 = vunpack.c.h.bf16 %v1286
        %v1505 = vunpack.c.l.bf16 %v1287
        %v1506 = vunpack.c.h.bf16 %v1287
        %v1507 = vunpack.c.l.bf16 %v1288
        %v1508 = vunpack.c.h.bf16 %v1288
        %v1509 = vunpack.c.l.bf16 %v1289
        %v1510 = vunpack.c.h.bf16 %v1289
        %v1511 = vunpack.c.l.bf16 %v1290
        %v1512 = vunpack.c.h.bf16 %v1290
        %v1513 = vunpack.c.l.bf16 %v1291
        %v1514 = vunpack.c.h.bf16 %v1291
        %v1515 = vunpack.c.l.bf16 %v1292
        %v1516 = vunpack.c.h.bf16 %v1292
        %v1517 = vunpack.c.l.bf16 %v1293
        %v1518 = vunpack.c.h.bf16 %v1293
        %v1519 = vunpack.c.l.bf16 %v1294
        %v1520 = vunpack.c.h.bf16 %v1294
        %v1521 = vunpack.c.l.bf16 %v1295
        %v1522 = vunpack.c.h.bf16 %v1295
        %v1523 = vunpack.c.l.bf16 %v1296
        %v1524 = vunpack.c.h.bf16 %v1296
        %v1525 = vunpack.c.l.bf16 %v1297
        %v1526 = vunpack.c.h.bf16 %v1297
        %v1527 = vunpack.c.l.bf16 %v1298
        %v1528 = vunpack.c.h.bf16 %v1298
        %v1529 = vunpack.c.l.bf16 %v1299
        %v1530 = vunpack.c.h.bf16 %v1299
        %v1531 = vunpack.c.l.bf16 %v1300
        %v1532 = vunpack.c.h.bf16 %v1300
        %v1533 = vunpack.c.l.bf16 %v1301
        %v1534 = vunpack.c.h.bf16 %v1301
        %v1535 = vunpack.c.l.bf16 %v1302
        %v1536 = vunpack.c.h.bf16 %v1302
        %v1537 = vunpack.c.l.bf16 %v1303
        %v1538 = vunpack.c.h.bf16 %v1303
        %v1539 = vunpack.c.l.bf16 %v1304
        %v1540 = vunpack.c.h.bf16 %v1304
        %v1541 = vunpack.c.l.bf16 %v1305
        %v1542 = vunpack.c.h.bf16 %v1305
        %v1543 = vunpack.c.l.bf16 %v1306
        %v1544 = vunpack.c.h.bf16 %v1306
        %v1545 = vunpack.c.l.bf16 %v1307
        %v1546 = vunpack.c.h.bf16 %v1307
        %v1547 = vunpack.c.l.bf16 %v1308
        %v1548 = vunpack.c.h.bf16 %v1308
        %v1549 = vunpack.c.l.bf16 %v1309
        %v1550 = vunpack.c.h.bf16 %v1309
        %v1551 = vunpack.c.l.bf16 %v1310
        %v1552 = vunpack.c.h.bf16 %v1310
        %v1553 = vunpack.c.l.bf16 %v1311
        %v1554 = vunpack.c.h.bf16 %v1311
        %v1555 = vunpack.c.l.bf16 %v1312
        %v1556 = vunpack.c.h.bf16 %v1312
        %v1557 = vunpack.c.l.bf16 %v1313
        %v1558 = vunpack.c.h.bf16 %v1313
        %v1559 = vunpack.c.l.bf16 %v1314
        %v1560 = vunpack.c.h.bf16 %v1314
        %v1561 = vunpack.c.l.bf16 %v1315
        %v1562 = vunpack.c.h.bf16 %v1315
        %v1563 = vunpack.c.l.bf16 %v1316
        %v1564 = vunpack.c.h.bf16 %v1316
        %v1565 = vunpack.c.l.bf16 %v1317
        %v1566 = vunpack.c.h.bf16 %v1317
        %v1567 = vunpack.c.l.bf16 %v1318
        %v1568 = vunpack.c.h.bf16 %v1318
        %v1569 = vunpack.c.l.bf16 %v1319
        %v1570 = vunpack.c.h.bf16 %v1319
        %v1571 = vunpack.c.l.bf16 %v1320
        %v1572 = vunpack.c.h.bf16 %v1320
        %v1573 = vunpack.c.l.bf16 %v1321
        %v1574 = vunpack.c.h.bf16 %v1321
        %v1575 = vunpack.c.l.bf16 %v1322
        %v1576 = vunpack.c.h.bf16 %v1322
        %v1577 = vunpack.c.l.bf16 %v1323
        %v1578 = vunpack.c.h.bf16 %v1323
        %v1579 = vunpack.c.l.bf16 %v1324
        %v1580 = vunpack.c.h.bf16 %v1324
        %1581 = vmatprep.subr.mxu0 %v1566
        %1582 = vmatpush1.msra.mxu0 %v1565
        %1583 = vmatprep.subr.mxu0 %v1550
        %1584 = vmatpush1.msra.mxu0 %v1549
        %1585 = vmatprep.subr.mxu0 %v1534
        %1586 = vmatpush1.msra.mxu0 %v1533
        %1587 = vmatprep.subr.mxu0 %v1518
        %1588 = vmatpush1.msra.mxu0 %v1517
        %1589 = vmatprep.subr.mxu0 %v1502
        %1590 = vmatpush1.msra.mxu0 %v1501
        %1591 = vmatprep.subr.mxu0 %v1486
        %1592 = vmatpush1.msra.mxu0 %v1485
        %1593 = vmatprep.subr.mxu0 %v1470
        %1594 = vmatpush1.msra.mxu0 %v1469
        %1595 = vmatprep.subr.mxu0 %v1454
        %1596 = vmatpush1.msra.mxu0 %v1453
        %1597 = vmatprep.subr.mxu0 %v1438
        %1598 = vmatpush1.msra.mxu0 %v1437
        %1599 = vmatprep.subr.mxu0 %v1422
        %1600 = vmatpush1.msra.mxu0 %v1421
        %1601 = vmatprep.subr.mxu0 %v1406
        %1602 = vmatpush1.msra.mxu0 %v1405
        %1603 = vmatprep.subr.mxu0 %v1390
        %1604 = vmatpush1.msra.mxu0 %v1389
        %1605 = vmatprep.subr.mxu0 %v1374
        %1606 = vmatpush1.msra.mxu0 %v1373
        %1607 = vmatprep.subr.mxu0 %v1358
        %1608 = vmatpush1.msra.mxu0 %v1357
        %1609 = vmatprep.subr.mxu0 %v1342
        %1610 = vmatpush1.msra.mxu0 %v1341
        %1611 = vmatprep.subr.mxu0 %v1326
        %1612 = vmatpush1.msra.mxu0 %v1325
        %1613 = vmatprep.subr.mxu0 0.0
        %1614 = vmatpush2.msra.mxu0 0.0
        %1615 = vmatprep.subr.mxu0 0.0
        %1616 = vmatpush2.msra.mxu0 0.0
        %1617 = vmatprep.subr.mxu0 0.0
        %1618 = vmatpush2.msra.mxu0 0.0
        %1619 = vmatprep.subr.mxu0 0.0
        %1620 = vmatpush2.msra.mxu0 0.0
        %1621 = vmatprep.subr.mxu0 0.0
        %1622 = vmatpush2.msra.mxu0 0.0
        %1623 = vmatprep.subr.mxu0 0.0
        %1624 = vmatpush2.msra.mxu0 0.0
        %1625 = vmatprep.subr.mxu0 0.0
        %1626 = vmatpush2.msra.mxu0 0.0
        %1627 = vmatprep.subr.mxu0 0.0
        %1628 = vmatpush2.msra.mxu0 0.0
        %1629 = vmatprep.subr.mxu0 0.0
        %1630 = vmatpush2.msra.mxu0 0.0
        %1631 = vmatprep.subr.mxu0 0.0
        %1632 = vmatpush2.msra.mxu0 0.0
        %1633 = vmatprep.subr.mxu0 0.0
        %1634 = vmatpush2.msra.mxu0 0.0
        %1635 = vmatprep.subr.mxu0 0.0
        %1636 = vmatpush2.msra.mxu0 0.0
        %1637 = vmatprep.subr.mxu0 0.0
        %1638 = vmatpush2.msra.mxu0 0.0
        %1639 = vmatprep.subr.mxu0 0.0
        %1640 = vmatpush2.msra.mxu0 0.0
        %1641 = vmatprep.subr.mxu0 0.0
        %1642 = vmatpush2.msra.mxu0 0.0
        %1643 = vmatprep.subr.mxu0 0.0
        %1644 = vmatpush2.msra.mxu0 0.0
        %1645 = vmatprep.mubr.f32.mxu0 0.0
        %1646 = vmatmul.mubr.f32.gmra.mxu0 %v1196
        %v1647 = vpop.f32.mrf.mxu0
        %v1648 = vadd.f32 0.0, %v1647
        %v1649 = vpop.f32.mrf.mxu0
        %v1650 = vadd.f32 0.0, %v1649
        %1651 = vdwg.mxu0
        %1652 = vmatprep.subr.mxu0 %v1568
        %1653 = vmatpush1.msra.mxu0 %v1567
        %1654 = vmatprep.subr.mxu0 %v1552
        %1655 = vmatpush1.msra.mxu0 %v1551
        %1656 = vmatprep.subr.mxu0 %v1536
        %1657 = vmatpush1.msra.mxu0 %v1535
        %1658 = vmatprep.subr.mxu0 %v1520
        %1659 = vmatpush1.msra.mxu0 %v1519
        %1660 = vmatprep.subr.mxu0 %v1504
        %1661 = vmatpush1.msra.mxu0 %v1503
        %1662 = vmatprep.subr.mxu0 %v1488
        %1663 = vmatpush1.msra.mxu0 %v1487
        %1664 = vmatprep.subr.mxu0 %v1472
        %1665 = vmatpush1.msra.mxu0 %v1471
        %1666 = vmatprep.subr.mxu0 %v1456
        %1667 = vmatpush1.msra.mxu0 %v1455
        %1668 = vmatprep.subr.mxu0 %v1440
        %1669 = vmatpush1.msra.mxu0 %v1439
        %1670 = vmatprep.subr.mxu0 %v1424
        %1671 = vmatpush1.msra.mxu0 %v1423
        %1672 = vmatprep.subr.mxu0 %v1408
        %1673 = vmatpush1.msra.mxu0 %v1407
        %1674 = vmatprep.subr.mxu0 %v1392
        %1675 = vmatpush1.msra.mxu0 %v1391
        %1676 = vmatprep.subr.mxu0 %v1376
        %1677 = vmatpush1.msra.mxu0 %v1375
        %1678 = vmatprep.subr.mxu0 %v1360
        %1679 = vmatpush1.msra.mxu0 %v1359
        %1680 = vmatprep.subr.mxu0 %v1344
        %1681 = vmatpush1.msra.mxu0 %v1343
        %1682 = vmatprep.subr.mxu0 %v1328
        %1683 = vmatpush1.msra.mxu0 %v1327
        %1684 = vmatprep.subr.mxu0 0.0
        %1685 = vmatpush2.msra.mxu0 0.0
        %1686 = vmatprep.subr.mxu0 0.0
        %1687 = vmatpush2.msra.mxu0 0.0
        %1688 = vmatprep.subr.mxu0 0.0
        %1689 = vmatpush2.msra.mxu0 0.0
        %1690 = vmatprep.subr.mxu0 0.0
        %1691 = vmatpush2.msra.mxu0 0.0
        %1692 = vmatprep.subr.mxu0 0.0
        %1693 = vmatpush2.msra.mxu0 0.0
        %1694 = vmatprep.subr.mxu0 0.0
        %1695 = vmatpush2.msra.mxu0 0.0
        %1696 = vmatprep.subr.mxu0 0.0
        %1697 = vmatpush2.msra.mxu0 0.0
        %1698 = vmatprep.subr.mxu0 0.0
        %1699 = vmatpush2.msra.mxu0 0.0
        %1700 = vmatprep.subr.mxu0 0.0
        %1701 = vmatpush2.msra.mxu0 0.0
        %1702 = vmatprep.subr.mxu0 0.0
        %1703 = vmatpush2.msra.mxu0 0.0
        %1704 = vmatprep.subr.mxu0 0.0
        %1705 = vmatpush2.msra.mxu0 0.0
        %1706 = vmatprep.subr.mxu0 0.0
        %1707 = vmatpush2.msra.mxu0 0.0
        %1708 = vmatprep.subr.mxu0 0.0
        %1709 = vmatpush2.msra.mxu0 0.0
        %1710 = vmatprep.subr.mxu0 0.0
        %1711 = vmatpush2.msra.mxu0 0.0
        %1712 = vmatprep.subr.mxu0 0.0
        %1713 = vmatpush2.msra.mxu0 0.0
        %1714 = vmatprep.subr.mxu0 0.0
        %1715 = vmatpush2.msra.mxu0 0.0
        %1716 = vmatprep.mubr.f32.mxu0 0.0
        %1717 = vmatmul.mubr.f32.gmra.mxu0 %v1196
        %v1718 = vpop.f32.mrf.mxu0
        %v1719 = vadd.f32 0.0, %v1718
        %v1720 = vpop.f32.mrf.mxu0
        %v1721 = vadd.f32 0.0, %v1720
        %1722 = vdwg.mxu0
        %1723 = vmatprep.subr.mxu0 %v1570
        %1724 = vmatpush1.msra.mxu0 %v1569
        %1725 = vmatprep.subr.mxu0 %v1554
        %1726 = vmatpush1.msra.mxu0 %v1553
        %1727 = vmatprep.subr.mxu0 %v1538
        %1728 = vmatpush1.msra.mxu0 %v1537
        %1729 = vmatprep.subr.mxu0 %v1522
        %1730 = vmatpush1.msra.mxu0 %v1521
        %1731 = vmatprep.subr.mxu0 %v1506
        %1732 = vmatpush1.msra.mxu0 %v1505
        %1733 = vmatprep.subr.mxu0 %v1490
        %1734 = vmatpush1.msra.mxu0 %v1489
        %1735 = vmatprep.subr.mxu0 %v1474
        %1736 = vmatpush1.msra.mxu0 %v1473
        %1737 = vmatprep.subr.mxu0 %v1458
        %1738 = vmatpush1.msra.mxu0 %v1457
        %1739 = vmatprep.subr.mxu0 %v1442
        %1740 = vmatpush1.msra.mxu0 %v1441
        %1741 = vmatprep.subr.mxu0 %v1426
        %1742 = vmatpush1.msra.mxu0 %v1425
        %1743 = vmatprep.subr.mxu0 %v1410
        %1744 = vmatpush1.msra.mxu0 %v1409
        %1745 = vmatprep.subr.mxu0 %v1394
        %1746 = vmatpush1.msra.mxu0 %v1393
        %1747 = vmatprep.subr.mxu0 %v1378
        %1748 = vmatpush1.msra.mxu0 %v1377
        %1749 = vmatprep.subr.mxu0 %v1362
        %1750 = vmatpush1.msra.mxu0 %v1361
        %1751 = vmatprep.subr.mxu0 %v1346
        %1752 = vmatpush1.msra.mxu0 %v1345
        %1753 = vmatprep.subr.mxu0 %v1330
        %1754 = vmatpush1.msra.mxu0 %v1329
        %1755 = vmatprep.subr.mxu0 0.0
        %1756 = vmatpush2.msra.mxu0 0.0
        %1757 = vmatprep.subr.mxu0 0.0
        %1758 = vmatpush2.msra.mxu0 0.0
        %1759 = vmatprep.subr.mxu0 0.0
        %1760 = vmatpush2.msra.mxu0 0.0
        %1761 = vmatprep.subr.mxu0 0.0
        %1762 = vmatpush2.msra.mxu0 0.0
        %1763 = vmatprep.subr.mxu0 0.0
        %1764 = vmatpush2.msra.mxu0 0.0
        %1765 = vmatprep.subr.mxu0 0.0
        %1766 = vmatpush2.msra.mxu0 0.0
        %1767 = vmatprep.subr.mxu0 0.0
        %1768 = vmatpush2.msra.mxu0 0.0
        %1769 = vmatprep.subr.mxu0 0.0
        %1770 = vmatpush2.msra.mxu0 0.0
        %1771 = vmatprep.subr.mxu0 0.0
        %1772 = vmatpush2.msra.mxu0 0.0
        %1773 = vmatprep.subr.mxu0 0.0
        %1774 = vmatpush2.msra.mxu0 0.0
        %1775 = vmatprep.subr.mxu0 0.0
        %1776 = vmatpush2.msra.mxu0 0.0
        %1777 = vmatprep.subr.mxu0 0.0
        %1778 = vmatpush2.msra.mxu0 0.0
        %1779 = vmatprep.subr.mxu0 0.0
        %1780 = vmatpush2.msra.mxu0 0.0
        %1781 = vmatprep.subr.mxu0 0.0
        %1782 = vmatpush2.msra.mxu0 0.0
        %1783 = vmatprep.subr.mxu0 0.0
        %1784 = vmatpush2.msra.mxu0 0.0
        %1785 = vmatprep.subr.mxu0 0.0
        %1786 = vmatpush2.msra.mxu0 0.0
        %1787 = vmatprep.mubr.f32.mxu0 0.0
        %1788 = vmatmul.mubr.f32.gmra.mxu0 %v1196
        %v1789 = vpop.f32.mrf.mxu0
        %v1790 = vadd.f32 0.0, %v1789
        %v1791 = vpop.f32.mrf.mxu0
        %v1792 = vadd.f32 0.0, %v1791
        %1793 = vdwg.mxu0
        %1794 = vmatprep.subr.mxu0 %v1572
        %1795 = vmatpush1.msra.mxu0 %v1571
        %1796 = vmatprep.subr.mxu0 %v1556
        %1797 = vmatpush1.msra.mxu0 %v1555
        %1798 = vmatprep.subr.mxu0 %v1540
        %1799 = vmatpush1.msra.mxu0 %v1539
        %1800 = vmatprep.subr.mxu0 %v1524
        %1801 = vmatpush1.msra.mxu0 %v1523
        %1802 = vmatprep.subr.mxu0 %v1508
        %1803 = vmatpush1.msra.mxu0 %v1507
        %1804 = vmatprep.subr.mxu0 %v1492
        %1805 = vmatpush1.msra.mxu0 %v1491
        %1806 = vmatprep.subr.mxu0 %v1476
        %1807 = vmatpush1.msra.mxu0 %v1475
        %1808 = vmatprep.subr.mxu0 %v1460
        %1809 = vmatpush1.msra.mxu0 %v1459
        %1810 = vmatprep.subr.mxu0 %v1444
        %1811 = vmatpush1.msra.mxu0 %v1443
        %1812 = vmatprep.subr.mxu0 %v1428
        %1813 = vmatpush1.msra.mxu0 %v1427
        %1814 = vmatprep.subr.mxu0 %v1412
        %1815 = vmatpush1.msra.mxu0 %v1411
        %1816 = vmatprep.subr.mxu0 %v1396
        %1817 = vmatpush1.msra.mxu0 %v1395
        %1818 = vmatprep.subr.mxu0 %v1380
        %1819 = vmatpush1.msra.mxu0 %v1379
        %1820 = vmatprep.subr.mxu0 %v1364
        %1821 = vmatpush1.msra.mxu0 %v1363
        %1822 = vmatprep.subr.mxu0 %v1348
        %1823 = vmatpush1.msra.mxu0 %v1347
        %1824 = vmatprep.subr.mxu0 %v1332
        %1825 = vmatpush1.msra.mxu0 %v1331
        %1826 = vmatprep.subr.mxu0 0.0
        %1827 = vmatpush2.msra.mxu0 0.0
        %1828 = vmatprep.subr.mxu0 0.0
        %1829 = vmatpush2.msra.mxu0 0.0
        %1830 = vmatprep.subr.mxu0 0.0
        %1831 = vmatpush2.msra.mxu0 0.0
        %1832 = vmatprep.subr.mxu0 0.0
        %1833 = vmatpush2.msra.mxu0 0.0
        %1834 = vmatprep.subr.mxu0 0.0
        %1835 = vmatpush2.msra.mxu0 0.0
        %1836 = vmatprep.subr.mxu0 0.0
        %1837 = vmatpush2.msra.mxu0 0.0
        %1838 = vmatprep.subr.mxu0 0.0
        %1839 = vmatpush2.msra.mxu0 0.0
        %1840 = vmatprep.subr.mxu0 0.0
        %1841 = vmatpush2.msra.mxu0 0.0
        %1842 = vmatprep.subr.mxu0 0.0
        %1843 = vmatpush2.msra.mxu0 0.0
        %1844 = vmatprep.subr.mxu0 0.0
        %1845 = vmatpush2.msra.mxu0 0.0
        %1846 = vmatprep.subr.mxu0 0.0
        %1847 = vmatpush2.msra.mxu0 0.0
        %1848 = vmatprep.subr.mxu0 0.0
        %1849 = vmatpush2.msra.mxu0 0.0
        %1850 = vmatprep.subr.mxu0 0.0
        %1851 = vmatpush2.msra.mxu0 0.0
        %1852 = vmatprep.subr.mxu0 0.0
        %1853 = vmatpush2.msra.mxu0 0.0
        %1854 = vmatprep.subr.mxu0 0.0
        %1855 = vmatpush2.msra.mxu0 0.0
        %1856 = vmatprep.subr.mxu0 0.0
        %1857 = vmatpush2.msra.mxu0 0.0
        %1858 = vmatprep.mubr.f32.mxu0 0.0
        %1859 = vmatmul.mubr.f32.gmra.mxu0 %v1196
        %v1860 = vpop.f32.mrf.mxu0
        %v1861 = vadd.f32 0.0, %v1860
        %v1862 = vpop.f32.mrf.mxu0
        %v1863 = vadd.f32 0.0, %v1862
        %1864 = vdwg.mxu0
        %1865 = vmatprep.subr.mxu0 %v1574
        %1866 = vmatpush1.msra.mxu0 %v1573
        %1867 = vmatprep.subr.mxu0 %v1558
        %1868 = vmatpush1.msra.mxu0 %v1557
        %1869 = vmatprep.subr.mxu0 %v1542
        %1870 = vmatpush1.msra.mxu0 %v1541
        %1871 = vmatprep.subr.mxu0 %v1526
        %1872 = vmatpush1.msra.mxu0 %v1525
        %1873 = vmatprep.subr.mxu0 %v1510
        %1874 = vmatpush1.msra.mxu0 %v1509
        %1875 = vmatprep.subr.mxu0 %v1494
        %1876 = vmatpush1.msra.mxu0 %v1493
        %1877 = vmatprep.subr.mxu0 %v1478
        %1878 = vmatpush1.msra.mxu0 %v1477
        %1879 = vmatprep.subr.mxu0 %v1462
        %1880 = vmatpush1.msra.mxu0 %v1461
        %1881 = vmatprep.subr.mxu0 %v1446
        %1882 = vmatpush1.msra.mxu0 %v1445
        %1883 = vmatprep.subr.mxu0 %v1430
        %1884 = vmatpush1.msra.mxu0 %v1429
        %1885 = vmatprep.subr.mxu0 %v1414
        %1886 = vmatpush1.msra.mxu0 %v1413
        %1887 = vmatprep.subr.mxu0 %v1398
        %1888 = vmatpush1.msra.mxu0 %v1397
        %1889 = vmatprep.subr.mxu0 %v1382
        %1890 = vmatpush1.msra.mxu0 %v1381
        %1891 = vmatprep.subr.mxu0 %v1366
        %1892 = vmatpush1.msra.mxu0 %v1365
        %1893 = vmatprep.subr.mxu0 %v1350
        %1894 = vmatpush1.msra.mxu0 %v1349
        %1895 = vmatprep.subr.mxu0 %v1334
        %1896 = vmatpush1.msra.mxu0 %v1333
        %1897 = vmatprep.subr.mxu0 0.0
        %1898 = vmatpush2.msra.mxu0 0.0
        %1899 = vmatprep.subr.mxu0 0.0
        %1900 = vmatpush2.msra.mxu0 0.0
        %1901 = vmatprep.subr.mxu0 0.0
        %1902 = vmatpush2.msra.mxu0 0.0
        %1903 = vmatprep.subr.mxu0 0.0
        %1904 = vmatpush2.msra.mxu0 0.0
        %1905 = vmatprep.subr.mxu0 0.0
        %1906 = vmatpush2.msra.mxu0 0.0
        %1907 = vmatprep.subr.mxu0 0.0
        %1908 = vmatpush2.msra.mxu0 0.0
        %1909 = vmatprep.subr.mxu0 0.0
        %1910 = vmatpush2.msra.mxu0 0.0
        %1911 = vmatprep.subr.mxu0 0.0
        %1912 = vmatpush2.msra.mxu0 0.0
        %1913 = vmatprep.subr.mxu0 0.0
        %1914 = vmatpush2.msra.mxu0 0.0
        %1915 = vmatprep.subr.mxu0 0.0
        %1916 = vmatpush2.msra.mxu0 0.0
        %1917 = vmatprep.subr.mxu0 0.0
        %1918 = vmatpush2.msra.mxu0 0.0
        %1919 = vmatprep.subr.mxu0 0.0
        %1920 = vmatpush2.msra.mxu0 0.0
        %1921 = vmatprep.subr.mxu0 0.0
        %1922 = vmatpush2.msra.mxu0 0.0
        %1923 = vmatprep.subr.mxu0 0.0
        %1924 = vmatpush2.msra.mxu0 0.0
        %1925 = vmatprep.subr.mxu0 0.0
        %1926 = vmatpush2.msra.mxu0 0.0
        %1927 = vmatprep.subr.mxu0 0.0
        %1928 = vmatpush2.msra.mxu0 0.0
        %1929 = vmatprep.mubr.f32.mxu0 0.0
        %1930 = vmatmul.mubr.f32.gmra.mxu0 %v1196
        %v1931 = vpop.f32.mrf.mxu0
        %v1932 = vadd.f32 0.0, %v1931
        %v1933 = vpop.f32.mrf.mxu0
        %v1934 = vadd.f32 0.0, %v1933
        %1935 = vdwg.mxu0
        %1936 = vmatprep.subr.mxu0 %v1576
        %1937 = vmatpush1.msra.mxu0 %v1575
        %1938 = vmatprep.subr.mxu0 %v1560
        %1939 = vmatpush1.msra.mxu0 %v1559
        %1940 = vmatprep.subr.mxu0 %v1544
        %1941 = vmatpush1.msra.mxu0 %v1543
        %1942 = vmatprep.subr.mxu0 %v1528
        %1943 = vmatpush1.msra.mxu0 %v1527
        %1944 = vmatprep.subr.mxu0 %v1512
        %1945 = vmatpush1.msra.mxu0 %v1511
        %1946 = vmatprep.subr.mxu0 %v1496
        %1947 = vmatpush1.msra.mxu0 %v1495
        %1948 = vmatprep.subr.mxu0 %v1480
        %1949 = vmatpush1.msra.mxu0 %v1479
        %1950 = vmatprep.subr.mxu0 %v1464
        %1951 = vmatpush1.msra.mxu0 %v1463
        %1952 = vmatprep.subr.mxu0 %v1448
        %1953 = vmatpush1.msra.mxu0 %v1447
        %1954 = vmatprep.subr.mxu0 %v1432
        %1955 = vmatpush1.msra.mxu0 %v1431
        %1956 = vmatprep.subr.mxu0 %v1416
        %1957 = vmatpush1.msra.mxu0 %v1415
        %1958 = vmatprep.subr.mxu0 %v1400
        %1959 = vmatpush1.msra.mxu0 %v1399
        %1960 = vmatprep.subr.mxu0 %v1384
        %1961 = vmatpush1.msra.mxu0 %v1383
        %1962 = vmatprep.subr.mxu0 %v1368
        %1963 = vmatpush1.msra.mxu0 %v1367
        %1964 = vmatprep.subr.mxu0 %v1352
        %1965 = vmatpush1.msra.mxu0 %v1351
        %1966 = vmatprep.subr.mxu0 %v1336
        %1967 = vmatpush1.msra.mxu0 %v1335
        %1968 = vmatprep.subr.mxu0 0.0
        %1969 = vmatpush2.msra.mxu0 0.0
        %1970 = vmatprep.subr.mxu0 0.0
        %1971 = vmatpush2.msra.mxu0 0.0
        %1972 = vmatprep.subr.mxu0 0.0
        %1973 = vmatpush2.msra.mxu0 0.0
        %1974 = vmatprep.subr.mxu0 0.0
        %1975 = vmatpush2.msra.mxu0 0.0
        %1976 = vmatprep.subr.mxu0 0.0
        %1977 = vmatpush2.msra.mxu0 0.0
        %1978 = vmatprep.subr.mxu0 0.0
        %1979 = vmatpush2.msra.mxu0 0.0
        %1980 = vmatprep.subr.mxu0 0.0
        %1981 = vmatpush2.msra.mxu0 0.0
        %1982 = vmatprep.subr.mxu0 0.0
        %1983 = vmatpush2.msra.mxu0 0.0
        %1984 = vmatprep.subr.mxu0 0.0
        %1985 = vmatpush2.msra.mxu0 0.0
        %1986 = vmatprep.subr.mxu0 0.0
        %1987 = vmatpush2.msra.mxu0 0.0
        %1988 = vmatprep.subr.mxu0 0.0
        %1989 = vmatpush2.msra.mxu0 0.0
        %1990 = vmatprep.subr.mxu0 0.0
        %1991 = vmatpush2.msra.mxu0 0.0
        %1992 = vmatprep.subr.mxu0 0.0
        %1993 = vmatpush2.msra.mxu0 0.0
        %1994 = vmatprep.subr.mxu0 0.0
        %1995 = vmatpush2.msra.mxu0 0.0
        %1996 = vmatprep.subr.mxu0 0.0
        %1997 = vmatpush2.msra.mxu0 0.0
        %1998 = vmatprep.subr.mxu0 0.0
        %1999 = vmatpush2.msra.mxu0 0.0
        %2000 = vmatprep.mubr.f32.mxu0 0.0
        %2001 = vmatmul.mubr.f32.gmra.mxu0 %v1196
        %v2002 = vpop.f32.mrf.mxu0
        %v2003 = vadd.f32 0.0, %v2002
        %v2004 = vpop.f32.mrf.mxu0
        %v2005 = vadd.f32 0.0, %v2004
        %2006 = vdwg.mxu0
        %2007 = vmatprep.subr.mxu0 %v1578
        %2008 = vmatpush1.msra.mxu0 %v1577
        %2009 = vmatprep.subr.mxu0 %v1562
        %2010 = vmatpush1.msra.mxu0 %v1561
        %2011 = vmatprep.subr.mxu0 %v1546
        %2012 = vmatpush1.msra.mxu0 %v1545
        %2013 = vmatprep.subr.mxu0 %v1530
        %2014 = vmatpush1.msra.mxu0 %v1529
        %2015 = vmatprep.subr.mxu0 %v1514
        %2016 = vmatpush1.msra.mxu0 %v1513
        %2017 = vmatprep.subr.mxu0 %v1498
        %2018 = vmatpush1.msra.mxu0 %v1497
        %2019 = vmatprep.subr.mxu0 %v1482
        %2020 = vmatpush1.msra.mxu0 %v1481
        %2021 = vmatprep.subr.mxu0 %v1466
        %2022 = vmatpush1.msra.mxu0 %v1465
        %2023 = vmatprep.subr.mxu0 %v1450
        %2024 = vmatpush1.msra.mxu0 %v1449
        %2025 = vmatprep.subr.mxu0 %v1434
        %2026 = vmatpush1.msra.mxu0 %v1433
        %2027 = vmatprep.subr.mxu0 %v1418
        %2028 = vmatpush1.msra.mxu0 %v1417
        %2029 = vmatprep.subr.mxu0 %v1402
        %2030 = vmatpush1.msra.mxu0 %v1401
        %2031 = vmatprep.subr.mxu0 %v1386
        %2032 = vmatpush1.msra.mxu0 %v1385
        %2033 = vmatprep.subr.mxu0 %v1370
        %2034 = vmatpush1.msra.mxu0 %v1369
        %2035 = vmatprep.subr.mxu0 %v1354
        %2036 = vmatpush1.msra.mxu0 %v1353
        %2037 = vmatprep.subr.mxu0 %v1338
        %2038 = vmatpush1.msra.mxu0 %v1337
        %2039 = vmatprep.subr.mxu0 0.0
        %2040 = vmatpush2.msra.mxu0 0.0
        %2041 = vmatprep.subr.mxu0 0.0
        %2042 = vmatpush2.msra.mxu0 0.0
        %2043 = vmatprep.subr.mxu0 0.0
        %2044 = vmatpush2.msra.mxu0 0.0
        %2045 = vmatprep.subr.mxu0 0.0
        %2046 = vmatpush2.msra.mxu0 0.0
        %2047 = vmatprep.subr.mxu0 0.0
        %2048 = vmatpush2.msra.mxu0 0.0
        %2049 = vmatprep.subr.mxu0 0.0
        %2050 = vmatpush2.msra.mxu0 0.0
        %2051 = vmatprep.subr.mxu0 0.0
        %2052 = vmatpush2.msra.mxu0 0.0
        %2053 = vmatprep.subr.mxu0 0.0
        %2054 = vmatpush2.msra.mxu0 0.0
        %2055 = vmatprep.subr.mxu0 0.0
        %2056 = vmatpush2.msra.mxu0 0.0
        %2057 = vmatprep.subr.mxu0 0.0
        %2058 = vmatpush2.msra.mxu0 0.0
        %2059 = vmatprep.subr.mxu0 0.0
        %2060 = vmatpush2.msra.mxu0 0.0
        %2061 = vmatprep.subr.mxu0 0.0
        %2062 = vmatpush2.msra.mxu0 0.0
        %2063 = vmatprep.subr.mxu0 0.0
        %2064 = vmatpush2.msra.mxu0 0.0
        %2065 = vmatprep.subr.mxu0 0.0
        %2066 = vmatpush2.msra.mxu0 0.0
        %2067 = vmatprep.subr.mxu0 0.0
        %2068 = vmatpush2.msra.mxu0 0.0
        %2069 = vmatprep.subr.mxu0 0.0
        %2070 = vmatpush2.msra.mxu0 0.0
        %2071 = vmatprep.mubr.f32.mxu0 0.0
        %2072 = vmatmul.mubr.f32.gmra.mxu0 %v1196
        %v2073 = vpop.f32.mrf.mxu0
        %v2074 = vadd.f32 0.0, %v2073
        %v2075 = vpop.f32.mrf.mxu0
        %v2076 = vadd.f32 0.0, %v2075
        %2077 = vdwg.mxu0
        %2078 = vmatprep.subr.mxu0 %v1580
        %2079 = vmatpush1.msra.mxu0 %v1579
        %2080 = vmatprep.subr.mxu0 %v1564
        %2081 = vmatpush1.msra.mxu0 %v1563
        %2082 = vmatprep.subr.mxu0 %v1548
        %2083 = vmatpush1.msra.mxu0 %v1547
        %2084 = vmatprep.subr.mxu0 %v1532
        %2085 = vmatpush1.msra.mxu0 %v1531
        %2086 = vmatprep.subr.mxu0 %v1516
        %2087 = vmatpush1.msra.mxu0 %v1515
        %2088 = vmatprep.subr.mxu0 %v1500
        %2089 = vmatpush1.msra.mxu0 %v1499
        %2090 = vmatprep.subr.mxu0 %v1484
        %2091 = vmatpush1.msra.mxu0 %v1483
        %2092 = vmatprep.subr.mxu0 %v1468
        %2093 = vmatpush1.msra.mxu0 %v1467
        %2094 = vmatprep.subr.mxu0 %v1452
        %2095 = vmatpush1.msra.mxu0 %v1451
        %2096 = vmatprep.subr.mxu0 %v1436
        %2097 = vmatpush1.msra.mxu0 %v1435
        %2098 = vmatprep.subr.mxu0 %v1420
        %2099 = vmatpush1.msra.mxu0 %v1419
        %2100 = vmatprep.subr.mxu0 %v1404
        %2101 = vmatpush1.msra.mxu0 %v1403
        %2102 = vmatprep.subr.mxu0 %v1388
        %2103 = vmatpush1.msra.mxu0 %v1387
        %2104 = vmatprep.subr.mxu0 %v1372
        %2105 = vmatpush1.msra.mxu0 %v1371
        %2106 = vmatprep.subr.mxu0 %v1356
        %2107 = vmatpush1.msra.mxu0 %v1355
        %2108 = vmatprep.subr.mxu0 %v1340
        %2109 = vmatpush1.msra.mxu0 %v1339
        %2110 = vmatprep.subr.mxu0 0.0
        %2111 = vmatpush2.msra.mxu0 0.0
        %2112 = vmatprep.subr.mxu0 0.0
        %2113 = vmatpush2.msra.mxu0 0.0
        %2114 = vmatprep.subr.mxu0 0.0
        %2115 = vmatpush2.msra.mxu0 0.0
        %2116 = vmatprep.subr.mxu0 0.0
        %2117 = vmatpush2.msra.mxu0 0.0
        %2118 = vmatprep.subr.mxu0 0.0
        %2119 = vmatpush2.msra.mxu0 0.0
        %2120 = vmatprep.subr.mxu0 0.0
        %2121 = vmatpush2.msra.mxu0 0.0
        %2122 = vmatprep.subr.mxu0 0.0
        %2123 = vmatpush2.msra.mxu0 0.0
        %2124 = vmatprep.subr.mxu0 0.0
        %2125 = vmatpush2.msra.mxu0 0.0
        %2126 = vmatprep.subr.mxu0 0.0
        %2127 = vmatpush2.msra.mxu0 0.0
        %2128 = vmatprep.subr.mxu0 0.0
        %2129 = vmatpush2.msra.mxu0 0.0
        %2130 = vmatprep.subr.mxu0 0.0
        %2131 = vmatpush2.msra.mxu0 0.0
        %2132 = vmatprep.subr.mxu0 0.0
        %2133 = vmatpush2.msra.mxu0 0.0
        %2134 = vmatprep.subr.mxu0 0.0
        %2135 = vmatpush2.msra.mxu0 0.0
        %2136 = vmatprep.subr.mxu0 0.0
        %2137 = vmatpush2.msra.mxu0 0.0
        %2138 = vmatprep.subr.mxu0 0.0
        %2139 = vmatpush2.msra.mxu0 0.0
        %2140 = vmatprep.subr.mxu0 0.0
        %2141 = vmatpush2.msra.mxu0 0.0
        %2142 = vmatprep.mubr.f32.mxu0 0.0
        %2143 = vmatmul.mubr.f32.gmra.mxu0 %v1196
        %v2144 = vpop.f32.mrf.mxu0
        %v2145 = vadd.f32 0.0, %v2144
        %v2146 = vpop.f32.mrf.mxu0
        %v2147 = vadd.f32 0.0, %v2146
        %2148 = vdwg.mxu0
        %s2149 = smul.u32 %s21, 2048
        %v2166 = vcombine.low %v1648, %v1650
        %v2167 = vcombine.low %v1719, %v1721
        %v2169 = vunpack.c.l.s4 1983009808
        %v2170 = vunpack.c.0.s8 %v2169
        %v2171 = vlaneseq
        %v2172 = vshrl.u32 %v2171, 7
        %v2173 = vsub.s32 %v2170, %v2172
        %v2174 = vrot.slane %v2166, %v2173
        %v2176 = vunpack.c.l.s4 1983009808
        %v2177 = vunpack.c.0.s8 %v2176
        %v2178 = vlaneseq
        %v2179 = vshrl.u32 %v2178, 7
        %v2180 = vsub.s32 %v2177, %v2179
        %v2181 = vrot.slane %v2167, %v2180
        %v2182 = vcombine.low %v2174, %v2181
        %v2183 = vcombine.low %v1790, %v1792
        %v2184 = vcombine.low %v1861, %v1863
        %v2186 = vunpack.c.l.s4 1983009808
        %v2187 = vunpack.c.0.s8 %v2186
        %v2188 = vlaneseq
        %v2189 = vshrl.u32 %v2188, 7
        %v2190 = vsub.s32 %v2187, %v2189
        %v2191 = vrot.slane %v2183, %v2190
        %v2193 = vunpack.c.l.s4 1983009808
        %v2194 = vunpack.c.0.s8 %v2193
        %v2195 = vlaneseq
        %v2196 = vshrl.u32 %v2195, 7
        %v2197 = vsub.s32 %v2194, %v2196
        %v2198 = vrot.slane %v2184, %v2197
        %v2199 = vcombine.low %v2191, %v2198
        %v2200 = vcombine.low %v1932, %v1934
        %v2201 = vcombine.low %v2003, %v2005
        %v2203 = vunpack.c.l.s4 1983009808
        %v2204 = vunpack.c.0.s8 %v2203
        %v2205 = vlaneseq
        %v2206 = vshrl.u32 %v2205, 7
        %v2207 = vsub.s32 %v2204, %v2206
        %v2208 = vrot.slane %v2200, %v2207
        %v2210 = vunpack.c.l.s4 1983009808
        %v2211 = vunpack.c.0.s8 %v2210
        %v2212 = vlaneseq
        %v2213 = vshrl.u32 %v2212, 7
        %v2214 = vsub.s32 %v2211, %v2213
        %v2215 = vrot.slane %v2201, %v2214
        %v2216 = vcombine.low %v2208, %v2215
        %v2217 = vcombine.low %v2074, %v2076
        %v2218 = vcombine.low %v2145, %v2147
        %v2220 = vunpack.c.l.s4 1983009808
        %v2221 = vunpack.c.0.s8 %v2220
        %v2222 = vlaneseq
        %v2223 = vshrl.u32 %v2222, 7
        %v2224 = vsub.s32 %v2221, %v2223
        %v2225 = vrot.slane %v2217, %v2224
        %v2227 = vunpack.c.l.s4 1983009808
        %v2228 = vunpack.c.0.s8 %v2227
        %v2229 = vlaneseq
        %v2230 = vshrl.u32 %v2229, 7
        %v2231 = vsub.s32 %v2228, %v2230
        %v2232 = vrot.slane %v2218, %v2231
        %v2233 = vcombine.low %v2225, %v2232
        %s2238 = sshra.s32 %s2149, 7
        %s2239 = sand.u32 %s2149, 127
        %s2240 = smul.addr %s2238, 2
        %s2241 = scalar_lea.vmem [#allocation15], %s2240
        %2242 = vst [vmem:[%s2241] sm:$0xff] %v2182
        %2243 = vst [vmem:[%s2241 + $0x8] sm:$0xff] %v2199
        %2244 = vst [vmem:[%s2241 + $0x10] sm:$0xff] %v2216
        %2245 = vst [vmem:[%s2241 + $0x18] sm:$0xff] %v2233
        %v2246 = vld [vmem:[#allocation3] sm:$0x3]
        %vm2247 = vcmask 1041408
        %v2248 = vsel %vm2247, %v1648, 0.0
        %v2249 = vsel %vm2247, %v1650, 0.0
        %v2250 = vadd.f32 %v2248, %v2249
        %v2251 = vsel %vm2247, %v1719, 0.0
        %v2252 = vadd.f32 %v2250, %v2251
        %v2253 = vsel %vm2247, %v1721, 0.0
        %v2254 = vadd.f32 %v2252, %v2253
        %v2255 = vsel %vm2247, %v1790, 0.0
        %v2256 = vadd.f32 %v2254, %v2255
        %v2257 = vsel %vm2247, %v1792, 0.0
        %v2258 = vadd.f32 %v2256, %v2257
        %v2259 = vsel %vm2247, %v1861, 0.0
        %v2260 = vadd.f32 %v2258, %v2259
        %v2261 = vsel %vm2247, %v1863, 0.0
        %v2262 = vadd.f32 %v2260, %v2261
        %v2263 = vsel %vm2247, %v1932, 0.0
        %v2264 = vadd.f32 %v2262, %v2263
        %v2265 = vsel %vm2247, %v1934, 0.0
        %v2266 = vadd.f32 %v2264, %v2265
        %v2267 = vsel %vm2247, %v2003, 0.0
        %v2268 = vadd.f32 %v2266, %v2267
        %v2269 = vsel %vm2247, %v2005, 0.0
        %v2270 = vadd.f32 %v2268, %v2269
        %v2271 = vsel %vm2247, %v2074, 0.0
        %v2272 = vadd.f32 %v2270, %v2271
        %v2273 = vsel %vm2247, %v2076, 0.0
        %v2274 = vadd.f32 %v2272, %v2273
        %v2275 = vsel %vm2247, %v2145, 0.0
        %v2276 = vadd.f32 %v2274, %v2275
        %v2277 = vsel %vm2247, %v2147, 0.0
        %v2278 = vadd.f32 %v2276, %v2277
        %2279 = vadd.xlane.f32.xlu0 %v2278
        %v2280 = vpop.xlane.xlu0 %2279
        %v2281 = vadd.f32 %v2246, %v2280
        %vm2282 = vcmask 1024
        %2283 = vst.msk [vmem:[#allocation3] sm:$0x3] %vm2282, %v2281
        %v2284 = vld [vmem:[#allocation4] sm:$0x3]
        %v2285 = vmul.f32 %v1648, %v1648
        %v2286 = vmul.f32 %v1650, %v1650
        %v2287 = vmul.f32 %v1719, %v1719
        %v2288 = vmul.f32 %v1721, %v1721
        %v2289 = vmul.f32 %v1790, %v1790
        %v2290 = vmul.f32 %v1792, %v1792
        %v2291 = vmul.f32 %v1861, %v1861
        %v2292 = vmul.f32 %v1863, %v1863
        %v2293 = vmul.f32 %v1932, %v1932
        %v2294 = vmul.f32 %v1934, %v1934
        %v2295 = vmul.f32 %v2003, %v2003
        %v2296 = vmul.f32 %v2005, %v2005
        %v2297 = vmul.f32 %v2074, %v2074
        %v2298 = vmul.f32 %v2076, %v2076
        %v2299 = vmul.f32 %v2145, %v2145
        %v2300 = vmul.f32 %v2147, %v2147
        %v2301 = vsel %vm2247, %v2285, 0.0
        %v2302 = vsel %vm2247, %v2286, 0.0
        %v2303 = vadd.f32 %v2301, %v2302
        %v2304 = vsel %vm2247, %v2287, 0.0
        %v2305 = vadd.f32 %v2303, %v2304
        %v2306 = vsel %vm2247, %v2288, 0.0
        %v2307 = vadd.f32 %v2305, %v2306
        %v2308 = vsel %vm2247, %v2289, 0.0
        %v2309 = vadd.f32 %v2307, %v2308
        %v2310 = vsel %vm2247, %v2290, 0.0
        %v2311 = vadd.f32 %v2309, %v2310
        %v2312 = vsel %vm2247, %v2291, 0.0
        %v2313 = vadd.f32 %v2311, %v2312
        %v2314 = vsel %vm2247, %v2292, 0.0
        %v2315 = vadd.f32 %v2313, %v2314
        %v2316 = vsel %vm2247, %v2293, 0.0
        %v2317 = vadd.f32 %v2315, %v2316
        %v2318 = vsel %vm2247, %v2294, 0.0
        %v2319 = vadd.f32 %v2317, %v2318
        %v2320 = vsel %vm2247, %v2295, 0.0
        %v2321 = vadd.f32 %v2319, %v2320
        %v2322 = vsel %vm2247, %v2296, 0.0
        %v2323 = vadd.f32 %v2321, %v2322
        %v2324 = vsel %vm2247, %v2297, 0.0
        %v2325 = vadd.f32 %v2323, %v2324
        %v2326 = vsel %vm2247, %v2298, 0.0
        %v2327 = vadd.f32 %v2325, %v2326
        %v2328 = vsel %vm2247, %v2299, 0.0
        %v2329 = vadd.f32 %v2327, %v2328
        %v2330 = vsel %vm2247, %v2300, 0.0
        %v2331 = vadd.f32 %v2329, %v2330
        %2332 = vadd.xlane.f32.xlu0 %v2331
        %v2333 = vpop.xlane.xlu0 %2332
        %v2334 = vadd.f32 %v2284, %v2333
        %2335 = vst.msk [vmem:[#allocation4] sm:$0x3] %vm2282, %v2334
        %p2336 = scmp.eq.s32.totalorder %s21, 7
        // Predicated region
        $region73: #{tpu_custom_call.1} parent=43 // pred_check
          %p2337 = pneg %p2336
        $region74: #{tpu_custom_call.1} parent=43 // pred_check_branch
          %2339 = sbr.rel (%p2337) target = $region76
        $region75: #{tpu_custom_call.1} parent=43 // pred_region
          %v2340 = vld [vmem:[#allocation3] sm:$0x3]
          %v2341 = vmul.f32 %v2340, 6.1035156e-05
          %v2342 = vld [vmem:[#allocation4] sm:$0x3]
          %v2343 = vmul.f32 %v2342, 6.1035156e-05
          %v2344 = vmul.f32 %v2341, %v2341
          %v2345 = vsub.f32 %v2343, %v2344
          %v2346 = vadd.f32 %v2345, 1e-05
          %v2347 = vrsqrt.pop %v2346
          %v2348 = vld [vmem:[#allocation15] sm:$0xff]
          %v2349 = vld [vmem:[#allocation15 + $0x8] sm:$0xff]
          %v2350 = vld [vmem:[#allocation15 + $0x10] sm:$0xff]
          %v2351 = vld [vmem:[#allocation15 + $0x18] sm:$0xff]
          %2353 = vset.pattern.permute.xlu0 0
          %2354 = vperm.xlu0 %2353, %v2341
          %v2355 = vpop.permute.xlu0 %2354
          %v2357 = vunpack.c.l.s4 269488144
          %v2358 = vunpack.c.0.s8 %v2357
          %v2359 = vlaneseq
          %v2360 = vshrl.u32 %v2359, 7
          %v2361 = vsub.s32 %v2358, %v2360
          %v2362 = vrot.slane %v2355, %v2361
          %v2364 = vsub.f32 %v2348, %v2362
          %v2365 = vsub.f32 %v2349, %v2362
          %v2366 = vsub.f32 %v2350, %v2362
          %v2367 = vsub.f32 %v2351, %v2362
          %2369 = vset.pattern.permute.xlu0 0
          %2370 = vperm.xlu0 %2369, %v2347
          %v2371 = vpop.permute.xlu0 %2370
          %v2373 = vunpack.c.l.s4 269488144
          %v2374 = vunpack.c.0.s8 %v2373
          %v2375 = vlaneseq
          %v2376 = vshrl.u32 %v2375, 7
          %v2377 = vsub.s32 %v2374, %v2376
          %v2378 = vrot.slane %v2371, %v2377
          %v2380 = vmul.f32 %v2364, %v2378
          %v2381 = vmul.f32 %v2365, %v2378
          %v2382 = vmul.f32 %v2366, %v2378
          %v2383 = vmul.f32 %v2367, %v2378
          %v2384 = vld [vmem:[#allocation14] ss:$2 sm:$0xff]
          %s2385 = scalar_lea.vmem [#allocation14], 16
          %v2386 = vld [vmem:[%s2385] ss:$2 sm:$0xff]
          %v2389 = vlaneseq
          %v2390 = vshrl.u32 %v2389, 7
          %v2391 = vsub.s32 0, %v2390
          %v2392 = vrot.slane %v2384, %v2391
          %v2393 = vlaneseq
          %v2394 = vshrl.u32 %v2393, 7
          %v2395 = vsub.s32 1, %v2394
          %v2396 = vrot.slane %v2384, %v2395
          %v2397 = vlaneseq
          %v2398 = vshrl.u32 %v2397, 7
          %v2399 = vsub.s32 2, %v2398
          %v2400 = vrot.slane %v2384, %v2399
          %v2401 = vlaneseq
          %v2402 = vshrl.u32 %v2401, 7
          %v2403 = vsub.s32 3, %v2402
          %v2404 = vrot.slane %v2384, %v2403
          %v2405 = vlaneseq
          %v2406 = vshrl.u32 %v2405, 7
          %v2407 = vsub.s32 4, %v2406
          %v2408 = vrot.slane %v2384, %v2407
          %v2409 = vlaneseq
          %v2410 = vshrl.u32 %v2409, 7
          %v2411 = vsub.s32 5, %v2410
          %v2412 = vrot.slane %v2384, %v2411
          %v2413 = vlaneseq
          %v2414 = vshrl.u32 %v2413, 7
          %v2415 = vsub.s32 6, %v2414
          %v2416 = vrot.slane %v2384, %v2415
          %v2417 = vlaneseq
          %v2418 = vshrl.u32 %v2417, 7
          %v2419 = vsub.s32 7, %v2418
          %v2420 = vrot.slane %v2384, %v2419
          %v2421 = vlaneseq
          %v2422 = vshrl.u32 %v2421, 7
          %v2423 = vsub.s32 0, %v2422
          %v2424 = vrot.slane %v2386, %v2423
          %v2425 = vlaneseq
          %v2426 = vshrl.u32 %v2425, 7
          %v2427 = vsub.s32 1, %v2426
          %v2428 = vrot.slane %v2386, %v2427
          %v2429 = vlaneseq
          %v2430 = vshrl.u32 %v2429, 7
          %v2431 = vsub.s32 2, %v2430
          %v2432 = vrot.slane %v2386, %v2431
          %v2433 = vlaneseq
          %v2434 = vshrl.u32 %v2433, 7
          %v2435 = vsub.s32 3, %v2434
          %v2436 = vrot.slane %v2386, %v2435
          %v2437 = vlaneseq
          %v2438 = vshrl.u32 %v2437, 7
          %v2439 = vsub.s32 4, %v2438
          %v2440 = vrot.slane %v2386, %v2439
          %v2441 = vlaneseq
          %v2442 = vshrl.u32 %v2441, 7
          %v2443 = vsub.s32 5, %v2442
          %v2444 = vrot.slane %v2386, %v2443
          %v2445 = vlaneseq
          %v2446 = vshrl.u32 %v2445, 7
          %v2447 = vsub.s32 6, %v2446
          %v2448 = vrot.slane %v2386, %v2447
          %v2449 = vlaneseq
          %v2450 = vshrl.u32 %v2449, 7
          %v2451 = vsub.s32 7, %v2450
          %v2452 = vrot.slane %v2386, %v2451
          %v2453 = vcombine.low %v2392, %v2396
          %v2454 = vcombine.low %v2400, %v2404
          %v2456 = vunpack.c.l.s4 1983009808
          %v2457 = vunpack.c.0.s8 %v2456
          %v2458 = vlaneseq
          %v2459 = vshrl.u32 %v2458, 7
          %v2460 = vsub.s32 %v2457, %v2459
          %v2461 = vrot.slane %v2453, %v2460
          %v2463 = vunpack.c.l.s4 1983009808
          %v2464 = vunpack.c.0.s8 %v2463
          %v2465 = vlaneseq
          %v2466 = vshrl.u32 %v2465, 7
          %v2467 = vsub.s32 %v2464, %v2466
          %v2468 = vrot.slane %v2454, %v2467
          %v2469 = vcombine.low %v2461, %v2468
          %v2470 = vcombine.low %v2408, %v2412
          %v2471 = vcombine.low %v2416, %v2420
          %v2473 = vunpack.c.l.s4 1983009808
          %v2474 = vunpack.c.0.s8 %v2473
          %v2475 = vlaneseq
          %v2476 = vshrl.u32 %v2475, 7
          %v2477 = vsub.s32 %v2474, %v2476
          %v2478 = vrot.slane %v2470, %v2477
          %v2480 = vunpack.c.l.s4 1983009808
          %v2481 = vunpack.c.0.s8 %v2480
          %v2482 = vlaneseq
          %v2483 = vshrl.u32 %v2482, 7
          %v2484 = vsub.s32 %v2481, %v2483
          %v2485 = vrot.slane %v2471, %v2484
          %v2486 = vcombine.low %v2478, %v2485
          %v2487 = vcombine.low %v2424, %v2428
          %v2488 = vcombine.low %v2432, %v2436
          %v2490 = vunpack.c.l.s4 1983009808
          %v2491 = vunpack.c.0.s8 %v2490
          %v2492 = vlaneseq
          %v2493 = vshrl.u32 %v2492, 7
          %v2494 = vsub.s32 %v2491, %v2493
          %v2495 = vrot.slane %v2487, %v2494
          %v2497 = vunpack.c.l.s4 1983009808
          %v2498 = vunpack.c.0.s8 %v2497
          %v2499 = vlaneseq
          %v2500 = vshrl.u32 %v2499, 7
          %v2501 = vsub.s32 %v2498, %v2500
          %v2502 = vrot.slane %v2488, %v2501
          %v2503 = vcombine.low %v2495, %v2502
          %v2504 = vcombine.low %v2440, %v2444
          %v2505 = vcombine.low %v2448, %v2452
          %v2507 = vunpack.c.l.s4 1983009808
          %v2508 = vunpack.c.0.s8 %v2507
          %v2509 = vlaneseq
          %v2510 = vshrl.u32 %v2509, 7
          %v2511 = vsub.s32 %v2508, %v2510
          %v2512 = vrot.slane %v2504, %v2511
          %v2514 = vunpack.c.l.s4 1983009808
          %v2515 = vunpack.c.0.s8 %v2514
          %v2516 = vlaneseq
          %v2517 = vshrl.u32 %v2516, 7
          %v2518 = vsub.s32 %v2515, %v2517
          %v2519 = vrot.slane %v2505, %v2518
          %v2520 = vcombine.low %v2512, %v2519
          %v2525 = vmul.f32 %v2380, %v2469
          %v2526 = vmul.f32 %v2381, %v2486
          %v2527 = vmul.f32 %v2382, %v2503
          %v2528 = vmul.f32 %v2383, %v2520
          %s2529 = scalar_lea.vmem [#allocation14], 1
          %v2530 = vld [vmem:[%s2529] ss:$2 sm:$0xff]
          %s2531 = scalar_lea.vmem [#allocation14], 17
          %v2532 = vld [vmem:[%s2531] ss:$2 sm:$0xff]
          %v2535 = vlaneseq
          %v2536 = vshrl.u32 %v2535, 7
          %v2537 = vsub.s32 0, %v2536
          %v2538 = vrot.slane %v2530, %v2537
          %v2539 = vlaneseq
          %v2540 = vshrl.u32 %v2539, 7
          %v2541 = vsub.s32 1, %v2540
          %v2542 = vrot.slane %v2530, %v2541
          %v2543 = vlaneseq
          %v2544 = vshrl.u32 %v2543, 7
          %v2545 = vsub.s32 2, %v2544
          %v2546 = vrot.slane %v2530, %v2545
          %v2547 = vlaneseq
          %v2548 = vshrl.u32 %v2547, 7
          %v2549 = vsub.s32 3, %v2548
          %v2550 = vrot.slane %v2530, %v2549
          %v2551 = vlaneseq
          %v2552 = vshrl.u32 %v2551, 7
          %v2553 = vsub.s32 4, %v2552
          %v2554 = vrot.slane %v2530, %v2553
          %v2555 = vlaneseq
          %v2556 = vshrl.u32 %v2555, 7
          %v2557 = vsub.s32 5, %v2556
          %v2558 = vrot.slane %v2530, %v2557
          %v2559 = vlaneseq
          %v2560 = vshrl.u32 %v2559, 7
          %v2561 = vsub.s32 6, %v2560
          %v2562 = vrot.slane %v2530, %v2561
          %v2563 = vlaneseq
          %v2564 = vshrl.u32 %v2563, 7
          %v2565 = vsub.s32 7, %v2564
          %v2566 = vrot.slane %v2530, %v2565
          %v2567 = vlaneseq
          %v2568 = vshrl.u32 %v2567, 7
          %v2569 = vsub.s32 0, %v2568
          %v2570 = vrot.slane %v2532, %v2569
          %v2571 = vlaneseq
          %v2572 = vshrl.u32 %v2571, 7
          %v2573 = vsub.s32 1, %v2572
          %v2574 = vrot.slane %v2532, %v2573
          %v2575 = vlaneseq
          %v2576 = vshrl.u32 %v2575, 7
          %v2577 = vsub.s32 2, %v2576
          %v2578 = vrot.slane %v2532, %v2577
          %v2579 = vlaneseq
          %v2580 = vshrl.u32 %v2579, 7
          %v2581 = vsub.s32 3, %v2580
          %v2582 = vrot.slane %v2532, %v2581
          %v2583 = vlaneseq
          %v2584 = vshrl.u32 %v2583, 7
          %v2585 = vsub.s32 4, %v2584
          %v2586 = vrot.slane %v2532, %v2585
          %v2587 = vlaneseq
          %v2588 = vshrl.u32 %v2587, 7
          %v2589 = vsub.s32 5, %v2588
          %v2590 = vrot.slane %v2532, %v2589
          %v2591 = vlaneseq
          %v2592 = vshrl.u32 %v2591, 7
          %v2593 = vsub.s32 6, %v2592
          %v2594 = vrot.slane %v2532, %v2593
          %v2595 = vlaneseq
          %v2596 = vshrl.u32 %v2595, 7
          %v2597 = vsub.s32 7, %v2596
          %v2598 = vrot.slane %v2532, %v2597
          %v2599 = vcombine.low %v2538, %v2542
          %v2600 = vcombine.low %v2546, %v2550
          %v2602 = vunpack.c.l.s4 1983009808
          %v2603 = vunpack.c.0.s8 %v2602
          %v2604 = vlaneseq
          %v2605 = vshrl.u32 %v2604, 7
          %v2606 = vsub.s32 %v2603, %v2605
          %v2607 = vrot.slane %v2599, %v2606
          %v2609 = vunpack.c.l.s4 1983009808
          %v2610 = vunpack.c.0.s8 %v2609
          %v2611 = vlaneseq
          %v2612 = vshrl.u32 %v2611, 7
          %v2613 = vsub.s32 %v2610, %v2612
          %v2614 = vrot.slane %v2600, %v2613
          %v2615 = vcombine.low %v2607, %v2614
          %v2616 = vcombine.low %v2554, %v2558
          %v2617 = vcombine.low %v2562, %v2566
          %v2619 = vunpack.c.l.s4 1983009808
          %v2620 = vunpack.c.0.s8 %v2619
          %v2621 = vlaneseq
          %v2622 = vshrl.u32 %v2621, 7
          %v2623 = vsub.s32 %v2620, %v2622
          %v2624 = vrot.slane %v2616, %v2623
          %v2626 = vunpack.c.l.s4 1983009808
          %v2627 = vunpack.c.0.s8 %v2626
          %v2628 = vlaneseq
          %v2629 = vshrl.u32 %v2628, 7
          %v2630 = vsub.s32 %v2627, %v2629
          %v2631 = vrot.slane %v2617, %v2630
          %v2632 = vcombine.low %v2624, %v2631
          %v2633 = vcombine.low %v2570, %v2574
          %v2634 = vcombine.low %v2578, %v2582
          %v2636 = vunpack.c.l.s4 1983009808
          %v2637 = vunpack.c.0.s8 %v2636
          %v2638 = vlaneseq
          %v2639 = vshrl.u32 %v2638, 7
          %v2640 = vsub.s32 %v2637, %v2639
          %v2641 = vrot.slane %v2633, %v2640
          %v2643 = vunpack.c.l.s4 1983009808
          %v2644 = vunpack.c.0.s8 %v2643
          %v2645 = vlaneseq
          %v2646 = vshrl.u32 %v2645, 7
          %v2647 = vsub.s32 %v2644, %v2646
          %v2648 = vrot.slane %v2634, %v2647
          %v2649 = vcombine.low %v2641, %v2648
          %v2650 = vcombine.low %v2586, %v2590
          %v2651 = vcombine.low %v2594, %v2598
          %v2653 = vunpack.c.l.s4 1983009808
          %v2654 = vunpack.c.0.s8 %v2653
          %v2655 = vlaneseq
          %v2656 = vshrl.u32 %v2655, 7
          %v2657 = vsub.s32 %v2654, %v2656
          %v2658 = vrot.slane %v2650, %v2657
          %v2660 = vunpack.c.l.s4 1983009808
          %v2661 = vunpack.c.0.s8 %v2660
          %v2662 = vlaneseq
          %v2663 = vshrl.u32 %v2662, 7
          %v2664 = vsub.s32 %v2661, %v2663
          %v2665 = vrot.slane %v2651, %v2664
          %v2666 = vcombine.low %v2658, %v2665
          %v2671 = vadd.f32 %v2525, %v2615
          %v2672 = vadd.f32 %v2526, %v2632
          %v2673 = vadd.f32 %v2527, %v2649
          %v2674 = vadd.f32 %v2528, %v2666
          %2675 = vst [vmem:[#allocation15] sm:$0xff] %v2671
          %2676 = vst [vmem:[#allocation15 + $0x8] sm:$0xff] %v2672
          %2677 = vst [vmem:[#allocation15 + $0x10] sm:$0xff] %v2673
          %2678 = vst [vmem:[#allocation15 + $0x18] sm:$0xff] %v2674
          %v2679 = vld [vmem:[#allocation15 + $0x20] sm:$0xff]
          %v2680 = vld [vmem:[#allocation15 + $0x28] sm:$0xff]
          %v2681 = vld [vmem:[#allocation15 + $0x30] sm:$0xff]
          %v2682 = vld [vmem:[#allocation15 + $0x38] sm:$0xff]
          %v2683 = vsub.f32 %v2679, %v2362
          %v2684 = vsub.f32 %v2680, %v2362
          %v2685 = vsub.f32 %v2681, %v2362
          %v2686 = vsub.f32 %v2682, %v2362
          %v2687 = vmul.f32 %v2683, %v2378
          %v2688 = vmul.f32 %v2684, %v2378
          %v2689 = vmul.f32 %v2685, %v2378
          %v2690 = vmul.f32 %v2686, %v2378
          %s2691 = scalar_lea.vmem [#allocation14], 32
          %v2692 = vld [vmem:[%s2691] ss:$2 sm:$0xff]
          %s2693 = scalar_lea.vmem [#allocation14], 48
          %v2694 = vld [vmem:[%s2693] ss:$2 sm:$0xff]
          %v2697 = vlaneseq
          %v2698 = vshrl.u32 %v2697, 7
          %v2699 = vsub.s32 0, %v2698
          %v2700 = vrot.slane %v2692, %v2699
          %v2701 = vlaneseq
          %v2702 = vshrl.u32 %v2701, 7
          %v2703 = vsub.s32 1, %v2702
          %v2704 = vrot.slane %v2692, %v2703
          %v2705 = vlaneseq
          %v2706 = vshrl.u32 %v2705, 7
          %v2707 = vsub.s32 2, %v2706
          %v2708 = vrot.slane %v2692, %v2707
          %v2709 = vlaneseq
          %v2710 = vshrl.u32 %v2709, 7
          %v2711 = vsub.s32 3, %v2710
          %v2712 = vrot.slane %v2692, %v2711
          %v2713 = vlaneseq
          %v2714 = vshrl.u32 %v2713, 7
          %v2715 = vsub.s32 4, %v2714
          %v2716 = vrot.slane %v2692, %v2715
          %v2717 = vlaneseq
          %v2718 = vshrl.u32 %v2717, 7
          %v2719 = vsub.s32 5, %v2718
          %v2720 = vrot.slane %v2692, %v2719
          %v2721 = vlaneseq
          %v2722 = vshrl.u32 %v2721, 7
          %v2723 = vsub.s32 6, %v2722
          %v2724 = vrot.slane %v2692, %v2723
          %v2725 = vlaneseq
          %v2726 = vshrl.u32 %v2725, 7
          %v2727 = vsub.s32 7, %v2726
          %v2728 = vrot.slane %v2692, %v2727
          %v2729 = vlaneseq
          %v2730 = vshrl.u32 %v2729, 7
          %v2731 = vsub.s32 0, %v2730
          %v2732 = vrot.slane %v2694, %v2731
          %v2733 = vlaneseq
          %v2734 = vshrl.u32 %v2733, 7
          %v2735 = vsub.s32 1, %v2734
          %v2736 = vrot.slane %v2694, %v2735
          %v2737 = vlaneseq
          %v2738 = vshrl.u32 %v2737, 7
          %v2739 = vsub.s32 2, %v2738
          %v2740 = vrot.slane %v2694, %v2739
          %v2741 = vlaneseq
          %v2742 = vshrl.u32 %v2741, 7
          %v2743 = vsub.s32 3, %v2742
          %v2744 = vrot.slane %v2694, %v2743
          %v2745 = vlaneseq
          %v2746 = vshrl.u32 %v2745, 7
          %v2747 = vsub.s32 4, %v2746
          %v2748 = vrot.slane %v2694, %v2747
          %v2749 = vlaneseq
          %v2750 = vshrl.u32 %v2749, 7
          %v2751 = vsub.s32 5, %v2750
          %v2752 = vrot.slane %v2694, %v2751
          %v2753 = vlaneseq
          %v2754 = vshrl.u32 %v2753, 7
          %v2755 = vsub.s32 6, %v2754
          %v2756 = vrot.slane %v2694, %v2755
          %v2757 = vlaneseq
          %v2758 = vshrl.u32 %v2757, 7
          %v2759 = vsub.s32 7, %v2758
          %v2760 = vrot.slane %v2694, %v2759
          %v2761 = vcombine.low %v2700, %v2704
          %v2762 = vcombine.low %v2708, %v2712
          %v2764 = vunpack.c.l.s4 1983009808
          %v2765 = vunpack.c.0.s8 %v2764
          %v2766 = vlaneseq
          %v2767 = vshrl.u32 %v2766, 7
          %v2768 = vsub.s32 %v2765, %v2767
          %v2769 = vrot.slane %v2761, %v2768
          %v2771 = vunpack.c.l.s4 1983009808
          %v2772 = vunpack.c.0.s8 %v2771
          %v2773 = vlaneseq
          %v2774 = vshrl.u32 %v2773, 7
          %v2775 = vsub.s32 %v2772, %v2774
          %v2776 = vrot.slane %v2762, %v2775
          %v2777 = vcombine.low %v2769, %v2776
          %v2778 = vcombine.low %v2716, %v2720
          %v2779 = vcombine.low %v2724, %v2728
          %v2781 = vunpack.c.l.s4 1983009808
          %v2782 = vunpack.c.0.s8 %v2781
          %v2783 = vlaneseq
          %v2784 = vshrl.u32 %v2783, 7
          %v2785 = vsub.s32 %v2782, %v2784
          %v2786 = vrot.slane %v2778, %v2785
          %v2788 = vunpack.c.l.s4 1983009808
          %v2789 = vunpack.c.0.s8 %v2788
          %v2790 = vlaneseq
          %v2791 = vshrl.u32 %v2790, 7
          %v2792 = vsub.s32 %v2789, %v2791
          %v2793 = vrot.slane %v2779, %v2792
          %v2794 = vcombine.low %v2786, %v2793
          %v2795 = vcombine.low %v2732, %v2736
          %v2796 = vcombine.low %v2740, %v2744
          %v2798 = vunpack.c.l.s4 1983009808
          %v2799 = vunpack.c.0.s8 %v2798
          %v2800 = vlaneseq
          %v2801 = vshrl.u32 %v2800, 7
          %v2802 = vsub.s32 %v2799, %v2801
          %v2803 = vrot.slane %v2795, %v2802
          %v2805 = vunpack.c.l.s4 1983009808
          %v2806 = vunpack.c.0.s8 %v2805
          %v2807 = vlaneseq
          %v2808 = vshrl.u32 %v2807, 7
          %v2809 = vsub.s32 %v2806, %v2808
          %v2810 = vrot.slane %v2796, %v2809
          %v2811 = vcombine.low %v2803, %v2810
          %v2812 = vcombine.low %v2748, %v2752
          %v2813 = vcombine.low %v2756, %v2760
          %v2815 = vunpack.c.l.s4 1983009808
          %v2816 = vunpack.c.0.s8 %v2815
          %v2817 = vlaneseq
          %v2818 = vshrl.u32 %v2817, 7
          %v2819 = vsub.s32 %v2816, %v2818
          %v2820 = vrot.slane %v2812, %v2819
          %v2822 = vunpack.c.l.s4 1983009808
          %v2823 = vunpack.c.0.s8 %v2822
          %v2824 = vlaneseq
          %v2825 = vshrl.u32 %v2824, 7
          %v2826 = vsub.s32 %v2823, %v2825
          %v2827 = vrot.slane %v2813, %v2826
          %v2828 = vcombine.low %v2820, %v2827
          %v2833 = vmul.f32 %v2687, %v2777
          %v2834 = vmul.f32 %v2688, %v2794
          %v2835 = vmul.f32 %v2689, %v2811
          %v2836 = vmul.f32 %v2690, %v2828
          %s2837 = scalar_lea.vmem [#allocation14], 33
          %v2838 = vld [vmem:[%s2837] ss:$2 sm:$0xff]
          %s2839 = scalar_lea.vmem [#allocation14], 49
          %v2840 = vld [vmem:[%s2839] ss:$2 sm:$0xff]
          %v2843 = vlaneseq
          %v2844 = vshrl.u32 %v2843, 7
          %v2845 = vsub.s32 0, %v2844
          %v2846 = vrot.slane %v2838, %v2845
          %v2847 = vlaneseq
          %v2848 = vshrl.u32 %v2847, 7
          %v2849 = vsub.s32 1, %v2848
          %v2850 = vrot.slane %v2838, %v2849
          %v2851 = vlaneseq
          %v2852 = vshrl.u32 %v2851, 7
          %v2853 = vsub.s32 2, %v2852
          %v2854 = vrot.slane %v2838, %v2853
          %v2855 = vlaneseq
          %v2856 = vshrl.u32 %v2855, 7
          %v2857 = vsub.s32 3, %v2856
          %v2858 = vrot.slane %v2838, %v2857
          %v2859 = vlaneseq
          %v2860 = vshrl.u32 %v2859, 7
          %v2861 = vsub.s32 4, %v2860
          %v2862 = vrot.slane %v2838, %v2861
          %v2863 = vlaneseq
          %v2864 = vshrl.u32 %v2863, 7
          %v2865 = vsub.s32 5, %v2864
          %v2866 = vrot.slane %v2838, %v2865
          %v2867 = vlaneseq
          %v2868 = vshrl.u32 %v2867, 7
          %v2869 = vsub.s32 6, %v2868
          %v2870 = vrot.slane %v2838, %v2869
          %v2871 = vlaneseq
          %v2872 = vshrl.u32 %v2871, 7
          %v2873 = vsub.s32 7, %v2872
          %v2874 = vrot.slane %v2838, %v2873
          %v2875 = vlaneseq
          %v2876 = vshrl.u32 %v2875, 7
          %v2877 = vsub.s32 0, %v2876
          %v2878 = vrot.slane %v2840, %v2877
          %v2879 = vlaneseq
          %v2880 = vshrl.u32 %v2879, 7
          %v2881 = vsub.s32 1, %v2880
          %v2882 = vrot.slane %v2840, %v2881
          %v2883 = vlaneseq
          %v2884 = vshrl.u32 %v2883, 7
          %v2885 = vsub.s32 2, %v2884
          %v2886 = vrot.slane %v2840, %v2885
          %v2887 = vlaneseq
          %v2888 = vshrl.u32 %v2887, 7
          %v2889 = vsub.s32 3, %v2888
          %v2890 = vrot.slane %v2840, %v2889
          %v2891 = vlaneseq
          %v2892 = vshrl.u32 %v2891, 7
          %v2893 = vsub.s32 4, %v2892
          %v2894 = vrot.slane %v2840, %v2893
          %v2895 = vlaneseq
          %v2896 = vshrl.u32 %v2895, 7
          %v2897 = vsub.s32 5, %v2896
          %v2898 = vrot.slane %v2840, %v2897
          %v2899 = vlaneseq
          %v2900 = vshrl.u32 %v2899, 7
          %v2901 = vsub.s32 6, %v2900
          %v2902 = vrot.slane %v2840, %v2901
          %v2903 = vlaneseq
          %v2904 = vshrl.u32 %v2903, 7
          %v2905 = vsub.s32 7, %v2904
          %v2906 = vrot.slane %v2840, %v2905
          %v2907 = vcombine.low %v2846, %v2850
          %v2908 = vcombine.low %v2854, %v2858
          %v2910 = vunpack.c.l.s4 1983009808
          %v2911 = vunpack.c.0.s8 %v2910
          %v2912 = vlaneseq
          %v2913 = vshrl.u32 %v2912, 7
          %v2914 = vsub.s32 %v2911, %v2913
          %v2915 = vrot.slane %v2907, %v2914
          %v2917 = vunpack.c.l.s4 1983009808
          %v2918 = vunpack.c.0.s8 %v2917
          %v2919 = vlaneseq
          %v2920 = vshrl.u32 %v2919, 7
          %v2921 = vsub.s32 %v2918, %v2920
          %v2922 = vrot.slane %v2908, %v2921
          %v2923 = vcombine.low %v2915, %v2922
          %v2924 = vcombine.low %v2862, %v2866
          %v2925 = vcombine.low %v2870, %v2874
          %v2927 = vunpack.c.l.s4 1983009808
          %v2928 = vunpack.c.0.s8 %v2927
          %v2929 = vlaneseq
          %v2930 = vshrl.u32 %v2929, 7
          %v2931 = vsub.s32 %v2928, %v2930
          %v2932 = vrot.slane %v2924, %v2931
          %v2934 = vunpack.c.l.s4 1983009808
          %v2935 = vunpack.c.0.s8 %v2934
          %v2936 = vlaneseq
          %v2937 = vshrl.u32 %v2936, 7
          %v2938 = vsub.s32 %v2935, %v2937
          %v2939 = vrot.slane %v2925, %v2938
          %v2940 = vcombine.low %v2932, %v2939
          %v2941 = vcombine.low %v2878, %v2882
          %v2942 = vcombine.low %v2886, %v2890
          %v2944 = vunpack.c.l.s4 1983009808
          %v2945 = vunpack.c.0.s8 %v2944
          %v2946 = vlaneseq
          %v2947 = vshrl.u32 %v2946, 7
          %v2948 = vsub.s32 %v2945, %v2947
          %v2949 = vrot.slane %v2941, %v2948
          %v2951 = vunpack.c.l.s4 1983009808
          %v2952 = vunpack.c.0.s8 %v2951
          %v2953 = vlaneseq
          %v2954 = vshrl.u32 %v2953, 7
          %v2955 = vsub.s32 %v2952, %v2954
          %v2956 = vrot.slane %v2942, %v2955
          %v2957 = vcombine.low %v2949, %v2956
          %v2958 = vcombine.low %v2894, %v2898
          %v2959 = vcombine.low %v2902, %v2906
          %v2961 = vunpack.c.l.s4 1983009808
          %v2962 = vunpack.c.0.s8 %v2961
          %v2963 = vlaneseq
          %v2964 = vshrl.u32 %v2963, 7
          %v2965 = vsub.s32 %v2962, %v2964
          %v2966 = vrot.slane %v2958, %v2965
          %v2968 = vunpack.c.l.s4 1983009808
          %v2969 = vunpack.c.0.s8 %v2968
          %v2970 = vlaneseq
          %v2971 = vshrl.u32 %v2970, 7
          %v2972 = vsub.s32 %v2969, %v2971
          %v2973 = vrot.slane %v2959, %v2972
          %v2974 = vcombine.low %v2966, %v2973
          %v2979 = vadd.f32 %v2833, %v2923
          %v2980 = vadd.f32 %v2834, %v2940
          %v2981 = vadd.f32 %v2835, %v2957
          %v2982 = vadd.f32 %v2836, %v2974
          %2983 = vst [vmem:[#allocation15 + $0x20] sm:$0xff] %v2979
          %2984 = vst [vmem:[#allocation15 + $0x28] sm:$0xff] %v2980
          %2985 = vst [vmem:[#allocation15 + $0x30] sm:$0xff] %v2981
          %2986 = vst [vmem:[#allocation15 + $0x38] sm:$0xff] %v2982
          %v2987 = vld [vmem:[#allocation15 + $0x40] sm:$0xff]
          %v2988 = vld [vmem:[#allocation15 + $0x48] sm:$0xff]
          %v2989 = vld [vmem:[#allocation15 + $0x50] sm:$0xff]
          %v2990 = vld [vmem:[#allocation15 + $0x58] sm:$0xff]
          %v2991 = vsub.f32 %v2987, %v2362
          %v2992 = vsub.f32 %v2988, %v2362
          %v2993 = vsub.f32 %v2989, %v2362
          %v2994 = vsub.f32 %v2990, %v2362
          %v2995 = vmul.f32 %v2991, %v2378
          %v2996 = vmul.f32 %v2992, %v2378
          %v2997 = vmul.f32 %v2993, %v2378
          %v2998 = vmul.f32 %v2994, %v2378
          %s2999 = scalar_lea.vmem [#allocation14], 64
          %v3000 = vld [vmem:[%s2999] ss:$2 sm:$0xff]
          %s3001 = scalar_lea.vmem [#allocation14], 80
          %v3002 = vld [vmem:[%s3001] ss:$2 sm:$0xff]
          %v3005 = vlaneseq
          %v3006 = vshrl.u32 %v3005, 7
          %v3007 = vsub.s32 0, %v3006
          %v3008 = vrot.slane %v3000, %v3007
          %v3009 = vlaneseq
          %v3010 = vshrl.u32 %v3009, 7
          %v3011 = vsub.s32 1, %v3010
          %v3012 = vrot.slane %v3000, %v3011
          %v3013 = vlaneseq
          %v3014 = vshrl.u32 %v3013, 7
          %v3015 = vsub.s32 2, %v3014
          %v3016 = vrot.slane %v3000, %v3015
          %v3017 = vlaneseq
          %v3018 = vshrl.u32 %v3017, 7
          %v3019 = vsub.s32 3, %v3018
          %v3020 = vrot.slane %v3000, %v3019
          %v3021 = vlaneseq
          %v3022 = vshrl.u32 %v3021, 7
          %v3023 = vsub.s32 4, %v3022
          %v3024 = vrot.slane %v3000, %v3023
          %v3025 = vlaneseq
          %v3026 = vshrl.u32 %v3025, 7
          %v3027 = vsub.s32 5, %v3026
          %v3028 = vrot.slane %v3000, %v3027
          %v3029 = vlaneseq
          %v3030 = vshrl.u32 %v3029, 7
          %v3031 = vsub.s32 6, %v3030
          %v3032 = vrot.slane %v3000, %v3031
          %v3033 = vlaneseq
          %v3034 = vshrl.u32 %v3033, 7
          %v3035 = vsub.s32 7, %v3034
          %v3036 = vrot.slane %v3000, %v3035
          %v3037 = vlaneseq
          %v3038 = vshrl.u32 %v3037, 7
          %v3039 = vsub.s32 0, %v3038
          %v3040 = vrot.slane %v3002, %v3039
          %v3041 = vlaneseq
          %v3042 = vshrl.u32 %v3041, 7
          %v3043 = vsub.s32 1, %v3042
          %v3044 = vrot.slane %v3002, %v3043
          %v3045 = vlaneseq
          %v3046 = vshrl.u32 %v3045, 7
          %v3047 = vsub.s32 2, %v3046
          %v3048 = vrot.slane %v3002, %v3047
          %v3049 = vlaneseq
          %v3050 = vshrl.u32 %v3049, 7
          %v3051 = vsub.s32 3, %v3050
          %v3052 = vrot.slane %v3002, %v3051
          %v3053 = vlaneseq
          %v3054 = vshrl.u32 %v3053, 7
          %v3055 = vsub.s32 4, %v3054
          %v3056 = vrot.slane %v3002, %v3055
          %v3057 = vlaneseq
          %v3058 = vshrl.u32 %v3057, 7
          %v3059 = vsub.s32 5, %v3058
          %v3060 = vrot.slane %v3002, %v3059
          %v3061 = vlaneseq
          %v3062 = vshrl.u32 %v3061, 7
          %v3063 = vsub.s32 6, %v3062
          %v3064 = vrot.slane %v3002, %v3063
          %v3065 = vlaneseq
          %v3066 = vshrl.u32 %v3065, 7
          %v3067 = vsub.s32 7, %v3066
          %v3068 = vrot.slane %v3002, %v3067
          %v3069 = vcombine.low %v3008, %v3012
          %v3070 = vcombine.low %v3016, %v3020
          %v3072 = vunpack.c.l.s4 1983009808
          %v3073 = vunpack.c.0.s8 %v3072
          %v3074 = vlaneseq
          %v3075 = vshrl.u32 %v3074, 7
          %v3076 = vsub.s32 %v3073, %v3075
          %v3077 = vrot.slane %v3069, %v3076
          %v3079 = vunpack.c.l.s4 1983009808
          %v3080 = vunpack.c.0.s8 %v3079
          %v3081 = vlaneseq
          %v3082 = vshrl.u32 %v3081, 7
          %v3083 = vsub.s32 %v3080, %v3082
          %v3084 = vrot.slane %v3070, %v3083
          %v3085 = vcombine.low %v3077, %v3084
          %v3086 = vcombine.low %v3024, %v3028
          %v3087 = vcombine.low %v3032, %v3036
          %v3089 = vunpack.c.l.s4 1983009808
          %v3090 = vunpack.c.0.s8 %v3089
          %v3091 = vlaneseq
          %v3092 = vshrl.u32 %v3091, 7
          %v3093 = vsub.s32 %v3090, %v3092
          %v3094 = vrot.slane %v3086, %v3093
          %v3096 = vunpack.c.l.s4 1983009808
          %v3097 = vunpack.c.0.s8 %v3096
          %v3098 = vlaneseq
          %v3099 = vshrl.u32 %v3098, 7
          %v3100 = vsub.s32 %v3097, %v3099
          %v3101 = vrot.slane %v3087, %v3100
          %v3102 = vcombine.low %v3094, %v3101
          %v3103 = vcombine.low %v3040, %v3044
          %v3104 = vcombine.low %v3048, %v3052
          %v3106 = vunpack.c.l.s4 1983009808
          %v3107 = vunpack.c.0.s8 %v3106
          %v3108 = vlaneseq
          %v3109 = vshrl.u32 %v3108, 7
          %v3110 = vsub.s32 %v3107, %v3109
          %v3111 = vrot.slane %v3103, %v3110
          %v3113 = vunpack.c.l.s4 1983009808
          %v3114 = vunpack.c.0.s8 %v3113
          %v3115 = vlaneseq
          %v3116 = vshrl.u32 %v3115, 7
          %v3117 = vsub.s32 %v3114, %v3116
          %v3118 = vrot.slane %v3104, %v3117
          %v3119 = vcombine.low %v3111, %v3118
          %v3120 = vcombine.low %v3056, %v3060
          %v3121 = vcombine.low %v3064, %v3068
          %v3123 = vunpack.c.l.s4 1983009808
          %v3124 = vunpack.c.0.s8 %v3123
          %v3125 = vlaneseq
          %v3126 = vshrl.u32 %v3125, 7
          %v3127 = vsub.s32 %v3124, %v3126
          %v3128 = vrot.slane %v3120, %v3127
          %v3130 = vunpack.c.l.s4 1983009808
          %v3131 = vunpack.c.0.s8 %v3130
          %v3132 = vlaneseq
          %v3133 = vshrl.u32 %v3132, 7
          %v3134 = vsub.s32 %v3131, %v3133
          %v3135 = vrot.slane %v3121, %v3134
          %v3136 = vcombine.low %v3128, %v3135
          %v3141 = vmul.f32 %v2995, %v3085
          %v3142 = vmul.f32 %v2996, %v3102
          %v3143 = vmul.f32 %v2997, %v3119
          %v3144 = vmul.f32 %v2998, %v3136
          %s3145 = scalar_lea.vmem [#allocation14], 65
          %v3146 = vld [vmem:[%s3145] ss:$2 sm:$0xff]
          %s3147 = scalar_lea.vmem [#allocation14], 81
          %v3148 = vld [vmem:[%s3147] ss:$2 sm:$0xff]
          %v3151 = vlaneseq
          %v3152 = vshrl.u32 %v3151, 7
          %v3153 = vsub.s32 0, %v3152
          %v3154 = vrot.slane %v3146, %v3153
          %v3155 = vlaneseq
          %v3156 = vshrl.u32 %v3155, 7
          %v3157 = vsub.s32 1, %v3156
          %v3158 = vrot.slane %v3146, %v3157
          %v3159 = vlaneseq
          %v3160 = vshrl.u32 %v3159, 7
          %v3161 = vsub.s32 2, %v3160
          %v3162 = vrot.slane %v3146, %v3161
          %v3163 = vlaneseq
          %v3164 = vshrl.u32 %v3163, 7
          %v3165 = vsub.s32 3, %v3164
          %v3166 = vrot.slane %v3146, %v3165
          %v3167 = vlaneseq
          %v3168 = vshrl.u32 %v3167, 7
          %v3169 = vsub.s32 4, %v3168
          %v3170 = vrot.slane %v3146, %v3169
          %v3171 = vlaneseq
          %v3172 = vshrl.u32 %v3171, 7
          %v3173 = vsub.s32 5, %v3172
          %v3174 = vrot.slane %v3146, %v3173
          %v3175 = vlaneseq
          %v3176 = vshrl.u32 %v3175, 7
          %v3177 = vsub.s32 6, %v3176
          %v3178 = vrot.slane %v3146, %v3177
          %v3179 = vlaneseq
          %v3180 = vshrl.u32 %v3179, 7
          %v3181 = vsub.s32 7, %v3180
          %v3182 = vrot.slane %v3146, %v3181
          %v3183 = vlaneseq
          %v3184 = vshrl.u32 %v3183, 7
          %v3185 = vsub.s32 0, %v3184
          %v3186 = vrot.slane %v3148, %v3185
          %v3187 = vlaneseq
          %v3188 = vshrl.u32 %v3187, 7
          %v3189 = vsub.s32 1, %v3188
          %v3190 = vrot.slane %v3148, %v3189
          %v3191 = vlaneseq
          %v3192 = vshrl.u32 %v3191, 7
          %v3193 = vsub.s32 2, %v3192
          %v3194 = vrot.slane %v3148, %v3193
          %v3195 = vlaneseq
          %v3196 = vshrl.u32 %v3195, 7
          %v3197 = vsub.s32 3, %v3196
          %v3198 = vrot.slane %v3148, %v3197
          %v3199 = vlaneseq
          %v3200 = vshrl.u32 %v3199, 7
          %v3201 = vsub.s32 4, %v3200
          %v3202 = vrot.slane %v3148, %v3201
          %v3203 = vlaneseq
          %v3204 = vshrl.u32 %v3203, 7
          %v3205 = vsub.s32 5, %v3204
          %v3206 = vrot.slane %v3148, %v3205
          %v3207 = vlaneseq
          %v3208 = vshrl.u32 %v3207, 7
          %v3209 = vsub.s32 6, %v3208
          %v3210 = vrot.slane %v3148, %v3209
          %v3211 = vlaneseq
          %v3212 = vshrl.u32 %v3211, 7
          %v3213 = vsub.s32 7, %v3212
          %v3214 = vrot.slane %v3148, %v3213
          %v3215 = vcombine.low %v3154, %v3158
          %v3216 = vcombine.low %v3162, %v3166
          %v3218 = vunpack.c.l.s4 1983009808
          %v3219 = vunpack.c.0.s8 %v3218
          %v3220 = vlaneseq
          %v3221 = vshrl.u32 %v3220, 7
          %v3222 = vsub.s32 %v3219, %v3221
          %v3223 = vrot.slane %v3215, %v3222
          %v3225 = vunpack.c.l.s4 1983009808
          %v3226 = vunpack.c.0.s8 %v3225
          %v3227 = vlaneseq
          %v3228 = vshrl.u32 %v3227, 7
          %v3229 = vsub.s32 %v3226, %v3228
          %v3230 = vrot.slane %v3216, %v3229
          %v3231 = vcombine.low %v3223, %v3230
          %v3232 = vcombine.low %v3170, %v3174
          %v3233 = vcombine.low %v3178, %v3182
          %v3235 = vunpack.c.l.s4 1983009808
          %v3236 = vunpack.c.0.s8 %v3235
          %v3237 = vlaneseq
          %v3238 = vshrl.u32 %v3237, 7
          %v3239 = vsub.s32 %v3236, %v3238
          %v3240 = vrot.slane %v3232, %v3239
          %v3242 = vunpack.c.l.s4 1983009808
          %v3243 = vunpack.c.0.s8 %v3242
          %v3244 = vlaneseq
          %v3245 = vshrl.u32 %v3244, 7
          %v3246 = vsub.s32 %v3243, %v3245
          %v3247 = vrot.slane %v3233, %v3246
          %v3248 = vcombine.low %v3240, %v3247
          %v3249 = vcombine.low %v3186, %v3190
          %v3250 = vcombine.low %v3194, %v3198
          %v3252 = vunpack.c.l.s4 1983009808
          %v3253 = vunpack.c.0.s8 %v3252
          %v3254 = vlaneseq
          %v3255 = vshrl.u32 %v3254, 7
          %v3256 = vsub.s32 %v3253, %v3255
          %v3257 = vrot.slane %v3249, %v3256
          %v3259 = vunpack.c.l.s4 1983009808
          %v3260 = vunpack.c.0.s8 %v3259
          %v3261 = vlaneseq
          %v3262 = vshrl.u32 %v3261, 7
          %v3263 = vsub.s32 %v3260, %v3262
          %v3264 = vrot.slane %v3250, %v3263
          %v3265 = vcombine.low %v3257, %v3264
          %v3266 = vcombine.low %v3202, %v3206
          %v3267 = vcombine.low %v3210, %v3214
          %v3269 = vunpack.c.l.s4 1983009808
          %v3270 = vunpack.c.0.s8 %v3269
          %v3271 = vlaneseq
          %v3272 = vshrl.u32 %v3271, 7
          %v3273 = vsub.s32 %v3270, %v3272
          %v3274 = vrot.slane %v3266, %v3273
          %v3276 = vunpack.c.l.s4 1983009808
          %v3277 = vunpack.c.0.s8 %v3276
          %v3278 = vlaneseq
          %v3279 = vshrl.u32 %v3278, 7
          %v3280 = vsub.s32 %v3277, %v3279
          %v3281 = vrot.slane %v3267, %v3280
          %v3282 = vcombine.low %v3274, %v3281
          %v3287 = vadd.f32 %v3141, %v3231
          %v3288 = vadd.f32 %v3142, %v3248
          %v3289 = vadd.f32 %v3143, %v3265
          %v3290 = vadd.f32 %v3144, %v3282
          %3291 = vst [vmem:[#allocation15 + $0x40] sm:$0xff] %v3287
          %3292 = vst [vmem:[#allocation15 + $0x48] sm:$0xff] %v3288
          %3293 = vst [vmem:[#allocation15 + $0x50] sm:$0xff] %v3289
          %3294 = vst [vmem:[#allocation15 + $0x58] sm:$0xff] %v3290
          %v3295 = vld [vmem:[#allocation15 + $0x60] sm:$0xff]
          %v3296 = vld [vmem:[#allocation15 + $0x68] sm:$0xff]
          %v3297 = vld [vmem:[#allocation15 + $0x70] sm:$0xff]
          %v3298 = vld [vmem:[#allocation15 + $0x78] sm:$0xff]
          %v3299 = vsub.f32 %v3295, %v2362
          %v3300 = vsub.f32 %v3296, %v2362
          %v3301 = vsub.f32 %v3297, %v2362
          %v3302 = vsub.f32 %v3298, %v2362
          %v3303 = vmul.f32 %v3299, %v2378
          %v3304 = vmul.f32 %v3300, %v2378
          %v3305 = vmul.f32 %v3301, %v2378
          %v3306 = vmul.f32 %v3302, %v2378
          %s3307 = scalar_lea.vmem [#allocation14], 96
          %v3308 = vld [vmem:[%s3307] ss:$2 sm:$0xff]
          %s3309 = scalar_lea.vmem [#allocation14], 112
          %v3310 = vld [vmem:[%s3309] ss:$2 sm:$0xff]
          %v3313 = vlaneseq
          %v3314 = vshrl.u32 %v3313, 7
          %v3315 = vsub.s32 0, %v3314
          %v3316 = vrot.slane %v3308, %v3315
          %v3317 = vlaneseq
          %v3318 = vshrl.u32 %v3317, 7
          %v3319 = vsub.s32 1, %v3318
          %v3320 = vrot.slane %v3308, %v3319
          %v3321 = vlaneseq
          %v3322 = vshrl.u32 %v3321, 7
          %v3323 = vsub.s32 2, %v3322
          %v3324 = vrot.slane %v3308, %v3323
          %v3325 = vlaneseq
          %v3326 = vshrl.u32 %v3325, 7
          %v3327 = vsub.s32 3, %v3326
          %v3328 = vrot.slane %v3308, %v3327
          %v3329 = vlaneseq
          %v3330 = vshrl.u32 %v3329, 7
          %v3331 = vsub.s32 4, %v3330
          %v3332 = vrot.slane %v3308, %v3331
          %v3333 = vlaneseq
          %v3334 = vshrl.u32 %v3333, 7
          %v3335 = vsub.s32 5, %v3334
          %v3336 = vrot.slane %v3308, %v3335
          %v3337 = vlaneseq
          %v3338 = vshrl.u32 %v3337, 7
          %v3339 = vsub.s32 6, %v3338
          %v3340 = vrot.slane %v3308, %v3339
          %v3341 = vlaneseq
          %v3342 = vshrl.u32 %v3341, 7
          %v3343 = vsub.s32 7, %v3342
          %v3344 = vrot.slane %v3308, %v3343
          %v3345 = vlaneseq
          %v3346 = vshrl.u32 %v3345, 7
          %v3347 = vsub.s32 0, %v3346
          %v3348 = vrot.slane %v3310, %v3347
          %v3349 = vlaneseq
          %v3350 = vshrl.u32 %v3349, 7
          %v3351 = vsub.s32 1, %v3350
          %v3352 = vrot.slane %v3310, %v3351
          %v3353 = vlaneseq
          %v3354 = vshrl.u32 %v3353, 7
          %v3355 = vsub.s32 2, %v3354
          %v3356 = vrot.slane %v3310, %v3355
          %v3357 = vlaneseq
          %v3358 = vshrl.u32 %v3357, 7
          %v3359 = vsub.s32 3, %v3358
          %v3360 = vrot.slane %v3310, %v3359
          %v3361 = vlaneseq
          %v3362 = vshrl.u32 %v3361, 7
          %v3363 = vsub.s32 4, %v3362
          %v3364 = vrot.slane %v3310, %v3363
          %v3365 = vlaneseq
          %v3366 = vshrl.u32 %v3365, 7
          %v3367 = vsub.s32 5, %v3366
          %v3368 = vrot.slane %v3310, %v3367
          %v3369 = vlaneseq
          %v3370 = vshrl.u32 %v3369, 7
          %v3371 = vsub.s32 6, %v3370
          %v3372 = vrot.slane %v3310, %v3371
          %v3373 = vlaneseq
          %v3374 = vshrl.u32 %v3373, 7
          %v3375 = vsub.s32 7, %v3374
          %v3376 = vrot.slane %v3310, %v3375
          %v3377 = vcombine.low %v3316, %v3320
          %v3378 = vcombine.low %v3324, %v3328
          %v3380 = vunpack.c.l.s4 1983009808
          %v3381 = vunpack.c.0.s8 %v3380
          %v3382 = vlaneseq
          %v3383 = vshrl.u32 %v3382, 7
          %v3384 = vsub.s32 %v3381, %v3383
          %v3385 = vrot.slane %v3377, %v3384
          %v3387 = vunpack.c.l.s4 1983009808
          %v3388 = vunpack.c.0.s8 %v3387
          %v3389 = vlaneseq
          %v3390 = vshrl.u32 %v3389, 7
          %v3391 = vsub.s32 %v3388, %v3390
          %v3392 = vrot.slane %v3378, %v3391
          %v3393 = vcombine.low %v3385, %v3392
          %v3394 = vcombine.low %v3332, %v3336
          %v3395 = vcombine.low %v3340, %v3344
          %v3397 = vunpack.c.l.s4 1983009808
          %v3398 = vunpack.c.0.s8 %v3397
          %v3399 = vlaneseq
          %v3400 = vshrl.u32 %v3399, 7
          %v3401 = vsub.s32 %v3398, %v3400
          %v3402 = vrot.slane %v3394, %v3401
          %v3404 = vunpack.c.l.s4 1983009808
          %v3405 = vunpack.c.0.s8 %v3404
          %v3406 = vlaneseq
          %v3407 = vshrl.u32 %v3406, 7
          %v3408 = vsub.s32 %v3405, %v3407
          %v3409 = vrot.slane %v3395, %v3408
          %v3410 = vcombine.low %v3402, %v3409
          %v3411 = vcombine.low %v3348, %v3352
          %v3412 = vcombine.low %v3356, %v3360
          %v3414 = vunpack.c.l.s4 1983009808
          %v3415 = vunpack.c.0.s8 %v3414
          %v3416 = vlaneseq
          %v3417 = vshrl.u32 %v3416, 7
          %v3418 = vsub.s32 %v3415, %v3417
          %v3419 = vrot.slane %v3411, %v3418
          %v3421 = vunpack.c.l.s4 1983009808
          %v3422 = vunpack.c.0.s8 %v3421
          %v3423 = vlaneseq
          %v3424 = vshrl.u32 %v3423, 7
          %v3425 = vsub.s32 %v3422, %v3424
          %v3426 = vrot.slane %v3412, %v3425
          %v3427 = vcombine.low %v3419, %v3426
          %v3428 = vcombine.low %v3364, %v3368
          %v3429 = vcombine.low %v3372, %v3376
          %v3431 = vunpack.c.l.s4 1983009808
          %v3432 = vunpack.c.0.s8 %v3431
          %v3433 = vlaneseq
          %v3434 = vshrl.u32 %v3433, 7
          %v3435 = vsub.s32 %v3432, %v3434
          %v3436 = vrot.slane %v3428, %v3435
          %v3438 = vunpack.c.l.s4 1983009808
          %v3439 = vunpack.c.0.s8 %v3438
          %v3440 = vlaneseq
          %v3441 = vshrl.u32 %v3440, 7
          %v3442 = vsub.s32 %v3439, %v3441
          %v3443 = vrot.slane %v3429, %v3442
          %v3444 = vcombine.low %v3436, %v3443
          %v3449 = vmul.f32 %v3303, %v3393
          %v3450 = vmul.f32 %v3304, %v3410
          %v3451 = vmul.f32 %v3305, %v3427
          %v3452 = vmul.f32 %v3306, %v3444
          %s3453 = scalar_lea.vmem [#allocation14], 97
          %v3454 = vld [vmem:[%s3453] ss:$2 sm:$0xff]
          %s3455 = scalar_lea.vmem [#allocation14], 113
          %v3456 = vld [vmem:[%s3455] ss:$2 sm:$0xff]
          %v3459 = vlaneseq
          %v3460 = vshrl.u32 %v3459, 7
          %v3461 = vsub.s32 0, %v3460
          %v3462 = vrot.slane %v3454, %v3461
          %v3463 = vlaneseq
          %v3464 = vshrl.u32 %v3463, 7
          %v3465 = vsub.s32 1, %v3464
          %v3466 = vrot.slane %v3454, %v3465
          %v3467 = vlaneseq
          %v3468 = vshrl.u32 %v3467, 7
          %v3469 = vsub.s32 2, %v3468
          %v3470 = vrot.slane %v3454, %v3469
          %v3471 = vlaneseq
          %v3472 = vshrl.u32 %v3471, 7
          %v3473 = vsub.s32 3, %v3472
          %v3474 = vrot.slane %v3454, %v3473
          %v3475 = vlaneseq
          %v3476 = vshrl.u32 %v3475, 7
          %v3477 = vsub.s32 4, %v3476
          %v3478 = vrot.slane %v3454, %v3477
          %v3479 = vlaneseq
          %v3480 = vshrl.u32 %v3479, 7
          %v3481 = vsub.s32 5, %v3480
          %v3482 = vrot.slane %v3454, %v3481
          %v3483 = vlaneseq
          %v3484 = vshrl.u32 %v3483, 7
          %v3485 = vsub.s32 6, %v3484
          %v3486 = vrot.slane %v3454, %v3485
          %v3487 = vlaneseq
          %v3488 = vshrl.u32 %v3487, 7
          %v3489 = vsub.s32 7, %v3488
          %v3490 = vrot.slane %v3454, %v3489
          %v3491 = vlaneseq
          %v3492 = vshrl.u32 %v3491, 7
          %v3493 = vsub.s32 0, %v3492
          %v3494 = vrot.slane %v3456, %v3493
          %v3495 = vlaneseq
          %v3496 = vshrl.u32 %v3495, 7
          %v3497 = vsub.s32 1, %v3496
          %v3498 = vrot.slane %v3456, %v3497
          %v3499 = vlaneseq
          %v3500 = vshrl.u32 %v3499, 7
          %v3501 = vsub.s32 2, %v3500
          %v3502 = vrot.slane %v3456, %v3501
          %v3503 = vlaneseq
          %v3504 = vshrl.u32 %v3503, 7
          %v3505 = vsub.s32 3, %v3504
          %v3506 = vrot.slane %v3456, %v3505
          %v3507 = vlaneseq
          %v3508 = vshrl.u32 %v3507, 7
          %v3509 = vsub.s32 4, %v3508
          %v3510 = vrot.slane %v3456, %v3509
          %v3511 = vlaneseq
          %v3512 = vshrl.u32 %v3511, 7
          %v3513 = vsub.s32 5, %v3512
          %v3514 = vrot.slane %v3456, %v3513
          %v3515 = vlaneseq
          %v3516 = vshrl.u32 %v3515, 7
          %v3517 = vsub.s32 6, %v3516
          %v3518 = vrot.slane %v3456, %v3517
          %v3519 = vlaneseq
          %v3520 = vshrl.u32 %v3519, 7
          %v3521 = vsub.s32 7, %v3520
          %v3522 = vrot.slane %v3456, %v3521
          %v3523 = vcombine.low %v3462, %v3466
          %v3524 = vcombine.low %v3470, %v3474
          %v3526 = vunpack.c.l.s4 1983009808
          %v3527 = vunpack.c.0.s8 %v3526
          %v3528 = vlaneseq
          %v3529 = vshrl.u32 %v3528, 7
          %v3530 = vsub.s32 %v3527, %v3529
          %v3531 = vrot.slane %v3523, %v3530
          %v3533 = vunpack.c.l.s4 1983009808
          %v3534 = vunpack.c.0.s8 %v3533
          %v3535 = vlaneseq
          %v3536 = vshrl.u32 %v3535, 7
          %v3537 = vsub.s32 %v3534, %v3536
          %v3538 = vrot.slane %v3524, %v3537
          %v3539 = vcombine.low %v3531, %v3538
          %v3540 = vcombine.low %v3478, %v3482
          %v3541 = vcombine.low %v3486, %v3490
          %v3543 = vunpack.c.l.s4 1983009808
          %v3544 = vunpack.c.0.s8 %v3543
          %v3545 = vlaneseq
          %v3546 = vshrl.u32 %v3545, 7
          %v3547 = vsub.s32 %v3544, %v3546
          %v3548 = vrot.slane %v3540, %v3547
          %v3550 = vunpack.c.l.s4 1983009808
          %v3551 = vunpack.c.0.s8 %v3550
          %v3552 = vlaneseq
          %v3553 = vshrl.u32 %v3552, 7
          %v3554 = vsub.s32 %v3551, %v3553
          %v3555 = vrot.slane %v3541, %v3554
          %v3556 = vcombine.low %v3548, %v3555
          %v3557 = vcombine.low %v3494, %v3498
          %v3558 = vcombine.low %v3502, %v3506
          %v3560 = vunpack.c.l.s4 1983009808
          %v3561 = vunpack.c.0.s8 %v3560
          %v3562 = vlaneseq
          %v3563 = vshrl.u32 %v3562, 7
          %v3564 = vsub.s32 %v3561, %v3563
          %v3565 = vrot.slane %v3557, %v3564
          %v3567 = vunpack.c.l.s4 1983009808
          %v3568 = vunpack.c.0.s8 %v3567
          %v3569 = vlaneseq
          %v3570 = vshrl.u32 %v3569, 7
          %v3571 = vsub.s32 %v3568, %v3570
          %v3572 = vrot.slane %v3558, %v3571
          %v3573 = vcombine.low %v3565, %v3572
          %v3574 = vcombine.low %v3510, %v3514
          %v3575 = vcombine.low %v3518, %v3522
          %v3577 = vunpack.c.l.s4 1983009808
          %v3578 = vunpack.c.0.s8 %v3577
          %v3579 = vlaneseq
          %v3580 = vshrl.u32 %v3579, 7
          %v3581 = vsub.s32 %v3578, %v3580
          %v3582 = vrot.slane %v3574, %v3581
          %v3584 = vunpack.c.l.s4 1983009808
          %v3585 = vunpack.c.0.s8 %v3584
          %v3586 = vlaneseq
          %v3587 = vshrl.u32 %v3586, 7
          %v3588 = vsub.s32 %v3585, %v3587
          %v3589 = vrot.slane %v3575, %v3588
          %v3590 = vcombine.low %v3582, %v3589
          %v3595 = vadd.f32 %v3449, %v3539
          %v3596 = vadd.f32 %v3450, %v3556
          %v3597 = vadd.f32 %v3451, %v3573
          %v3598 = vadd.f32 %v3452, %v3590
          %3599 = vst [vmem:[#allocation15 + $0x60] sm:$0xff] %v3595
          %3600 = vst [vmem:[#allocation15 + $0x68] sm:$0xff] %v3596
          %3601 = vst [vmem:[#allocation15 + $0x70] sm:$0xff] %v3597
          %3602 = vst [vmem:[#allocation15 + $0x78] sm:$0xff] %v3598
          %v3603 = vld [vmem:[#allocation15 + $0x80] sm:$0xff]
          %v3604 = vld [vmem:[#allocation15 + $0x88] sm:$0xff]
          %v3605 = vld [vmem:[#allocation15 + $0x90] sm:$0xff]
          %v3606 = vld [vmem:[#allocation15 + $0x98] sm:$0xff]
          %v3607 = vsub.f32 %v3603, %v2362
          %v3608 = vsub.f32 %v3604, %v2362
          %v3609 = vsub.f32 %v3605, %v2362
          %v3610 = vsub.f32 %v3606, %v2362
          %v3611 = vmul.f32 %v3607, %v2378
          %v3612 = vmul.f32 %v3608, %v2378
          %v3613 = vmul.f32 %v3609, %v2378
          %v3614 = vmul.f32 %v3610, %v2378
          %s3615 = scalar_lea.vmem [#allocation14], 128
          %v3616 = vld [vmem:[%s3615] ss:$2 sm:$0xff]
          %s3617 = scalar_lea.vmem [#allocation14], 144
          %v3618 = vld [vmem:[%s3617] ss:$2 sm:$0xff]
          %v3621 = vlaneseq
          %v3622 = vshrl.u32 %v3621, 7
          %v3623 = vsub.s32 0, %v3622
          %v3624 = vrot.slane %v3616, %v3623
          %v3625 = vlaneseq
          %v3626 = vshrl.u32 %v3625, 7
          %v3627 = vsub.s32 1, %v3626
          %v3628 = vrot.slane %v3616, %v3627
          %v3629 = vlaneseq
          %v3630 = vshrl.u32 %v3629, 7
          %v3631 = vsub.s32 2, %v3630
          %v3632 = vrot.slane %v3616, %v3631
          %v3633 = vlaneseq
          %v3634 = vshrl.u32 %v3633, 7
          %v3635 = vsub.s32 3, %v3634
          %v3636 = vrot.slane %v3616, %v3635
          %v3637 = vlaneseq
          %v3638 = vshrl.u32 %v3637, 7
          %v3639 = vsub.s32 4, %v3638
          %v3640 = vrot.slane %v3616, %v3639
          %v3641 = vlaneseq
          %v3642 = vshrl.u32 %v3641, 7
          %v3643 = vsub.s32 5, %v3642
          %v3644 = vrot.slane %v3616, %v3643
          %v3645 = vlaneseq
          %v3646 = vshrl.u32 %v3645, 7
          %v3647 = vsub.s32 6, %v3646
          %v3648 = vrot.slane %v3616, %v3647
          %v3649 = vlaneseq
          %v3650 = vshrl.u32 %v3649, 7
          %v3651 = vsub.s32 7, %v3650
          %v3652 = vrot.slane %v3616, %v3651
          %v3653 = vlaneseq
          %v3654 = vshrl.u32 %v3653, 7
          %v3655 = vsub.s32 0, %v3654
          %v3656 = vrot.slane %v3618, %v3655
          %v3657 = vlaneseq
          %v3658 = vshrl.u32 %v3657, 7
          %v3659 = vsub.s32 1, %v3658
          %v3660 = vrot.slane %v3618, %v3659
          %v3661 = vlaneseq
          %v3662 = vshrl.u32 %v3661, 7
          %v3663 = vsub.s32 2, %v3662
          %v3664 = vrot.slane %v3618, %v3663
          %v3665 = vlaneseq
          %v3666 = vshrl.u32 %v3665, 7
          %v3667 = vsub.s32 3, %v3666
          %v3668 = vrot.slane %v3618, %v3667
          %v3669 = vlaneseq
          %v3670 = vshrl.u32 %v3669, 7
          %v3671 = vsub.s32 4, %v3670
          %v3672 = vrot.slane %v3618, %v3671
          %v3673 = vlaneseq
          %v3674 = vshrl.u32 %v3673, 7
          %v3675 = vsub.s32 5, %v3674
          %v3676 = vrot.slane %v3618, %v3675
          %v3677 = vlaneseq
          %v3678 = vshrl.u32 %v3677, 7
          %v3679 = vsub.s32 6, %v3678
          %v3680 = vrot.slane %v3618, %v3679
          %v3681 = vlaneseq
          %v3682 = vshrl.u32 %v3681, 7
          %v3683 = vsub.s32 7, %v3682
          %v3684 = vrot.slane %v3618, %v3683
          %v3685 = vcombine.low %v3624, %v3628
          %v3686 = vcombine.low %v3632, %v3636
          %v3688 = vunpack.c.l.s4 1983009808
          %v3689 = vunpack.c.0.s8 %v3688
          %v3690 = vlaneseq
          %v3691 = vshrl.u32 %v3690, 7
          %v3692 = vsub.s32 %v3689, %v3691
          %v3693 = vrot.slane %v3685, %v3692
          %v3695 = vunpack.c.l.s4 1983009808
          %v3696 = vunpack.c.0.s8 %v3695
          %v3697 = vlaneseq
          %v3698 = vshrl.u32 %v3697, 7
          %v3699 = vsub.s32 %v3696, %v3698
          %v3700 = vrot.slane %v3686, %v3699
          %v3701 = vcombine.low %v3693, %v3700
          %v3702 = vcombine.low %v3640, %v3644
          %v3703 = vcombine.low %v3648, %v3652
          %v3705 = vunpack.c.l.s4 1983009808
          %v3706 = vunpack.c.0.s8 %v3705
          %v3707 = vlaneseq
          %v3708 = vshrl.u32 %v3707, 7
          %v3709 = vsub.s32 %v3706, %v3708
          %v3710 = vrot.slane %v3702, %v3709
          %v3712 = vunpack.c.l.s4 1983009808
          %v3713 = vunpack.c.0.s8 %v3712
          %v3714 = vlaneseq
          %v3715 = vshrl.u32 %v3714, 7
          %v3716 = vsub.s32 %v3713, %v3715
          %v3717 = vrot.slane %v3703, %v3716
          %v3718 = vcombine.low %v3710, %v3717
          %v3719 = vcombine.low %v3656, %v3660
          %v3720 = vcombine.low %v3664, %v3668
          %v3722 = vunpack.c.l.s4 1983009808
          %v3723 = vunpack.c.0.s8 %v3722
          %v3724 = vlaneseq
          %v3725 = vshrl.u32 %v3724, 7
          %v3726 = vsub.s32 %v3723, %v3725
          %v3727 = vrot.slane %v3719, %v3726
          %v3729 = vunpack.c.l.s4 1983009808
          %v3730 = vunpack.c.0.s8 %v3729
          %v3731 = vlaneseq
          %v3732 = vshrl.u32 %v3731, 7
          %v3733 = vsub.s32 %v3730, %v3732
          %v3734 = vrot.slane %v3720, %v3733
          %v3735 = vcombine.low %v3727, %v3734
          %v3736 = vcombine.low %v3672, %v3676
          %v3737 = vcombine.low %v3680, %v3684
          %v3739 = vunpack.c.l.s4 1983009808
          %v3740 = vunpack.c.0.s8 %v3739
          %v3741 = vlaneseq
          %v3742 = vshrl.u32 %v3741, 7
          %v3743 = vsub.s32 %v3740, %v3742
          %v3744 = vrot.slane %v3736, %v3743
          %v3746 = vunpack.c.l.s4 1983009808
          %v3747 = vunpack.c.0.s8 %v3746
          %v3748 = vlaneseq
          %v3749 = vshrl.u32 %v3748, 7
          %v3750 = vsub.s32 %v3747, %v3749
          %v3751 = vrot.slane %v3737, %v3750
          %v3752 = vcombine.low %v3744, %v3751
          %v3757 = vmul.f32 %v3611, %v3701
          %v3758 = vmul.f32 %v3612, %v3718
          %v3759 = vmul.f32 %v3613, %v3735
          %v3760 = vmul.f32 %v3614, %v3752
          %s3761 = scalar_lea.vmem [#allocation14], 129
          %v3762 = vld [vmem:[%s3761] ss:$2 sm:$0xff]
          %s3763 = scalar_lea.vmem [#allocation14], 145
          %v3764 = vld [vmem:[%s3763] ss:$2 sm:$0xff]
          %v3767 = vlaneseq
          %v3768 = vshrl.u32 %v3767, 7
          %v3769 = vsub.s32 0, %v3768
          %v3770 = vrot.slane %v3762, %v3769
          %v3771 = vlaneseq
          %v3772 = vshrl.u32 %v3771, 7
          %v3773 = vsub.s32 1, %v3772
          %v3774 = vrot.slane %v3762, %v3773
          %v3775 = vlaneseq
          %v3776 = vshrl.u32 %v3775, 7
          %v3777 = vsub.s32 2, %v3776
          %v3778 = vrot.slane %v3762, %v3777
          %v3779 = vlaneseq
          %v3780 = vshrl.u32 %v3779, 7
          %v3781 = vsub.s32 3, %v3780
          %v3782 = vrot.slane %v3762, %v3781
          %v3783 = vlaneseq
          %v3784 = vshrl.u32 %v3783, 7
          %v3785 = vsub.s32 4, %v3784
          %v3786 = vrot.slane %v3762, %v3785
          %v3787 = vlaneseq
          %v3788 = vshrl.u32 %v3787, 7
          %v3789 = vsub.s32 5, %v3788
          %v3790 = vrot.slane %v3762, %v3789
          %v3791 = vlaneseq
          %v3792 = vshrl.u32 %v3791, 7
          %v3793 = vsub.s32 6, %v3792
          %v3794 = vrot.slane %v3762, %v3793
          %v3795 = vlaneseq
          %v3796 = vshrl.u32 %v3795, 7
          %v3797 = vsub.s32 7, %v3796
          %v3798 = vrot.slane %v3762, %v3797
          %v3799 = vlaneseq
          %v3800 = vshrl.u32 %v3799, 7
          %v3801 = vsub.s32 0, %v3800
          %v3802 = vrot.slane %v3764, %v3801
          %v3803 = vlaneseq
          %v3804 = vshrl.u32 %v3803, 7
          %v3805 = vsub.s32 1, %v3804
          %v3806 = vrot.slane %v3764, %v3805
          %v3807 = vlaneseq
          %v3808 = vshrl.u32 %v3807, 7
          %v3809 = vsub.s32 2, %v3808
          %v3810 = vrot.slane %v3764, %v3809
          %v3811 = vlaneseq
          %v3812 = vshrl.u32 %v3811, 7
          %v3813 = vsub.s32 3, %v3812
          %v3814 = vrot.slane %v3764, %v3813
          %v3815 = vlaneseq
          %v3816 = vshrl.u32 %v3815, 7
          %v3817 = vsub.s32 4, %v3816
          %v3818 = vrot.slane %v3764, %v3817
          %v3819 = vlaneseq
          %v3820 = vshrl.u32 %v3819, 7
          %v3821 = vsub.s32 5, %v3820
          %v3822 = vrot.slane %v3764, %v3821
          %v3823 = vlaneseq
          %v3824 = vshrl.u32 %v3823, 7
          %v3825 = vsub.s32 6, %v3824
          %v3826 = vrot.slane %v3764, %v3825
          %v3827 = vlaneseq
          %v3828 = vshrl.u32 %v3827, 7
          %v3829 = vsub.s32 7, %v3828
          %v3830 = vrot.slane %v3764, %v3829
          %v3831 = vcombine.low %v3770, %v3774
          %v3832 = vcombine.low %v3778, %v3782
          %v3834 = vunpack.c.l.s4 1983009808
          %v3835 = vunpack.c.0.s8 %v3834
          %v3836 = vlaneseq
          %v3837 = vshrl.u32 %v3836, 7
          %v3838 = vsub.s32 %v3835, %v3837
          %v3839 = vrot.slane %v3831, %v3838
          %v3841 = vunpack.c.l.s4 1983009808
          %v3842 = vunpack.c.0.s8 %v3841
          %v3843 = vlaneseq
          %v3844 = vshrl.u32 %v3843, 7
          %v3845 = vsub.s32 %v3842, %v3844
          %v3846 = vrot.slane %v3832, %v3845
          %v3847 = vcombine.low %v3839, %v3846
          %v3848 = vcombine.low %v3786, %v3790
          %v3849 = vcombine.low %v3794, %v3798
          %v3851 = vunpack.c.l.s4 1983009808
          %v3852 = vunpack.c.0.s8 %v3851
          %v3853 = vlaneseq
          %v3854 = vshrl.u32 %v3853, 7
          %v3855 = vsub.s32 %v3852, %v3854
          %v3856 = vrot.slane %v3848, %v3855
          %v3858 = vunpack.c.l.s4 1983009808
          %v3859 = vunpack.c.0.s8 %v3858
          %v3860 = vlaneseq
          %v3861 = vshrl.u32 %v3860, 7
          %v3862 = vsub.s32 %v3859, %v3861
          %v3863 = vrot.slane %v3849, %v3862
          %v3864 = vcombine.low %v3856, %v3863
          %v3865 = vcombine.low %v3802, %v3806
          %v3866 = vcombine.low %v3810, %v3814
          %v3868 = vunpack.c.l.s4 1983009808
          %v3869 = vunpack.c.0.s8 %v3868
          %v3870 = vlaneseq
          %v3871 = vshrl.u32 %v3870, 7
          %v3872 = vsub.s32 %v3869, %v3871
          %v3873 = vrot.slane %v3865, %v3872
          %v3875 = vunpack.c.l.s4 1983009808
          %v3876 = vunpack.c.0.s8 %v3875
          %v3877 = vlaneseq
          %v3878 = vshrl.u32 %v3877, 7
          %v3879 = vsub.s32 %v3876, %v3878
          %v3880 = vrot.slane %v3866, %v3879
          %v3881 = vcombine.low %v3873, %v3880
          %v3882 = vcombine.low %v3818, %v3822
          %v3883 = vcombine.low %v3826, %v3830
          %v3885 = vunpack.c.l.s4 1983009808
          %v3886 = vunpack.c.0.s8 %v3885
          %v3887 = vlaneseq
          %v3888 = vshrl.u32 %v3887, 7
          %v3889 = vsub.s32 %v3886, %v3888
          %v3890 = vrot.slane %v3882, %v3889
          %v3892 = vunpack.c.l.s4 1983009808
          %v3893 = vunpack.c.0.s8 %v3892
          %v3894 = vlaneseq
          %v3895 = vshrl.u32 %v3894, 7
          %v3896 = vsub.s32 %v3893, %v3895
          %v3897 = vrot.slane %v3883, %v3896
          %v3898 = vcombine.low %v3890, %v3897
          %v3903 = vadd.f32 %v3757, %v3847
          %v3904 = vadd.f32 %v3758, %v3864
          %v3905 = vadd.f32 %v3759, %v3881
          %v3906 = vadd.f32 %v3760, %v3898
          %3907 = vst [vmem:[#allocation15 + $0x80] sm:$0xff] %v3903
          %3908 = vst [vmem:[#allocation15 + $0x88] sm:$0xff] %v3904
          %3909 = vst [vmem:[#allocation15 + $0x90] sm:$0xff] %v3905
          %3910 = vst [vmem:[#allocation15 + $0x98] sm:$0xff] %v3906
          %v3911 = vld [vmem:[#allocation15 + $0xa0] sm:$0xff]
          %v3912 = vld [vmem:[#allocation15 + $0xa8] sm:$0xff]
          %v3913 = vld [vmem:[#allocation15 + $0xb0] sm:$0xff]
          %v3914 = vld [vmem:[#allocation15 + $0xb8] sm:$0xff]
          %v3915 = vsub.f32 %v3911, %v2362
          %v3916 = vsub.f32 %v3912, %v2362
          %v3917 = vsub.f32 %v3913, %v2362
          %v3918 = vsub.f32 %v3914, %v2362
          %v3919 = vmul.f32 %v3915, %v2378
          %v3920 = vmul.f32 %v3916, %v2378
          %v3921 = vmul.f32 %v3917, %v2378
          %v3922 = vmul.f32 %v3918, %v2378
          %s3923 = scalar_lea.vmem [#allocation14], 160
          %v3924 = vld [vmem:[%s3923] ss:$2 sm:$0xff]
          %s3925 = scalar_lea.vmem [#allocation14], 176
          %v3926 = vld [vmem:[%s3925] ss:$2 sm:$0xff]
          %v3929 = vlaneseq
          %v3930 = vshrl.u32 %v3929, 7
          %v3931 = vsub.s32 0, %v3930
          %v3932 = vrot.slane %v3924, %v3931
          %v3933 = vlaneseq
          %v3934 = vshrl.u32 %v3933, 7
          %v3935 = vsub.s32 1, %v3934
          %v3936 = vrot.slane %v3924, %v3935
          %v3937 = vlaneseq
          %v3938 = vshrl.u32 %v3937, 7
          %v3939 = vsub.s32 2, %v3938
          %v3940 = vrot.slane %v3924, %v3939
          %v3941 = vlaneseq
          %v3942 = vshrl.u32 %v3941, 7
          %v3943 = vsub.s32 3, %v3942
          %v3944 = vrot.slane %v3924, %v3943
          %v3945 = vlaneseq
          %v3946 = vshrl.u32 %v3945, 7
          %v3947 = vsub.s32 4, %v3946
          %v3948 = vrot.slane %v3924, %v3947
          %v3949 = vlaneseq
          %v3950 = vshrl.u32 %v3949, 7
          %v3951 = vsub.s32 5, %v3950
          %v3952 = vrot.slane %v3924, %v3951
          %v3953 = vlaneseq
          %v3954 = vshrl.u32 %v3953, 7
          %v3955 = vsub.s32 6, %v3954
          %v3956 = vrot.slane %v3924, %v3955
          %v3957 = vlaneseq
          %v3958 = vshrl.u32 %v3957, 7
          %v3959 = vsub.s32 7, %v3958
          %v3960 = vrot.slane %v3924, %v3959
          %v3961 = vlaneseq
          %v3962 = vshrl.u32 %v3961, 7
          %v3963 = vsub.s32 0, %v3962
          %v3964 = vrot.slane %v3926, %v3963
          %v3965 = vlaneseq
          %v3966 = vshrl.u32 %v3965, 7
          %v3967 = vsub.s32 1, %v3966
          %v3968 = vrot.slane %v3926, %v3967
          %v3969 = vlaneseq
          %v3970 = vshrl.u32 %v3969, 7
          %v3971 = vsub.s32 2, %v3970
          %v3972 = vrot.slane %v3926, %v3971
          %v3973 = vlaneseq
          %v3974 = vshrl.u32 %v3973, 7
          %v3975 = vsub.s32 3, %v3974
          %v3976 = vrot.slane %v3926, %v3975
          %v3977 = vlaneseq
          %v3978 = vshrl.u32 %v3977, 7
          %v3979 = vsub.s32 4, %v3978
          %v3980 = vrot.slane %v3926, %v3979
          %v3981 = vlaneseq
          %v3982 = vshrl.u32 %v3981, 7
          %v3983 = vsub.s32 5, %v3982
          %v3984 = vrot.slane %v3926, %v3983
          %v3985 = vlaneseq
          %v3986 = vshrl.u32 %v3985, 7
          %v3987 = vsub.s32 6, %v3986
          %v3988 = vrot.slane %v3926, %v3987
          %v3989 = vlaneseq
          %v3990 = vshrl.u32 %v3989, 7
          %v3991 = vsub.s32 7, %v3990
          %v3992 = vrot.slane %v3926, %v3991
          %v3993 = vcombine.low %v3932, %v3936
          %v3994 = vcombine.low %v3940, %v3944
          %v3996 = vunpack.c.l.s4 1983009808
          %v3997 = vunpack.c.0.s8 %v3996
          %v3998 = vlaneseq
          %v3999 = vshrl.u32 %v3998, 7
          %v4000 = vsub.s32 %v3997, %v3999
          %v4001 = vrot.slane %v3993, %v4000
          %v4003 = vunpack.c.l.s4 1983009808
          %v4004 = vunpack.c.0.s8 %v4003
          %v4005 = vlaneseq
          %v4006 = vshrl.u32 %v4005, 7
          %v4007 = vsub.s32 %v4004, %v4006
          %v4008 = vrot.slane %v3994, %v4007
          %v4009 = vcombine.low %v4001, %v4008
          %v4010 = vcombine.low %v3948, %v3952
          %v4011 = vcombine.low %v3956, %v3960
          %v4013 = vunpack.c.l.s4 1983009808
          %v4014 = vunpack.c.0.s8 %v4013
          %v4015 = vlaneseq
          %v4016 = vshrl.u32 %v4015, 7
          %v4017 = vsub.s32 %v4014, %v4016
          %v4018 = vrot.slane %v4010, %v4017
          %v4020 = vunpack.c.l.s4 1983009808
          %v4021 = vunpack.c.0.s8 %v4020
          %v4022 = vlaneseq
          %v4023 = vshrl.u32 %v4022, 7
          %v4024 = vsub.s32 %v4021, %v4023
          %v4025 = vrot.slane %v4011, %v4024
          %v4026 = vcombine.low %v4018, %v4025
          %v4027 = vcombine.low %v3964, %v3968
          %v4028 = vcombine.low %v3972, %v3976
          %v4030 = vunpack.c.l.s4 1983009808
          %v4031 = vunpack.c.0.s8 %v4030
          %v4032 = vlaneseq
          %v4033 = vshrl.u32 %v4032, 7
          %v4034 = vsub.s32 %v4031, %v4033
          %v4035 = vrot.slane %v4027, %v4034
          %v4037 = vunpack.c.l.s4 1983009808
          %v4038 = vunpack.c.0.s8 %v4037
          %v4039 = vlaneseq
          %v4040 = vshrl.u32 %v4039, 7
          %v4041 = vsub.s32 %v4038, %v4040
          %v4042 = vrot.slane %v4028, %v4041
          %v4043 = vcombine.low %v4035, %v4042
          %v4044 = vcombine.low %v3980, %v3984
          %v4045 = vcombine.low %v3988, %v3992
          %v4047 = vunpack.c.l.s4 1983009808
          %v4048 = vunpack.c.0.s8 %v4047
          %v4049 = vlaneseq
          %v4050 = vshrl.u32 %v4049, 7
          %v4051 = vsub.s32 %v4048, %v4050
          %v4052 = vrot.slane %v4044, %v4051
          %v4054 = vunpack.c.l.s4 1983009808
          %v4055 = vunpack.c.0.s8 %v4054
          %v4056 = vlaneseq
          %v4057 = vshrl.u32 %v4056, 7
          %v4058 = vsub.s32 %v4055, %v4057
          %v4059 = vrot.slane %v4045, %v4058
          %v4060 = vcombine.low %v4052, %v4059
          %v4065 = vmul.f32 %v3919, %v4009
          %v4066 = vmul.f32 %v3920, %v4026
          %v4067 = vmul.f32 %v3921, %v4043
          %v4068 = vmul.f32 %v3922, %v4060
          %s4069 = scalar_lea.vmem [#allocation14], 161
          %v4070 = vld [vmem:[%s4069] ss:$2 sm:$0xff]
          %s4071 = scalar_lea.vmem [#allocation14], 177
          %v4072 = vld [vmem:[%s4071] ss:$2 sm:$0xff]
          %v4075 = vlaneseq
          %v4076 = vshrl.u32 %v4075, 7
          %v4077 = vsub.s32 0, %v4076
          %v4078 = vrot.slane %v4070, %v4077
          %v4079 = vlaneseq
          %v4080 = vshrl.u32 %v4079, 7
          %v4081 = vsub.s32 1, %v4080
          %v4082 = vrot.slane %v4070, %v4081
          %v4083 = vlaneseq
          %v4084 = vshrl.u32 %v4083, 7
          %v4085 = vsub.s32 2, %v4084
          %v4086 = vrot.slane %v4070, %v4085
          %v4087 = vlaneseq
          %v4088 = vshrl.u32 %v4087, 7
          %v4089 = vsub.s32 3, %v4088
          %v4090 = vrot.slane %v4070, %v4089
          %v4091 = vlaneseq
          %v4092 = vshrl.u32 %v4091, 7
          %v4093 = vsub.s32 4, %v4092
          %v4094 = vrot.slane %v4070, %v4093
          %v4095 = vlaneseq
          %v4096 = vshrl.u32 %v4095, 7
          %v4097 = vsub.s32 5, %v4096
          %v4098 = vrot.slane %v4070, %v4097
          %v4099 = vlaneseq
          %v4100 = vshrl.u32 %v4099, 7
          %v4101 = vsub.s32 6, %v4100
          %v4102 = vrot.slane %v4070, %v4101
          %v4103 = vlaneseq
          %v4104 = vshrl.u32 %v4103, 7
          %v4105 = vsub.s32 7, %v4104
          %v4106 = vrot.slane %v4070, %v4105
          %v4107 = vlaneseq
          %v4108 = vshrl.u32 %v4107, 7
          %v4109 = vsub.s32 0, %v4108
          %v4110 = vrot.slane %v4072, %v4109
          %v4111 = vlaneseq
          %v4112 = vshrl.u32 %v4111, 7
          %v4113 = vsub.s32 1, %v4112
          %v4114 = vrot.slane %v4072, %v4113
          %v4115 = vlaneseq
          %v4116 = vshrl.u32 %v4115, 7
          %v4117 = vsub.s32 2, %v4116
          %v4118 = vrot.slane %v4072, %v4117
          %v4119 = vlaneseq
          %v4120 = vshrl.u32 %v4119, 7
          %v4121 = vsub.s32 3, %v4120
          %v4122 = vrot.slane %v4072, %v4121
          %v4123 = vlaneseq
          %v4124 = vshrl.u32 %v4123, 7
          %v4125 = vsub.s32 4, %v4124
          %v4126 = vrot.slane %v4072, %v4125
          %v4127 = vlaneseq
          %v4128 = vshrl.u32 %v4127, 7
          %v4129 = vsub.s32 5, %v4128
          %v4130 = vrot.slane %v4072, %v4129
          %v4131 = vlaneseq
          %v4132 = vshrl.u32 %v4131, 7
          %v4133 = vsub.s32 6, %v4132
          %v4134 = vrot.slane %v4072, %v4133
          %v4135 = vlaneseq
          %v4136 = vshrl.u32 %v4135, 7
          %v4137 = vsub.s32 7, %v4136
          %v4138 = vrot.slane %v4072, %v4137
          %v4139 = vcombine.low %v4078, %v4082
          %v4140 = vcombine.low %v4086, %v4090
          %v4142 = vunpack.c.l.s4 1983009808
          %v4143 = vunpack.c.0.s8 %v4142
          %v4144 = vlaneseq
          %v4145 = vshrl.u32 %v4144, 7
          %v4146 = vsub.s32 %v4143, %v4145
          %v4147 = vrot.slane %v4139, %v4146
          %v4149 = vunpack.c.l.s4 1983009808
          %v4150 = vunpack.c.0.s8 %v4149
          %v4151 = vlaneseq
          %v4152 = vshrl.u32 %v4151, 7
          %v4153 = vsub.s32 %v4150, %v4152
          %v4154 = vrot.slane %v4140, %v4153
          %v4155 = vcombine.low %v4147, %v4154
          %v4156 = vcombine.low %v4094, %v4098
          %v4157 = vcombine.low %v4102, %v4106
          %v4159 = vunpack.c.l.s4 1983009808
          %v4160 = vunpack.c.0.s8 %v4159
          %v4161 = vlaneseq
          %v4162 = vshrl.u32 %v4161, 7
          %v4163 = vsub.s32 %v4160, %v4162
          %v4164 = vrot.slane %v4156, %v4163
          %v4166 = vunpack.c.l.s4 1983009808
          %v4167 = vunpack.c.0.s8 %v4166
          %v4168 = vlaneseq
          %v4169 = vshrl.u32 %v4168, 7
          %v4170 = vsub.s32 %v4167, %v4169
          %v4171 = vrot.slane %v4157, %v4170
          %v4172 = vcombine.low %v4164, %v4171
          %v4173 = vcombine.low %v4110, %v4114
          %v4174 = vcombine.low %v4118, %v4122
          %v4176 = vunpack.c.l.s4 1983009808
          %v4177 = vunpack.c.0.s8 %v4176
          %v4178 = vlaneseq
          %v4179 = vshrl.u32 %v4178, 7
          %v4180 = vsub.s32 %v4177, %v4179
          %v4181 = vrot.slane %v4173, %v4180
          %v4183 = vunpack.c.l.s4 1983009808
          %v4184 = vunpack.c.0.s8 %v4183
          %v4185 = vlaneseq
          %v4186 = vshrl.u32 %v4185, 7
          %v4187 = vsub.s32 %v4184, %v4186
          %v4188 = vrot.slane %v4174, %v4187
          %v4189 = vcombine.low %v4181, %v4188
          %v4190 = vcombine.low %v4126, %v4130
          %v4191 = vcombine.low %v4134, %v4138
          %v4193 = vunpack.c.l.s4 1983009808
          %v4194 = vunpack.c.0.s8 %v4193
          %v4195 = vlaneseq
          %v4196 = vshrl.u32 %v4195, 7
          %v4197 = vsub.s32 %v4194, %v4196
          %v4198 = vrot.slane %v4190, %v4197
          %v4200 = vunpack.c.l.s4 1983009808
          %v4201 = vunpack.c.0.s8 %v4200
          %v4202 = vlaneseq
          %v4203 = vshrl.u32 %v4202, 7
          %v4204 = vsub.s32 %v4201, %v4203
          %v4205 = vrot.slane %v4191, %v4204
          %v4206 = vcombine.low %v4198, %v4205
          %v4211 = vadd.f32 %v4065, %v4155
          %v4212 = vadd.f32 %v4066, %v4172
          %v4213 = vadd.f32 %v4067, %v4189
          %v4214 = vadd.f32 %v4068, %v4206
          %4215 = vst [vmem:[#allocation15 + $0xa0] sm:$0xff] %v4211
          %4216 = vst [vmem:[#allocation15 + $0xa8] sm:$0xff] %v4212
          %4217 = vst [vmem:[#allocation15 + $0xb0] sm:$0xff] %v4213
          %4218 = vst [vmem:[#allocation15 + $0xb8] sm:$0xff] %v4214
          %v4219 = vld [vmem:[#allocation15 + $0xc0] sm:$0xff]
          %v4220 = vld [vmem:[#allocation15 + $0xc8] sm:$0xff]
          %v4221 = vld [vmem:[#allocation15 + $0xd0] sm:$0xff]
          %v4222 = vld [vmem:[#allocation15 + $0xd8] sm:$0xff]
          %v4223 = vsub.f32 %v4219, %v2362
          %v4224 = vsub.f32 %v4220, %v2362
          %v4225 = vsub.f32 %v4221, %v2362
          %v4226 = vsub.f32 %v4222, %v2362
          %v4227 = vmul.f32 %v4223, %v2378
          %v4228 = vmul.f32 %v4224, %v2378
          %v4229 = vmul.f32 %v4225, %v2378
          %v4230 = vmul.f32 %v4226, %v2378
          %s4231 = scalar_lea.vmem [#allocation14], 192
          %v4232 = vld [vmem:[%s4231] ss:$2 sm:$0xff]
          %s4233 = scalar_lea.vmem [#allocation14], 208
          %v4234 = vld [vmem:[%s4233] ss:$2 sm:$0xff]
          %v4237 = vlaneseq
          %v4238 = vshrl.u32 %v4237, 7
          %v4239 = vsub.s32 0, %v4238
          %v4240 = vrot.slane %v4232, %v4239
          %v4241 = vlaneseq
          %v4242 = vshrl.u32 %v4241, 7
          %v4243 = vsub.s32 1, %v4242
          %v4244 = vrot.slane %v4232, %v4243
          %v4245 = vlaneseq
          %v4246 = vshrl.u32 %v4245, 7
          %v4247 = vsub.s32 2, %v4246
          %v4248 = vrot.slane %v4232, %v4247
          %v4249 = vlaneseq
          %v4250 = vshrl.u32 %v4249, 7
          %v4251 = vsub.s32 3, %v4250
          %v4252 = vrot.slane %v4232, %v4251
          %v4253 = vlaneseq
          %v4254 = vshrl.u32 %v4253, 7
          %v4255 = vsub.s32 4, %v4254
          %v4256 = vrot.slane %v4232, %v4255
          %v4257 = vlaneseq
          %v4258 = vshrl.u32 %v4257, 7
          %v4259 = vsub.s32 5, %v4258
          %v4260 = vrot.slane %v4232, %v4259
          %v4261 = vlaneseq
          %v4262 = vshrl.u32 %v4261, 7
          %v4263 = vsub.s32 6, %v4262
          %v4264 = vrot.slane %v4232, %v4263
          %v4265 = vlaneseq
          %v4266 = vshrl.u32 %v4265, 7
          %v4267 = vsub.s32 7, %v4266
          %v4268 = vrot.slane %v4232, %v4267
          %v4269 = vlaneseq
          %v4270 = vshrl.u32 %v4269, 7
          %v4271 = vsub.s32 0, %v4270
          %v4272 = vrot.slane %v4234, %v4271
          %v4273 = vlaneseq
          %v4274 = vshrl.u32 %v4273, 7
          %v4275 = vsub.s32 1, %v4274
          %v4276 = vrot.slane %v4234, %v4275
          %v4277 = vlaneseq
          %v4278 = vshrl.u32 %v4277, 7
          %v4279 = vsub.s32 2, %v4278
          %v4280 = vrot.slane %v4234, %v4279
          %v4281 = vlaneseq
          %v4282 = vshrl.u32 %v4281, 7
          %v4283 = vsub.s32 3, %v4282
          %v4284 = vrot.slane %v4234, %v4283
          %v4285 = vlaneseq
          %v4286 = vshrl.u32 %v4285, 7
          %v4287 = vsub.s32 4, %v4286
          %v4288 = vrot.slane %v4234, %v4287
          %v4289 = vlaneseq
          %v4290 = vshrl.u32 %v4289, 7
          %v4291 = vsub.s32 5, %v4290
          %v4292 = vrot.slane %v4234, %v4291
          %v4293 = vlaneseq
          %v4294 = vshrl.u32 %v4293, 7
          %v4295 = vsub.s32 6, %v4294
          %v4296 = vrot.slane %v4234, %v4295
          %v4297 = vlaneseq
          %v4298 = vshrl.u32 %v4297, 7
          %v4299 = vsub.s32 7, %v4298
          %v4300 = vrot.slane %v4234, %v4299
          %v4301 = vcombine.low %v4240, %v4244
          %v4302 = vcombine.low %v4248, %v4252
          %v4304 = vunpack.c.l.s4 1983009808
          %v4305 = vunpack.c.0.s8 %v4304
          %v4306 = vlaneseq
          %v4307 = vshrl.u32 %v4306, 7
          %v4308 = vsub.s32 %v4305, %v4307
          %v4309 = vrot.slane %v4301, %v4308
          %v4311 = vunpack.c.l.s4 1983009808
          %v4312 = vunpack.c.0.s8 %v4311
          %v4313 = vlaneseq
          %v4314 = vshrl.u32 %v4313, 7
          %v4315 = vsub.s32 %v4312, %v4314
          %v4316 = vrot.slane %v4302, %v4315
          %v4317 = vcombine.low %v4309, %v4316
          %v4318 = vcombine.low %v4256, %v4260
          %v4319 = vcombine.low %v4264, %v4268
          %v4321 = vunpack.c.l.s4 1983009808
          %v4322 = vunpack.c.0.s8 %v4321
          %v4323 = vlaneseq
          %v4324 = vshrl.u32 %v4323, 7
          %v4325 = vsub.s32 %v4322, %v4324
          %v4326 = vrot.slane %v4318, %v4325
          %v4328 = vunpack.c.l.s4 1983009808
          %v4329 = vunpack.c.0.s8 %v4328
          %v4330 = vlaneseq
          %v4331 = vshrl.u32 %v4330, 7
          %v4332 = vsub.s32 %v4329, %v4331
          %v4333 = vrot.slane %v4319, %v4332
          %v4334 = vcombine.low %v4326, %v4333
          %v4335 = vcombine.low %v4272, %v4276
          %v4336 = vcombine.low %v4280, %v4284
          %v4338 = vunpack.c.l.s4 1983009808
          %v4339 = vunpack.c.0.s8 %v4338
          %v4340 = vlaneseq
          %v4341 = vshrl.u32 %v4340, 7
          %v4342 = vsub.s32 %v4339, %v4341
          %v4343 = vrot.slane %v4335, %v4342
          %v4345 = vunpack.c.l.s4 1983009808
          %v4346 = vunpack.c.0.s8 %v4345
          %v4347 = vlaneseq
          %v4348 = vshrl.u32 %v4347, 7
          %v4349 = vsub.s32 %v4346, %v4348
          %v4350 = vrot.slane %v4336, %v4349
          %v4351 = vcombine.low %v4343, %v4350
          %v4352 = vcombine.low %v4288, %v4292
          %v4353 = vcombine.low %v4296, %v4300
          %v4355 = vunpack.c.l.s4 1983009808
          %v4356 = vunpack.c.0.s8 %v4355
          %v4357 = vlaneseq
          %v4358 = vshrl.u32 %v4357, 7
          %v4359 = vsub.s32 %v4356, %v4358
          %v4360 = vrot.slane %v4352, %v4359
          %v4362 = vunpack.c.l.s4 1983009808
          %v4363 = vunpack.c.0.s8 %v4362
          %v4364 = vlaneseq
          %v4365 = vshrl.u32 %v4364, 7
          %v4366 = vsub.s32 %v4363, %v4365
          %v4367 = vrot.slane %v4353, %v4366
          %v4368 = vcombine.low %v4360, %v4367
          %v4373 = vmul.f32 %v4227, %v4317
          %v4374 = vmul.f32 %v4228, %v4334
          %v4375 = vmul.f32 %v4229, %v4351
          %v4376 = vmul.f32 %v4230, %v4368
          %s4377 = scalar_lea.vmem [#allocation14], 193
          %v4378 = vld [vmem:[%s4377] ss:$2 sm:$0xff]
          %s4379 = scalar_lea.vmem [#allocation14], 209
          %v4380 = vld [vmem:[%s4379] ss:$2 sm:$0xff]
          %v4383 = vlaneseq
          %v4384 = vshrl.u32 %v4383, 7
          %v4385 = vsub.s32 0, %v4384
          %v4386 = vrot.slane %v4378, %v4385
          %v4387 = vlaneseq
          %v4388 = vshrl.u32 %v4387, 7
          %v4389 = vsub.s32 1, %v4388
          %v4390 = vrot.slane %v4378, %v4389
          %v4391 = vlaneseq
          %v4392 = vshrl.u32 %v4391, 7
          %v4393 = vsub.s32 2, %v4392
          %v4394 = vrot.slane %v4378, %v4393
          %v4395 = vlaneseq
          %v4396 = vshrl.u32 %v4395, 7
          %v4397 = vsub.s32 3, %v4396
          %v4398 = vrot.slane %v4378, %v4397
          %v4399 = vlaneseq
          %v4400 = vshrl.u32 %v4399, 7
          %v4401 = vsub.s32 4, %v4400
          %v4402 = vrot.slane %v4378, %v4401
          %v4403 = vlaneseq
          %v4404 = vshrl.u32 %v4403, 7
          %v4405 = vsub.s32 5, %v4404
          %v4406 = vrot.slane %v4378, %v4405
          %v4407 = vlaneseq
          %v4408 = vshrl.u32 %v4407, 7
          %v4409 = vsub.s32 6, %v4408
          %v4410 = vrot.slane %v4378, %v4409
          %v4411 = vlaneseq
          %v4412 = vshrl.u32 %v4411, 7
          %v4413 = vsub.s32 7, %v4412
          %v4414 = vrot.slane %v4378, %v4413
          %v4415 = vlaneseq
          %v4416 = vshrl.u32 %v4415, 7
          %v4417 = vsub.s32 0, %v4416
          %v4418 = vrot.slane %v4380, %v4417
          %v4419 = vlaneseq
          %v4420 = vshrl.u32 %v4419, 7
          %v4421 = vsub.s32 1, %v4420
          %v4422 = vrot.slane %v4380, %v4421
          %v4423 = vlaneseq
          %v4424 = vshrl.u32 %v4423, 7
          %v4425 = vsub.s32 2, %v4424
          %v4426 = vrot.slane %v4380, %v4425
          %v4427 = vlaneseq
          %v4428 = vshrl.u32 %v4427, 7
          %v4429 = vsub.s32 3, %v4428
          %v4430 = vrot.slane %v4380, %v4429
          %v4431 = vlaneseq
          %v4432 = vshrl.u32 %v4431, 7
          %v4433 = vsub.s32 4, %v4432
          %v4434 = vrot.slane %v4380, %v4433
          %v4435 = vlaneseq
          %v4436 = vshrl.u32 %v4435, 7
          %v4437 = vsub.s32 5, %v4436
          %v4438 = vrot.slane %v4380, %v4437
          %v4439 = vlaneseq
          %v4440 = vshrl.u32 %v4439, 7
          %v4441 = vsub.s32 6, %v4440
          %v4442 = vrot.slane %v4380, %v4441
          %v4443 = vlaneseq
          %v4444 = vshrl.u32 %v4443, 7
          %v4445 = vsub.s32 7, %v4444
          %v4446 = vrot.slane %v4380, %v4445
          %v4447 = vcombine.low %v4386, %v4390
          %v4448 = vcombine.low %v4394, %v4398
          %v4450 = vunpack.c.l.s4 1983009808
          %v4451 = vunpack.c.0.s8 %v4450
          %v4452 = vlaneseq
          %v4453 = vshrl.u32 %v4452, 7
          %v4454 = vsub.s32 %v4451, %v4453
          %v4455 = vrot.slane %v4447, %v4454
          %v4457 = vunpack.c.l.s4 1983009808
          %v4458 = vunpack.c.0.s8 %v4457
          %v4459 = vlaneseq
          %v4460 = vshrl.u32 %v4459, 7
          %v4461 = vsub.s32 %v4458, %v4460
          %v4462 = vrot.slane %v4448, %v4461
          %v4463 = vcombine.low %v4455, %v4462
          %v4464 = vcombine.low %v4402, %v4406
          %v4465 = vcombine.low %v4410, %v4414
          %v4467 = vunpack.c.l.s4 1983009808
          %v4468 = vunpack.c.0.s8 %v4467
          %v4469 = vlaneseq
          %v4470 = vshrl.u32 %v4469, 7
          %v4471 = vsub.s32 %v4468, %v4470
          %v4472 = vrot.slane %v4464, %v4471
          %v4474 = vunpack.c.l.s4 1983009808
          %v4475 = vunpack.c.0.s8 %v4474
          %v4476 = vlaneseq
          %v4477 = vshrl.u32 %v4476, 7
          %v4478 = vsub.s32 %v4475, %v4477
          %v4479 = vrot.slane %v4465, %v4478
          %v4480 = vcombine.low %v4472, %v4479
          %v4481 = vcombine.low %v4418, %v4422
          %v4482 = vcombine.low %v4426, %v4430
          %v4484 = vunpack.c.l.s4 1983009808
          %v4485 = vunpack.c.0.s8 %v4484
          %v4486 = vlaneseq
          %v4487 = vshrl.u32 %v4486, 7
          %v4488 = vsub.s32 %v4485, %v4487
          %v4489 = vrot.slane %v4481, %v4488
          %v4491 = vunpack.c.l.s4 1983009808
          %v4492 = vunpack.c.0.s8 %v4491
          %v4493 = vlaneseq
          %v4494 = vshrl.u32 %v4493, 7
          %v4495 = vsub.s32 %v4492, %v4494
          %v4496 = vrot.slane %v4482, %v4495
          %v4497 = vcombine.low %v4489, %v4496
          %v4498 = vcombine.low %v4434, %v4438
          %v4499 = vcombine.low %v4442, %v4446
          %v4501 = vunpack.c.l.s4 1983009808
          %v4502 = vunpack.c.0.s8 %v4501
          %v4503 = vlaneseq
          %v4504 = vshrl.u32 %v4503, 7
          %v4505 = vsub.s32 %v4502, %v4504
          %v4506 = vrot.slane %v4498, %v4505
          %v4508 = vunpack.c.l.s4 1983009808
          %v4509 = vunpack.c.0.s8 %v4508
          %v4510 = vlaneseq
          %v4511 = vshrl.u32 %v4510, 7
          %v4512 = vsub.s32 %v4509, %v4511
          %v4513 = vrot.slane %v4499, %v4512
          %v4514 = vcombine.low %v4506, %v4513
          %v4519 = vadd.f32 %v4373, %v4463
          %v4520 = vadd.f32 %v4374, %v4480
          %v4521 = vadd.f32 %v4375, %v4497
          %v4522 = vadd.f32 %v4376, %v4514
          %4523 = vst [vmem:[#allocation15 + $0xc0] sm:$0xff] %v4519
          %4524 = vst [vmem:[#allocation15 + $0xc8] sm:$0xff] %v4520
          %4525 = vst [vmem:[#allocation15 + $0xd0] sm:$0xff] %v4521
          %4526 = vst [vmem:[#allocation15 + $0xd8] sm:$0xff] %v4522
          %v4527 = vld [vmem:[#allocation15 + $0xe0] sm:$0xff]
          %v4528 = vld [vmem:[#allocation15 + $0xe8] sm:$0xff]
          %v4529 = vld [vmem:[#allocation15 + $0xf0] sm:$0xff]
          %v4530 = vld [vmem:[#allocation15 + $0xf8] sm:$0xff]
          %v4531 = vsub.f32 %v4527, %v2362
          %v4532 = vsub.f32 %v4528, %v2362
          %v4533 = vsub.f32 %v4529, %v2362
          %v4534 = vsub.f32 %v4530, %v2362
          %v4535 = vmul.f32 %v4531, %v2378
          %v4536 = vmul.f32 %v4532, %v2378
          %v4537 = vmul.f32 %v4533, %v2378
          %v4538 = vmul.f32 %v4534, %v2378
          %s4539 = scalar_lea.vmem [#allocation14], 224
          %v4540 = vld [vmem:[%s4539] ss:$2 sm:$0xff]
          %s4541 = scalar_lea.vmem [#allocation14], 240
          %v4542 = vld [vmem:[%s4541] ss:$2 sm:$0xff]
          %v4545 = vlaneseq
          %v4546 = vshrl.u32 %v4545, 7
          %v4547 = vsub.s32 0, %v4546
          %v4548 = vrot.slane %v4540, %v4547
          %v4549 = vlaneseq
          %v4550 = vshrl.u32 %v4549, 7
          %v4551 = vsub.s32 1, %v4550
          %v4552 = vrot.slane %v4540, %v4551
          %v4553 = vlaneseq
          %v4554 = vshrl.u32 %v4553, 7
          %v4555 = vsub.s32 2, %v4554
          %v4556 = vrot.slane %v4540, %v4555
          %v4557 = vlaneseq
          %v4558 = vshrl.u32 %v4557, 7
          %v4559 = vsub.s32 3, %v4558
          %v4560 = vrot.slane %v4540, %v4559
          %v4561 = vlaneseq
          %v4562 = vshrl.u32 %v4561, 7
          %v4563 = vsub.s32 4, %v4562
          %v4564 = vrot.slane %v4540, %v4563
          %v4565 = vlaneseq
          %v4566 = vshrl.u32 %v4565, 7
          %v4567 = vsub.s32 5, %v4566
          %v4568 = vrot.slane %v4540, %v4567
          %v4569 = vlaneseq
          %v4570 = vshrl.u32 %v4569, 7
          %v4571 = vsub.s32 6, %v4570
          %v4572 = vrot.slane %v4540, %v4571
          %v4573 = vlaneseq
          %v4574 = vshrl.u32 %v4573, 7
          %v4575 = vsub.s32 7, %v4574
          %v4576 = vrot.slane %v4540, %v4575
          %v4577 = vlaneseq
          %v4578 = vshrl.u32 %v4577, 7
          %v4579 = vsub.s32 0, %v4578
          %v4580 = vrot.slane %v4542, %v4579
          %v4581 = vlaneseq
          %v4582 = vshrl.u32 %v4581, 7
          %v4583 = vsub.s32 1, %v4582
          %v4584 = vrot.slane %v4542, %v4583
          %v4585 = vlaneseq
          %v4586 = vshrl.u32 %v4585, 7
          %v4587 = vsub.s32 2, %v4586
          %v4588 = vrot.slane %v4542, %v4587
          %v4589 = vlaneseq
          %v4590 = vshrl.u32 %v4589, 7
          %v4591 = vsub.s32 3, %v4590
          %v4592 = vrot.slane %v4542, %v4591
          %v4593 = vlaneseq
          %v4594 = vshrl.u32 %v4593, 7
          %v4595 = vsub.s32 4, %v4594
          %v4596 = vrot.slane %v4542, %v4595
          %v4597 = vlaneseq
          %v4598 = vshrl.u32 %v4597, 7
          %v4599 = vsub.s32 5, %v4598
          %v4600 = vrot.slane %v4542, %v4599
          %v4601 = vlaneseq
          %v4602 = vshrl.u32 %v4601, 7
          %v4603 = vsub.s32 6, %v4602
          %v4604 = vrot.slane %v4542, %v4603
          %v4605 = vlaneseq
          %v4606 = vshrl.u32 %v4605, 7
          %v4607 = vsub.s32 7, %v4606
          %v4608 = vrot.slane %v4542, %v4607
          %v4609 = vcombine.low %v4548, %v4552
          %v4610 = vcombine.low %v4556, %v4560
          %v4612 = vunpack.c.l.s4 1983009808
          %v4613 = vunpack.c.0.s8 %v4612
          %v4614 = vlaneseq
          %v4615 = vshrl.u32 %v4614, 7
          %v4616 = vsub.s32 %v4613, %v4615
          %v4617 = vrot.slane %v4609, %v4616
          %v4619 = vunpack.c.l.s4 1983009808
          %v4620 = vunpack.c.0.s8 %v4619
          %v4621 = vlaneseq
          %v4622 = vshrl.u32 %v4621, 7
          %v4623 = vsub.s32 %v4620, %v4622
          %v4624 = vrot.slane %v4610, %v4623
          %v4625 = vcombine.low %v4617, %v4624
          %v4626 = vcombine.low %v4564, %v4568
          %v4627 = vcombine.low %v4572, %v4576
          %v4629 = vunpack.c.l.s4 1983009808
          %v4630 = vunpack.c.0.s8 %v4629
          %v4631 = vlaneseq
          %v4632 = vshrl.u32 %v4631, 7
          %v4633 = vsub.s32 %v4630, %v4632
          %v4634 = vrot.slane %v4626, %v4633
          %v4636 = vunpack.c.l.s4 1983009808
          %v4637 = vunpack.c.0.s8 %v4636
          %v4638 = vlaneseq
          %v4639 = vshrl.u32 %v4638, 7
          %v4640 = vsub.s32 %v4637, %v4639
          %v4641 = vrot.slane %v4627, %v4640
          %v4642 = vcombine.low %v4634, %v4641
          %v4643 = vcombine.low %v4580, %v4584
          %v4644 = vcombine.low %v4588, %v4592
          %v4646 = vunpack.c.l.s4 1983009808
          %v4647 = vunpack.c.0.s8 %v4646
          %v4648 = vlaneseq
          %v4649 = vshrl.u32 %v4648, 7
          %v4650 = vsub.s32 %v4647, %v4649
          %v4651 = vrot.slane %v4643, %v4650
          %v4653 = vunpack.c.l.s4 1983009808
          %v4654 = vunpack.c.0.s8 %v4653
          %v4655 = vlaneseq
          %v4656 = vshrl.u32 %v4655, 7
          %v4657 = vsub.s32 %v4654, %v4656
          %v4658 = vrot.slane %v4644, %v4657
          %v4659 = vcombine.low %v4651, %v4658
          %v4660 = vcombine.low %v4596, %v4600
          %v4661 = vcombine.low %v4604, %v4608
          %v4663 = vunpack.c.l.s4 1983009808
          %v4664 = vunpack.c.0.s8 %v4663
          %v4665 = vlaneseq
          %v4666 = vshrl.u32 %v4665, 7
          %v4667 = vsub.s32 %v4664, %v4666
          %v4668 = vrot.slane %v4660, %v4667
          %v4670 = vunpack.c.l.s4 1983009808
          %v4671 = vunpack.c.0.s8 %v4670
          %v4672 = vlaneseq
          %v4673 = vshrl.u32 %v4672, 7
          %v4674 = vsub.s32 %v4671, %v4673
          %v4675 = vrot.slane %v4661, %v4674
          %v4676 = vcombine.low %v4668, %v4675
          %v4681 = vmul.f32 %v4535, %v4625
          %v4682 = vmul.f32 %v4536, %v4642
          %v4683 = vmul.f32 %v4537, %v4659
          %v4684 = vmul.f32 %v4538, %v4676
          %s4685 = scalar_lea.vmem [#allocation14], 225
          %v4686 = vld [vmem:[%s4685] ss:$2 sm:$0xff]
          %s4687 = scalar_lea.vmem [#allocation14], 241
          %v4688 = vld [vmem:[%s4687] ss:$2 sm:$0xff]
          %v4691 = vlaneseq
          %v4692 = vshrl.u32 %v4691, 7
          %v4693 = vsub.s32 0, %v4692
          %v4694 = vrot.slane %v4686, %v4693
          %v4695 = vlaneseq
          %v4696 = vshrl.u32 %v4695, 7
          %v4697 = vsub.s32 1, %v4696
          %v4698 = vrot.slane %v4686, %v4697
          %v4699 = vlaneseq
          %v4700 = vshrl.u32 %v4699, 7
          %v4701 = vsub.s32 2, %v4700
          %v4702 = vrot.slane %v4686, %v4701
          %v4703 = vlaneseq
          %v4704 = vshrl.u32 %v4703, 7
          %v4705 = vsub.s32 3, %v4704
          %v4706 = vrot.slane %v4686, %v4705
          %v4707 = vlaneseq
          %v4708 = vshrl.u32 %v4707, 7
          %v4709 = vsub.s32 4, %v4708
          %v4710 = vrot.slane %v4686, %v4709
          %v4711 = vlaneseq
          %v4712 = vshrl.u32 %v4711, 7
          %v4713 = vsub.s32 5, %v4712
          %v4714 = vrot.slane %v4686, %v4713
          %v4715 = vlaneseq
          %v4716 = vshrl.u32 %v4715, 7
          %v4717 = vsub.s32 6, %v4716
          %v4718 = vrot.slane %v4686, %v4717
          %v4719 = vlaneseq
          %v4720 = vshrl.u32 %v4719, 7
          %v4721 = vsub.s32 7, %v4720
          %v4722 = vrot.slane %v4686, %v4721
          %v4723 = vlaneseq
          %v4724 = vshrl.u32 %v4723, 7
          %v4725 = vsub.s32 0, %v4724
          %v4726 = vrot.slane %v4688, %v4725
          %v4727 = vlaneseq
          %v4728 = vshrl.u32 %v4727, 7
          %v4729 = vsub.s32 1, %v4728
          %v4730 = vrot.slane %v4688, %v4729
          %v4731 = vlaneseq
          %v4732 = vshrl.u32 %v4731, 7
          %v4733 = vsub.s32 2, %v4732
          %v4734 = vrot.slane %v4688, %v4733
          %v4735 = vlaneseq
          %v4736 = vshrl.u32 %v4735, 7
          %v4737 = vsub.s32 3, %v4736
          %v4738 = vrot.slane %v4688, %v4737
          %v4739 = vlaneseq
          %v4740 = vshrl.u32 %v4739, 7
          %v4741 = vsub.s32 4, %v4740
          %v4742 = vrot.slane %v4688, %v4741
          %v4743 = vlaneseq
          %v4744 = vshrl.u32 %v4743, 7
          %v4745 = vsub.s32 5, %v4744
          %v4746 = vrot.slane %v4688, %v4745
          %v4747 = vlaneseq
          %v4748 = vshrl.u32 %v4747, 7
          %v4749 = vsub.s32 6, %v4748
          %v4750 = vrot.slane %v4688, %v4749
          %v4751 = vlaneseq
          %v4752 = vshrl.u32 %v4751, 7
          %v4753 = vsub.s32 7, %v4752
          %v4754 = vrot.slane %v4688, %v4753
          %v4755 = vcombine.low %v4694, %v4698
          %v4756 = vcombine.low %v4702, %v4706
          %v4758 = vunpack.c.l.s4 1983009808
          %v4759 = vunpack.c.0.s8 %v4758
          %v4760 = vlaneseq
          %v4761 = vshrl.u32 %v4760, 7
          %v4762 = vsub.s32 %v4759, %v4761
          %v4763 = vrot.slane %v4755, %v4762
          %v4765 = vunpack.c.l.s4 1983009808
          %v4766 = vunpack.c.0.s8 %v4765
          %v4767 = vlaneseq
          %v4768 = vshrl.u32 %v4767, 7
          %v4769 = vsub.s32 %v4766, %v4768
          %v4770 = vrot.slane %v4756, %v4769
          %v4771 = vcombine.low %v4763, %v4770
          %v4772 = vcombine.low %v4710, %v4714
          %v4773 = vcombine.low %v4718, %v4722
          %v4775 = vunpack.c.l.s4 1983009808
          %v4776 = vunpack.c.0.s8 %v4775
          %v4777 = vlaneseq
          %v4778 = vshrl.u32 %v4777, 7
          %v4779 = vsub.s32 %v4776, %v4778
          %v4780 = vrot.slane %v4772, %v4779
          %v4782 = vunpack.c.l.s4 1983009808
          %v4783 = vunpack.c.0.s8 %v4782
          %v4784 = vlaneseq
          %v4785 = vshrl.u32 %v4784, 7
          %v4786 = vsub.s32 %v4783, %v4785
          %v4787 = vrot.slane %v4773, %v4786
          %v4788 = vcombine.low %v4780, %v4787
          %v4789 = vcombine.low %v4726, %v4730
          %v4790 = vcombine.low %v4734, %v4738
          %v4792 = vunpack.c.l.s4 1983009808
          %v4793 = vunpack.c.0.s8 %v4792
          %v4794 = vlaneseq
          %v4795 = vshrl.u32 %v4794, 7
          %v4796 = vsub.s32 %v4793, %v4795
          %v4797 = vrot.slane %v4789, %v4796
          %v4799 = vunpack.c.l.s4 1983009808
          %v4800 = vunpack.c.0.s8 %v4799
          %v4801 = vlaneseq
          %v4802 = vshrl.u32 %v4801, 7
          %v4803 = vsub.s32 %v4800, %v4802
          %v4804 = vrot.slane %v4790, %v4803
          %v4805 = vcombine.low %v4797, %v4804
          %v4806 = vcombine.low %v4742, %v4746
          %v4807 = vcombine.low %v4750, %v4754
          %v4809 = vunpack.c.l.s4 1983009808
          %v4810 = vunpack.c.0.s8 %v4809
          %v4811 = vlaneseq
          %v4812 = vshrl.u32 %v4811, 7
          %v4813 = vsub.s32 %v4810, %v4812
          %v4814 = vrot.slane %v4806, %v4813
          %v4816 = vunpack.c.l.s4 1983009808
          %v4817 = vunpack.c.0.s8 %v4816
          %v4818 = vlaneseq
          %v4819 = vshrl.u32 %v4818, 7
          %v4820 = vsub.s32 %v4817, %v4819
          %v4821 = vrot.slane %v4807, %v4820
          %v4822 = vcombine.low %v4814, %v4821
          %v4827 = vadd.f32 %v4681, %v4771
          %v4828 = vadd.f32 %v4682, %v4788
          %v4829 = vadd.f32 %v4683, %v4805
          %v4830 = vadd.f32 %v4684, %v4822
          %4831 = vst [vmem:[#allocation15 + $0xe0] sm:$0xff] %v4827
          %4832 = vst [vmem:[#allocation15 + $0xe8] sm:$0xff] %v4828
          %4833 = vst [vmem:[#allocation15 + $0xf0] sm:$0xff] %v4829
          %4834 = vst [vmem:[#allocation15 + $0xf8] sm:$0xff] %v4830
        $region76: #{tpu_custom_call.1} parent=43 // pred_fallthru
          _
        // Predicated region
        $region77: #{tpu_custom_call.1} parent=43 // pred_check
          %p4835 = pneg %p165
        $region78: #{tpu_custom_call.1} parent=43 // pred_check_branch
          %4837 = sbr.rel (%p4835) target = $region80
        $region79: #{tpu_custom_call.1} parent=43 // pred_region
          %s4839 = ssub.s32 4096, 4096
          %4840 = vsyncadd [#allocation7], %s4839
          %s4842 = sshll.u32 [#allocation15], 4
          %s4843 = int_to_ptr.vmem [resolvable:$true] %s4842
          %4845 = dma.vmem_to_hbm [thread:$0]  %s4843, 4096, %s6, [#allocation7]
        $region80: #{tpu_custom_call.1} parent=43 // pred_fallthru
          _
        // Predicated region
        $region81: #{tpu_custom_call.1} parent=43 // pred_check
          %p4846 = pneg %p165
        $region82: #{tpu_custom_call.1} parent=43 // pred_check_branch
          %4848 = sbr.rel (%p4846) target = $region84
        $region83: #{tpu_custom_call.1} parent=43 // pred_region
          %4849 = dma.done [#allocation7], 4096
        $region84: #{tpu_custom_call.1} parent=43 // pred_fallthru
          _
      $region44: #{tpu_custom_call.1} parent=5 // pred_fallthru
        _
      %p4850 = scmp.le.s32.totalorder 2, %s16
      // Predicated region
      $region85: #{tpu_custom_call.1} parent=5 // pred_check
        %p4851 = pneg %p4850
      $region86: #{tpu_custom_call.1} parent=5 // pred_check_branch
        %4853 = sbr.rel (%p4851) target = $region88
      $region87: #{tpu_custom_call.1} parent=5 // pred_region
        %s4854 = ssub.s32 %s16, 2
      $region88: #{tpu_custom_call.1} parent=5 // pred_fallthru
        _
    $region6: #{tpu_custom_call.1} parent=1 // loop_footer
      %s20 = sadd.s32 1, %s16
    $region7: #{tpu_custom_call.1} parent=1 // loop_footer_branch
      %15 = sbr.rel target = $region3
    $region8: #{tpu_custom_call.1} parent=1 // loop_exit
      _
    %4855 = vsyncpa [#allocation6], 1
    %s4856 = scalar_lea.sflag [#allocation6], 1
    %4857 = vsyncpa %s4856, 1
    %4858 = vsyncpa [#allocation9], 1
    %4859 = vsyncpa [#allocation12], 1
    %4860 = vsyncpa [#allocation7], 1
    %s4861 = scalar_lea.sflag [#allocation7], 1
    %4862 = vsyncpa %s4861, 1

</llo_original>
